<compile_context>
chip_gen: v7x
topology: tpu7x:2x2x1
jax: 0.10.0
libtpu: 0.0.40
codegen_flags: <defaults>
</compile_context>

<pallas_src>
import functools
import math

import jax
import jax.numpy as jnp
from jax import lax
from jax.experimental import pallas as pl
from jax.experimental.pallas import tpu as pltpu

EPS = 1e-5
LANE = 128


def _round_up(x, m):
    return ((x + m - 1) // m) * m


def _vmem_budget_bytes(default_phys=64 * 1024 * 1024):
    """Generation-aware VMEM budget: 75% of physical per-core VMEM.

    Defaults to the smallest generation (v7x, 64 MiB/TC) when the query is
    unavailable so the limit is always safe; v5e/v6e (128 MiB) automatically
    get a larger budget.
    """
    phys = default_phys
    try:
        phys = int(getattr(pltpu.get_tpu_info(), "vmem_capacity_bytes", phys))
    except Exception:
        pass
    return max(16 * 1024 * 1024, (phys * 3) // 4)


def _pick_row_tile(rows, widest_c, elem_bytes, vmem_budget):
    """Largest divisor of `rows` that is a multiple of 8 and fits the budget.

    The cap is derived from stream bytes: the widest row-tiled stage moves ~3
    operands x double buffering x widest_c channels per row; keep that under
    ~1/4 of the VMEM budget (rest: resident weights, scratch, stats).
    """
    per_row_bytes = 3 * 2 * widest_c * max(elem_bytes, 2)
    cap = int(max(8, min(1024, (vmem_budget // 4) // max(per_row_bytes, 1))))
    cap = min(cap, rows)
    for d in range(cap, 7, -1):
        if rows % d == 0 and d % 8 == 0:
            return d
    for d in range(rows, 7, -1):          # nothing under the cap; take what divides
        if rows % d == 0 and d % 8 == 0:
            return d
    raise ValueError(f"N*H*W={rows} has no row tile that is a multiple of 8")


# --------------------------------------------------------------------------
# In-kernel helpers
# --------------------------------------------------------------------------
def _bn_affine(s_ref, g_ref, b_ref, inv_rows):
    """Fold total (sum, sumsq) + gamma/beta into per-channel scale/shift."""
    mean = s_ref[0:1, :] * inv_rows                       # (1, C)
    var = s_ref[1:2, :] * inv_rows - mean * mean          # biased variance
    # TODO(synk): E[x^2]-E[x]^2 in f32 can lose precision for very large
    # N*H*W with large-mean post-ReLU activations; fine at these sizes.
    scale = lax.rsqrt(var + EPS) * g_ref[...]
    shift = b_ref[...] - mean * scale
    return scale, shift


def _store_partial_stats(s_ref, y_f32):
    """Per-grid-step partial (sum, sumsq); rows 2..7 of the block are unused."""
    s_ref[0:1, :] = jnp.sum(y_f32, axis=0, keepdims=True)
    s_ref[1:2, :] = jnp.sum(y_f32 * y_f32, axis=0, keepdims=True)


def _fold_stats(partial, c):
    """Wrapper-side fold of per-tile partial stats -> (8, c) totals array."""
    nblk = partial.shape[0] // 8
    tot = partial.reshape(nblk, 8, c)[:, :2, :].sum(axis=0)   # (2, c) f32
    return jnp.pad(tot, ((0, 6), (0, 0)))                     # (8, c)


# --------------------------------------------------------------------------
# Kernels
# --------------------------------------------------------------------------
def conv1_stats_kernel(x_ref, w_ref, y_ref, s_ref):
    """1x1 conv (matmul) + per-tile partial sum/sumsq."""
    y = jnp.dot(x_ref[...], w_ref[...], preferred_element_type=jnp.float32)
    y_ref[...] = y.astype(y_ref.dtype)
    _store_partial_stats(s_ref, y)


def _make_conv2_kernel(h, w, rows):
    """bn1-apply + ReLU + 3x3 conv as one fused K=9*C matmul + partial stats."""
    inv_rows = 1.0 / rows

    def kernel(y1_ref, s1_ref, g1_ref, b1_ref, w2_ref, y2_ref, s2_ref,
               pad_ref, stage_ref):
        c = y2_ref.shape[-1]
        # Re-zero the haloed scratch every step: the grid axis is parallel
        # (megacore), so zero-border persistence across steps is not assumed.
        pad_ref[...] = jnp.zeros_like(pad_ref)

        scale, shift = _bn_affine(s1_ref, g1_ref, b1_ref, inv_rows)
        act = jnp.maximum(y1_ref[0] * scale + shift, 0.0)        # (h, w, c) f32
        pad_ref[1:h + 1, 1:w + 1, :] = act.astype(pad_ref.dtype)

        # Assemble one (h*w, 9*c) staging tile so the 3x3 conv becomes a single
        # K=9*c matmul (fills the 256-wide MXU; accumulation stays inside the
        # MXU instead of 9 VPU accumulate passes over a spilled f32 value).
        for kh in range(3):
            for kw in range(3):
                t = kh * 3 + kw
                stage_ref[:, t * c:(t + 1) * c] = (
                    pad_ref[kh:kh + h, kw:kw + w, :]
                    .reshape(h * w, c).astype(stage_ref.dtype))

        y = jnp.dot(stage_ref[...], w2_ref[...],
                    preferred_element_type=jnp.float32)
        y2_ref[...] = y.astype(y2_ref.dtype)
        _store_partial_stats(s2_ref, y)

    return kernel


def _make_conv3_kernel(rows):
    """bn2-apply + ReLU + 1x1 conv (matmul) + partial stats."""
    inv_rows = 1.0 / rows

    def kernel(y2_ref, s2_ref, g2_ref, b2_ref, w3_ref, y3_ref, s3_ref):
        scale, shift = _bn_affine(s2_ref, g2_ref, b2_ref, inv_rows)
        hh = jnp.maximum(y2_ref[...] * scale + shift, 0.0).astype(w3_ref.dtype)
        y = jnp.dot(hh, w3_ref[...], preferred_element_type=jnp.float32)
        y3_ref[...] = y.astype(y3_ref.dtype)
        _store_partial_stats(s3_ref, y)

    return kernel


def _make_bn_residual_kernel(rows):
    """bn3-apply + residual add + ReLU (pure elementwise, parallel grid)."""
    inv_rows = 1.0 / rows

    def kernel(y3_ref, s3_ref, g3_ref, b3_ref, res_ref, o_ref):
        scale, shift = _bn_affine(s3_ref, g3_ref, b3_ref, inv_rows)
        o = y3_ref[...] * scale + shift + res_ref[...]
        o_ref[...] = jnp.maximum(o, 0.0).astype(o_ref.dtype)

    return kernel


# --------------------------------------------------------------------------
# Wrapper
# --------------------------------------------------------------------------
def bottleneck_forward(x_nchw, params, *, compute_dtype=jnp.bfloat16,
                       row_tile=None):
    N, Cin, H, W = x_nchw.shape
    P = params["w1"].shape[0]                 # planes
    Cout = 4 * P                              # planes * expansion
    assert Cin == Cout, "residual add requires inplanes == planes * 4"
    R = N * H * W

    Ci = _round_up(Cin, LANE)                 # padded channel dims (lane-dense)
    Pp = _round_up(P, LANE)
    Co = _round_up(Cout, LANE)                # == Ci
    cdt = compute_dtype
    ebytes = jnp.dtype(cdt).itemsize

    vmem_budget = _vmem_budget_bytes()
    TR = row_tile if row_tile is not None else _pick_row_tile(
        R, Co, ebytes, vmem_budget)
    assert R % TR == 0 and TR % 8 == 0, (R, TR)
    n_rt = R // TR

    # ---- layout glue: NCHW -> NHWC -> (R, C), pad channels (single copy) ----
    # Only ONE padded copy of x is kept (compute dtype); it is both the stage-1
    # input and the stage-4 residual stream (no separate f32 duplicate in HBM).
    x = jnp.transpose(x_nchw, (0, 2, 3, 1)).reshape(R, Cin)
    x_cd = jnp.pad(x, ((0, 0), (0, Ci - Cin))).astype(cdt)

    def padw(w2d, r, c):
        return jnp.pad(w2d, ((0, r - w2d.shape[0]),
                             (0, c - w2d.shape[1]))).astype(cdt)

    def padv(v, c):
        return jnp.pad(v.reshape(1, -1),
                       ((0, 0), (0, c - v.shape[0]))).astype(jnp.float32)

    w1m = padw(params["w1"].reshape(P, Cin).T, Ci, Pp)                 # (Ci, Pp)
    # 3x3 taps stacked along the contraction dim: (9*Pp, Pp), tap t = kh*3+kw.
    w2r = jnp.transpose(params["w2"], (2, 3, 1, 0)).reshape(9, P, P)   # (t,Ci,Co)
    w2r = jnp.pad(w2r, ((0, 0), (0, Pp - P), (0, Pp - P)))
    w2f = w2r.reshape(9 * Pp, Pp).astype(cdt)
    w3m = padw(params["w3"].reshape(Cout, P).T, Pp, Co)                # (Pp, Co)

    g1, b1 = padv(params["g1"], Pp), padv(params["b1"], Pp)
    g2, b2 = padv(params["g2"], Pp), padv(params["b2"], Pp)
    g3, b3 = padv(params["g3"], Co), padv(params["b3"], Co)

    # All grids are parallel now (stats are per-tile partials, not a serial
    # resident accumulator) -> v7x megacore can split every stage.
    cp = pltpu.CompilerParams(dimension_semantics=("parallel",),
                              vmem_limit_bytes=vmem_budget)

    # ---- stage 1: conv1 (1x1) + partial stats -------------------------------
    y1, s1p = pl.pallas_call(
        conv1_stats_kernel,
        grid=(n_rt,),
        in_specs=[pl.BlockSpec((TR, Ci), lambda i: (i, 0)),
                  pl.BlockSpec((Ci, Pp), lambda i: (0, 0))],
        out_specs=[pl.BlockSpec((TR, Pp), lambda i: (i, 0)),
                   pl.BlockSpec((8, Pp), lambda i: (i, 0))],
        out_shape=(jax.ShapeDtypeStruct((R, Pp), cdt),
                   jax.ShapeDtypeStruct((n_rt * 8, Pp), jnp.float32)),
        compiler_params=cp,
    )(x_cd, w1m)
    s1 = _fold_stats(s1p, Pp)

    # ---- stage 2: bn1+relu + 3x3 conv (fused K=9*Pp) + partial stats --------
    # TODO(synk): for large H*W (e.g. 56x56 at Pp=512) tile H in strips with a
    # 1-row halo instead of one whole image per grid step.
    y1_img = y1.reshape(N, H, W, Pp)
    y2, s2p = pl.pallas_call(
        _make_conv2_kernel(H, W, float(R)),
        grid=(N,),
        in_specs=[pl.BlockSpec((1, H, W, Pp), lambda n: (n, 0, 0, 0)),
                  pl.BlockSpec((8, Pp), lambda n: (0, 0)),
                  pl.BlockSpec((1, Pp), lambda n: (0, 0)),
                  pl.BlockSpec((1, Pp), lambda n: (0, 0)),
                  pl.BlockSpec((9 * Pp, Pp), lambda n: (0, 0))],
        out_specs=[pl.BlockSpec((H * W, Pp), lambda n: (n, 0)),
                   pl.BlockSpec((8, Pp), lambda n: (n, 0))],
        out_shape=(jax.ShapeDtypeStruct((R, Pp), cdt),
                   jax.ShapeDtypeStruct((N * 8, Pp), jnp.float32)),
        scratch_shapes=[pltpu.VMEM((H + 2, W + 2, Pp), jnp.float32),  # halo pad
                        pltpu.VMEM((H * W, 9 * Pp), cdt)],            # staging
        compiler_params=cp,
    )(y1_img, s1, g1, b1, w2f)
    s2 = _fold_stats(s2p, Pp)

    # ---- stage 3: bn2+relu + conv3 (1x1) + partial stats --------------------
    y3, s3p = pl.pallas_call(
        _make_conv3_kernel(float(R)),
        grid=(n_rt,),
        in_specs=[pl.BlockSpec((TR, Pp), lambda i: (i, 0)),
                  pl.BlockSpec((8, Pp), lambda i: (0, 0)),
                  pl.BlockSpec((1, Pp), lambda i: (0, 0)),
                  pl.BlockSpec((1, Pp), lambda i: (0, 0)),
                  pl.BlockSpec((Pp, Co), lambda i: (0, 0))],
        out_specs=[pl.BlockSpec((TR, Co), lambda i: (i, 0)),
                   pl.BlockSpec((8, Co), lambda i: (i, 0))],
        out_shape=(jax.ShapeDtypeStruct((R, Co), cdt),
                   jax.ShapeDtypeStruct((n_rt * 8, Co), jnp.float32)),
        compiler_params=cp,
    )(y2, s2, g2, b2, w3m)
    s3 = _fold_stats(s3p, Co)

    # ---- stage 4: bn3 + residual + relu (compute-dtype in and out) ----------
    out = pl.pallas_call(
        _make_bn_residual_kernel(float(R)),
        grid=(n_rt,),
        in_specs=[pl.BlockSpec((TR, Co), lambda i: (i, 0)),
                  pl.BlockSpec((8, Co), lambda i: (0, 0)),
                  pl.BlockSpec((1, Co), lambda i: (0, 0)),
                  pl.BlockSpec((1, Co), lambda i: (0, 0)),
                  pl.BlockSpec((TR, Co), lambda i: (i, 0))],
        out_specs=pl.BlockSpec((TR, Co), lambda i: (i, 0)),
        out_shape=jax.ShapeDtypeStruct((R, Co), cdt),
        compiler_params=cp,
    )(y3, s3, g3, b3, x_cd)

    # strip channel padding, (R, Cout) -> NHWC -> NCHW
    out = out[:, :Cout].reshape(N, H, W, Cout)
    return jnp.transpose(out, (0, 3, 1, 2))


# --------------------------------------------------------------------------
# Pure-JAX reference (for correctness check)
# --------------------------------------------------------------------------
def bottleneck_reference(x_nchw, params):
    x = jnp.transpose(x_nchw, (0, 2, 3, 1))  # NHWC

    def bn(y, g, b):
        m = jnp.mean(y, axis=(0, 1, 2), keepdims=True)
        v = jnp.mean((y - m) ** 2, axis=(0, 1, 2), keepdims=True)
        return (y - m) * lax.rsqrt(v + EPS) * g + b

    def conv(y, w_torch, pad):
        w_hwio = jnp.transpose(w_torch, (2, 3, 1, 0))
        return lax.conv_general_dilated(
            y, w_hwio, (1, 1), [(pad, pad), (pad, pad)],
            dimension_numbers=("NHWC", "HWIO", "NHWC"))

    h = jnp.maximum(bn(conv(x, params["w1"], 0), params["g1"], params["b1"]), 0.)
    h = jnp.maximum(bn(conv(h, params["w2"], 1), params["g2"], params["b2"]), 0.)
    h = bn(conv(h, params["w3"], 0), params["g3"], params["b3"])
    h = jnp.maximum(h + x, 0.0)
    return jnp.transpose(h, (0, 3, 1, 2))


if __name__ == "__main__":
    N, H, W = 2, 16, 16
    inplanes, planes = 16, 4          # out channels = planes * 4 == inplanes

    key = jax.random.PRNGKey(0)
    ks = jax.random.split(key, 10)
    params = {
        "w1": jax.random.normal(ks[0], (planes, inplanes, 1, 1), jnp.float32)
              * (1.0 / math.sqrt(inplanes)),
        "w2": jax.random.normal(ks[1], (planes, planes, 3, 3), jnp.float32)
              * (1.0 / math.sqrt(planes * 9)),
        "w3": jax.random.normal(ks[2], (planes * 4, planes, 1, 1), jnp.float32)
              * (1.0 / math.sqrt(planes)),
        "g1": 1.0 + 0.1 * jax.random.normal(ks[3], (planes,), jnp.float32),
        "b1": 0.1 * jax.random.normal(ks[4], (planes,), jnp.float32),
        "g2": 1.0 + 0.1 * jax.random.normal(ks[5], (planes,), jnp.float32),
        "b2": 0.1 * jax.random.normal(ks[6], (planes,), jnp.float32),
        "g3": 1.0 + 0.1 * jax.random.normal(ks[7], (planes * 4,), jnp.float32),
        "b3": 0.1 * jax.random.normal(ks[8], (planes * 4,), jnp.float32),
    }
    x = jax.random.normal(ks[9], (N, inplanes, H, W), jnp.float32)

    ref = jax.block_until_ready(bottleneck_reference(x, params))

    # f32 compute path: tight numerical check of the kernel structure
    # (row_tile=128 -> 4 grid steps, exercises the partial-stats fold).
    fwd_f32 = jax.jit(functools.partial(
        bottleneck_forward, compute_dtype=jnp.float32, row_tile=128))
    out32 = jax.block_until_ready(fwd_f32(x, params))
    assert out32.shape == (N, planes * 4, H, W), out32.shape
    err32 = float(jnp.max(jnp.abs(out32 - ref)))
    assert err32 < 2e-3, f"f32 max abs error vs reference too large: {err32}"

    # bf16 matmul path (f32 accumulation/epilogue, bf16 streams): loose check.
    # Exercises the byte-aware automatic row-tile pick.
    fwd_bf16 = jax.jit(functools.partial(
        bottleneck_forward, compute_dtype=jnp.bfloat16))
    out16 = jax.block_until_ready(fwd_bf16(x, params))
    err16 = float(jnp.max(jnp.abs(out16.astype(jnp.float32) - ref)))
    assert err16 < 3.5e-1, f"bf16 max abs error vs reference too large: {err16}"

    print("KERNEL_OK")
</pallas_src>

<mosaic_0001>
module attributes {stable_mosaic.version = 11 : i64} {
  func.func @conv1_stats_kernel(%arg0: i32, %arg1: memref<128x128xf32, #tpu.memory_space<vmem>>, %arg2: memref<128x128xf32, #tpu.memory_space<vmem>>, %arg3: memref<128x128xf32, #tpu.memory_space<vmem>>, %arg4: memref<8x128xf32, #tpu.memory_space<vmem>>) attributes {dimension_semantics = [#tpu.dimension_semantics<parallel>], iteration_bounds = array<i64: 4>, scalar_prefetch = 0 : i64, scratch_operands = 0 : i64, tpu.core_type = #tpu.core_type<tc>, window_params = [{transform_indices = @transform_0, window_bounds = array<i64: 128, 128>}, {pipeline_mode = #tpu.pipeline_mode<synchronous>, transform_indices = @transform_1, window_bounds = array<i64: 128, 128>}, {transform_indices = @transform_2, window_bounds = array<i64: 128, 128>}, {transform_indices = @transform_3, window_bounds = array<i64: 8, 128>}]} {
    %c0 = arith.constant 0 : index
    %c0_0 = arith.constant 0 : index
    %0 = vector.load %arg1[%c0, %c0_0] : memref<128x128xf32, #tpu.memory_space<vmem>>, vector<128x128xf32>
    %c0_1 = arith.constant 0 : index
    %c0_2 = arith.constant 0 : index
    %1 = vector.load %arg2[%c0_1, %c0_2] : memref<128x128xf32, #tpu.memory_space<vmem>>, vector<128x128xf32>
    %cst = arith.constant dense<0.000000e+00> : vector<128x128xf32>
    %2 = tpu.matmul %0, %1, %cst {dimension_numbers = #tpu.dot_dimension_numbers<[1], [0], [0], [1], [0, 0, 1, 1], [], []>} : vector<128x128xf32>, vector<128x128xf32>, vector<128x128xf32> -> vector<128x128xf32>
    %c0_3 = arith.constant 0 : index
    %c0_4 = arith.constant 0 : index
    %3 = vector.load %arg3[%c0_3, %c0_4] : memref<128x128xf32, #tpu.memory_space<vmem>>, vector<128x128xf32>
    tpu.vector_store %arg3[%c0_3, %c0_4], %2 {strides = array<i32>} : memref<128x128xf32, #tpu.memory_space<vmem>>, vector<128x128xf32>,
    %cst_5 = arith.constant dense<0.000000e+00> : vector<128xf32>
    %4 = vector.multi_reduction <add>, %2, %cst_5 [0] : vector<128x128xf32> to vector<128xf32>
    %5 = vector.shape_cast %4 : vector<128xf32> to vector<1x128xf32>
    %c0_6 = arith.constant 0 : index
    %c0_7 = arith.constant 0 : index
    %6 = vector.load %arg4[%c0_6, %c0_7] : memref<8x128xf32, #tpu.memory_space<vmem>>, vector<1x128xf32>
    tpu.vector_store %arg4[%c0_6, %c0_7], %5 {strides = array<i32>} : memref<8x128xf32, #tpu.memory_space<vmem>>, vector<1x128xf32>,
    %7 = arith.mulf %2, %2 : vector<128x128xf32>
    %cst_8 = arith.constant dense<0.000000e+00> : vector<128xf32>
    %8 = vector.multi_reduction <add>, %7, %cst_8 [0] : vector<128x128xf32> to vector<128xf32>
    %9 = vector.shape_cast %8 : vector<128xf32> to vector<1x128xf32>
    %c1 = arith.constant 1 : index
    %c0_9 = arith.constant 0 : index
    %10 = vector.load %arg4[%c1, %c0_9] : memref<8x128xf32, #tpu.memory_space<vmem>>, vector<1x128xf32>
    tpu.vector_store %arg4[%c1, %c0_9], %9 {strides = array<i32>} : memref<8x128xf32, #tpu.memory_space<vmem>>, vector<1x128xf32>,
    return
  }
  func.func @transform_0(%arg0: i32) -> (i32, i32) {
    %c0_i32 = arith.constant 0 : i32
    %c0_i32_0 = arith.constant 0 : i32
    return %arg0, %c0_i32 : i32, i32
  }
  func.func @transform_1(%arg0: i32) -> (i32, i32) {
    %c0_i32 = arith.constant 0 : i32
    %c0_i32_0 = arith.constant 0 : i32
    %c0_i32_1 = arith.constant 0 : i32
    return %c0_i32, %c0_i32_0 : i32, i32
  }
  func.func @transform_2(%arg0: i32) -> (i32, i32) {
    %c0_i32 = arith.constant 0 : i32
    %c0_i32_0 = arith.constant 0 : i32
    return %arg0, %c0_i32 : i32, i32
  }
  func.func @transform_3(%arg0: i32) -> (i32, i32) {
    %c0_i32 = arith.constant 0 : i32
    %c0_i32_0 = arith.constant 0 : i32
    return %arg0, %c0_i32 : i32, i32
  }
}

module attributes {stable_mosaic.version = 11 : i64} {
  func.func @kernel(%arg0: i32, %arg1: memref<128x128xf32, #tpu.memory_space<vmem>>, %arg2: memref<8x128xf32, #tpu.memory_space<vmem>>, %arg3: memref<1x128xf32, #tpu.memory_space<vmem>>, %arg4: memref<1x128xf32, #tpu.memory_space<vmem>>, %arg5: memref<128x128xf32, #tpu.memory_space<vmem>>, %arg6: memref<128x128xf32, #tpu.memory_space<vmem>>) attributes {dimension_semantics = [#tpu.dimension_semantics<parallel>], iteration_bounds = array<i64: 4>, scalar_prefetch = 0 : i64, scratch_operands = 0 : i64, tpu.core_type = #tpu.core_type<tc>, window_params = [{transform_indices = @transform_0, window_bounds = array<i64: 128, 128>}, {pipeline_mode = #tpu.pipeline_mode<synchronous>, transform_indices = @transform_1, window_bounds = array<i64: 8, 128>}, {pipeline_mode = #tpu.pipeline_mode<synchronous>, transform_indices = @transform_2, window_bounds = array<i64: 1, 128>}, {pipeline_mode = #tpu.pipeline_mode<synchronous>, transform_indices = @transform_3, window_bounds = array<i64: 1, 128>}, {transform_indices = @transform_4, window_bounds = array<i64: 128, 128>}, {transform_indices = @transform_5, window_bounds = array<i64: 128, 128>}]} {
    %c0 = arith.constant 0 : index
    %c0_0 = arith.constant 0 : index
    %0 = vector.load %arg2[%c0, %c0_0] : memref<8x128xf32, #tpu.memory_space<vmem>>, vector<1x128xf32>
    %cst = arith.constant 0.001953125 : f32
    %1 = vector.broadcast %cst : f32 to vector<1x128xf32>
    %2 = arith.mulf %0, %1 : vector<1x128xf32>
    %c1 = arith.constant 1 : index
    %c0_1 = arith.constant 0 : index
    %3 = vector.load %arg2[%c1, %c0_1] : memref<8x128xf32, #tpu.memory_space<vmem>>, vector<1x128xf32>
    %cst_2 = arith.constant 0.001953125 : f32
    %4 = vector.broadcast %cst_2 : f32 to vector<1x128xf32>
    %5 = arith.mulf %3, %4 : vector<1x128xf32>
    %6 = arith.mulf %2, %2 : vector<1x128xf32>
    %7 = arith.subf %5, %6 : vector<1x128xf32>
    %cst_3 = arith.constant 9.99999974E-6 : f32
    %8 = vector.broadcast %cst_3 : f32 to vector<1x128xf32>
    %9 = arith.addf %7, %8 : vector<1x128xf32>
    %10 = math.rsqrt %9 : vector<1x128xf32>
    %c0_4 = arith.constant 0 : index
    %c0_5 = arith.constant 0 : index
    %11 = vector.load %arg3[%c0_4, %c0_5] : memref<1x128xf32, #tpu.memory_space<vmem>>, vector<1x128xf32>
    %12 = arith.mulf %10, %11 : vector<1x128xf32>
    %c0_6 = arith.constant 0 : index
    %c0_7 = arith.constant 0 : index
    %13 = vector.load %arg4[%c0_6, %c0_7] : memref<1x128xf32, #tpu.memory_space<vmem>>, vector<1x128xf32>
    %14 = arith.mulf %2, %12 : vector<1x128xf32>
    %15 = arith.subf %13, %14 : vector<1x128xf32>
    %c0_8 = arith.constant 0 : index
    %c0_9 = arith.constant 0 : index
    %16 = vector.load %arg1[%c0_8, %c0_9] : memref<128x128xf32, #tpu.memory_space<vmem>>, vector<128x128xf32>
    %17 = vector.broadcast %12 : vector<1x128xf32> to vector<128x128xf32>
    %18 = arith.mulf %16, %17 : vector<128x128xf32>
    %19 = vector.broadcast %15 : vector<1x128xf32> to vector<128x128xf32>
    %20 = arith.addf %18, %19 : vector<128x128xf32>
    %c0_10 = arith.constant 0 : index
    %c0_11 = arith.constant 0 : index
    %21 = vector.load %arg5[%c0_10, %c0_11] : memref<128x128xf32, #tpu.memory_space<vmem>>, vector<128x128xf32>
    %22 = arith.addf %20, %21 : vector<128x128xf32>
    %cst_12 = arith.constant 0.000000e+00 : f32
    %23 = vector.broadcast %cst_12 : f32 to vector<128x128xf32>
    %24 = arith.maximumf %22, %23 : vector<128x128xf32>
    %c0_13 = arith.constant 0 : index
    %c0_14 = arith.constant 0 : index
    %25 = vector.load %arg6[%c0_13, %c0_14] : memref<128x128xf32, #tpu.memory_space<vmem>>, vector<128x128xf32>
    tpu.vector_store %arg6[%c0_13, %c0_14], %24 {strides = array<i32>} : memref<128x128xf32, #tpu.memory_space<vmem>>, vector<128x128xf32>,
    return
  }
  func.func @transform_0(%arg0: i32) -> (i32, i32) {
    %c0_i32 = arith.constant 0 : i32
    %c0_i32_0 = arith.constant 0 : i32
    return %arg0, %c0_i32 : i32, i32
  }
  func.func @transform_1(%arg0: i32) -> (i32, i32) {
    %c0_i32 = arith.constant 0 : i32
    %c0_i32_0 = arith.constant 0 : i32
    %c0_i32_1 = arith.constant 0 : i32
    return %c0_i32, %c0_i32_0 : i32, i32
  }
  func.func @transform_2(%arg0: i32) -> (i32, i32) {
    %c0_i32 = arith.constant 0 : i32
    %c0_i32_0 = arith.constant 0 : i32
    %c0_i32_1 = arith.constant 0 : i32
    return %c0_i32, %c0_i32_0 : i32, i32
  }
  func.func @transform_3(%arg0: i32) -> (i32, i32) {
    %c0_i32 = arith.constant 0 : i32
    %c0_i32_0 = arith.constant 0 : i32
    %c0_i32_1 = arith.constant 0 : i32
    return %c0_i32, %c0_i32_0 : i32, i32
  }
  func.func @transform_4(%arg0: i32) -> (i32, i32) {
    %c0_i32 = arith.constant 0 : i32
    %c0_i32_0 = arith.constant 0 : i32
    return %arg0, %c0_i32 : i32, i32
  }
  func.func @transform_5(%arg0: i32) -> (i32, i32) {
    %c0_i32 = arith.constant 0 : i32
    %c0_i32_0 = arith.constant 0 : i32
    return %arg0, %c0_i32 : i32, i32
  }
}

module attributes {stable_mosaic.version = 11 : i64} {
  func.func @kernel(%arg0: i32, %arg1: memref<1x16x16x128xf32, #tpu.memory_space<vmem>>, %arg2: memref<8x128xf32, #tpu.memory_space<vmem>>, %arg3: memref<1x128xf32, #tpu.memory_space<vmem>>, %arg4: memref<1x128xf32, #tpu.memory_space<vmem>>, %arg5: memref<1152x128xf32, #tpu.memory_space<vmem>>, %arg6: memref<256x128xf32, #tpu.memory_space<vmem>>, %arg7: memref<8x128xf32, #tpu.memory_space<vmem>>, %arg8: memref<18x18x128xf32, #tpu.memory_space<vmem>>, %arg9: memref<256x1152xf32, #tpu.memory_space<vmem>>) attributes {dimension_semantics = [#tpu.dimension_semantics<parallel>], iteration_bounds = array<i64: 2>, scalar_prefetch = 0 : i64, scratch_operands = 2 : i64, tpu.core_type = #tpu.core_type<tc>, window_params = [{transform_indices = @transform_0, window_bounds = array<i64: 1, 16, 16, 128>}, {pipeline_mode = #tpu.pipeline_mode<synchronous>, transform_indices = @transform_1, window_bounds = array<i64: 8, 128>}, {pipeline_mode = #tpu.pipeline_mode<synchronous>, transform_indices = @transform_2, window_bounds = array<i64: 1, 128>}, {pipeline_mode = #tpu.pipeline_mode<synchronous>, transform_indices = @transform_3, window_bounds = array<i64: 1, 128>}, {pipeline_mode = #tpu.pipeline_mode<synchronous>, transform_indices = @transform_4, window_bounds = array<i64: 1152, 128>}, {transform_indices = @transform_5, window_bounds = array<i64: 256, 128>}, {transform_indices = @transform_6, window_bounds = array<i64: 8, 128>}]} {
    %cst = arith.constant 0.000000e+00 : f32
    %0 = vector.broadcast %cst : f32 to vector<18x18x128xf32>
    %c0 = arith.constant 0 : index
    %c0_0 = arith.constant 0 : index
    %c0_1 = arith.constant 0 : index
    %1 = vector.load %arg8[%c0, %c0_0, %c0_1] : memref<18x18x128xf32, #tpu.memory_space<vmem>>, vector<18x18x128xf32>
    tpu.vector_store %arg8[%c0, %c0_0, %c0_1], %0 {strides = array<i32>} : memref<18x18x128xf32, #tpu.memory_space<vmem>>, vector<18x18x128xf32>,
    %c0_2 = arith.constant 0 : index
    %c0_3 = arith.constant 0 : index
    %2 = vector.load %arg2[%c0_2, %c0_3] : memref<8x128xf32, #tpu.memory_space<vmem>>, vector<1x128xf32>
    %cst_4 = arith.constant 0.001953125 : f32
    %3 = vector.broadcast %cst_4 : f32 to vector<1x128xf32>
    %4 = arith.mulf %2, %3 : vector<1x128xf32>
    %c1 = arith.constant 1 : index
    %c0_5 = arith.constant 0 : index
    %5 = vector.load %arg2[%c1, %c0_5] : memref<8x128xf32, #tpu.memory_space<vmem>>, vector<1x128xf32>
    %cst_6 = arith.constant 0.001953125 : f32
    %6 = vector.broadcast %cst_6 : f32 to vector<1x128xf32>
    %7 = arith.mulf %5, %6 : vector<1x128xf32>
    %8 = arith.mulf %4, %4 : vector<1x128xf32>
    %9 = arith.subf %7, %8 : vector<1x128xf32>
    %cst_7 = arith.constant 9.99999974E-6 : f32
    %10 = vector.broadcast %cst_7 : f32 to vector<1x128xf32>
    %11 = arith.addf %9, %10 : vector<1x128xf32>
    %12 = math.rsqrt %11 : vector<1x128xf32>
    %c0_8 = arith.constant 0 : index
    %c0_9 = arith.constant 0 : index
    %13 = vector.load %arg3[%c0_8, %c0_9] : memref<1x128xf32, #tpu.memory_space<vmem>>, vector<1x128xf32>
    %14 = arith.mulf %12, %13 : vector<1x128xf32>
    %c0_10 = arith.constant 0 : index
    %c0_11 = arith.constant 0 : index
    %15 = vector.load %arg4[%c0_10, %c0_11] : memref<1x128xf32, #tpu.memory_space<vmem>>, vector<1x128xf32>
    %16 = arith.mulf %4, %14 : vector<1x128xf32>
    %17 = arith.subf %15, %16 : vector<1x128xf32>
    %c0_12 = arith.constant 0 : index
    %c0_13 = arith.constant 0 : index
    %c0_14 = arith.constant 0 : index
    %c0_15 = arith.constant 0 : index
    %18 = vector.load %arg1[%c0_12, %c0_13, %c0_14, %c0_15] : memref<1x16x16x128xf32, #tpu.memory_space<vmem>>, vector<1x16x16x128xf32>
    %19 = vector.shape_cast %18 : vector<1x16x16x128xf32> to vector<16x16x128xf32>
    %20 = vector.shape_cast %14 : vector<1x128xf32> to vector<1x1x128xf32>
    %21 = vector.broadcast %20 : vector<1x1x128xf32> to vector<16x16x128xf32>
    %22 = arith.mulf %19, %21 : vector<16x16x128xf32>
    %23 = vector.shape_cast %17 : vector<1x128xf32> to vector<1x1x128xf32>
    %24 = vector.broadcast %23 : vector<1x1x128xf32> to vector<16x16x128xf32>
    %25 = arith.addf %22, %24 : vector<16x16x128xf32>
    %cst_16 = arith.constant 0.000000e+00 : f32
    %26 = vector.broadcast %cst_16 : f32 to vector<16x16x128xf32>
    %27 = arith.maximumf %25, %26 : vector<16x16x128xf32>
    %c1_17 = arith.constant 1 : index
    %c1_18 = arith.constant 1 : index
    %c0_19 = arith.constant 0 : index
    %28 = vector.load %arg8[%c1_17, %c1_18, %c0_19] : memref<18x18x128xf32, #tpu.memory_space<vmem>>, vector<16x16x128xf32>
    tpu.vector_store %arg8[%c1_17, %c1_18, %c0_19], %27 {strides = array<i32>} : memref<18x18x128xf32, #tpu.memory_space<vmem>>, vector<16x16x128xf32>,
    %c0_20 = arith.constant 0 : index
    %c0_21 = arith.constant 0 : index
    %c0_22 = arith.constant 0 : index
    %29 = vector.load %arg8[%c0_20, %c0_21, %c0_22] : memref<18x18x128xf32, #tpu.memory_space<vmem>>, vector<16x16x128xf32>
    %30 = vector.shape_cast %29 : vector<16x16x128xf32> to vector<256x128xf32>
    %c0_23 = arith.constant 0 : index
    %c0_24 = arith.constant 0 : index
    %31 = vector.load %arg9[%c0_23, %c0_24] : memref<256x1152xf32, #tpu.memory_space<vmem>>, vector<256x128xf32>
    tpu.vector_store %arg9[%c0_23, %c0_24], %30 {strides = array<i32>} : memref<256x1152xf32, #tpu.memory_space<vmem>>, vector<256x128xf32>,
    %c0_25 = arith.constant 0 : index
    %c1_26 = arith.constant 1 : index
    %c0_27 = arith.constant 0 : index
    %32 = vector.load %arg8[%c0_25, %c1_26, %c0_27] : memref<18x18x128xf32, #tpu.memory_space<vmem>>, vector<16x16x128xf32>
    %33 = vector.shape_cast %32 : vector<16x16x128xf32> to vector<256x128xf32>
    %c0_28 = arith.constant 0 : index
    %c128 = arith.constant 128 : index
    %34 = vector.load %arg9[%c0_28, %c128] : memref<256x1152xf32, #tpu.memory_space<vmem>>, vector<256x128xf32>
    tpu.vector_store %arg9[%c0_28, %c128], %33 {strides = array<i32>} : memref<256x1152xf32, #tpu.memory_space<vmem>>, vector<256x128xf32>,
    %c0_29 = arith.constant 0 : index
    %c2 = arith.constant 2 : index
    %c0_30 = arith.constant 0 : index
    %35 = vector.load %arg8[%c0_29, %c2, %c0_30] : memref<18x18x128xf32, #tpu.memory_space<vmem>>, vector<16x16x128xf32>
    %36 = vector.shape_cast %35 : vector<16x16x128xf32> to vector<256x128xf32>
    %c0_31 = arith.constant 0 : index
    %c256 = arith.constant 256 : index
    %37 = vector.load %arg9[%c0_31, %c256] : memref<256x1152xf32, #tpu.memory_space<vmem>>, vector<256x128xf32>
    tpu.vector_store %arg9[%c0_31, %c256], %36 {strides = array<i32>} : memref<256x1152xf32, #tpu.memory_space<vmem>>, vector<256x128xf32>,
    %c1_32 = arith.constant 1 : index
    %c0_33 = arith.constant 0 : index
    %c0_34 = arith.constant 0 : index
    %38 = vector.load %arg8[%c1_32, %c0_33, %c0_34] : memref<18x18x128xf32, #tpu.memory_space<vmem>>, vector<16x16x128xf32>
    %39 = vector.shape_cast %38 : vector<16x16x128xf32> to vector<256x128xf32>
    %c0_35 = arith.constant 0 : index
    %c384 = arith.constant 384 : index
    %40 = vector.load %arg9[%c0_35, %c384] : memref<256x1152xf32, #tpu.memory_space<vmem>>, vector<256x128xf32>
    tpu.vector_store %arg9[%c0_35, %c384], %39 {strides = array<i32>} : memref<256x1152xf32, #tpu.memory_space<vmem>>, vector<256x128xf32>,
    %c1_36 = arith.constant 1 : index
    %c1_37 = arith.constant 1 : index
    %c0_38 = arith.constant 0 : index
    %41 = vector.load %arg8[%c1_36, %c1_37, %c0_38] : memref<18x18x128xf32, #tpu.memory_space<vmem>>, vector<16x16x128xf32>
    %42 = vector.shape_cast %41 : vector<16x16x128xf32> to vector<256x128xf32>
    %c0_39 = arith.constant 0 : index
    %c512 = arith.constant 512 : index
    %43 = vector.load %arg9[%c0_39, %c512] : memref<256x1152xf32, #tpu.memory_space<vmem>>, vector<256x128xf32>
    tpu.vector_store %arg9[%c0_39, %c512], %42 {strides = array<i32>} : memref<256x1152xf32, #tpu.memory_space<vmem>>, vector<256x128xf32>,
    %c1_40 = arith.constant 1 : index
    %c2_41 = arith.constant 2 : index
    %c0_42 = arith.constant 0 : index
    %44 = vector.load %arg8[%c1_40, %c2_41, %c0_42] : memref<18x18x128xf32, #tpu.memory_space<vmem>>, vector<16x16x128xf32>
    %45 = vector.shape_cast %44 : vector<16x16x128xf32> to vector<256x128xf32>
    %c0_43 = arith.constant 0 : index
    %c640 = arith.constant 640 : index
    %46 = vector.load %arg9[%c0_43, %c640] : memref<256x1152xf32, #tpu.memory_space<vmem>>, vector<256x128xf32>
    tpu.vector_store %arg9[%c0_43, %c640], %45 {strides = array<i32>} : memref<256x1152xf32, #tpu.memory_space<vmem>>, vector<256x128xf32>,
    %c2_44 = arith.constant 2 : index
    %c0_45 = arith.constant 0 : index
    %c0_46 = arith.constant 0 : index
    %47 = vector.load %arg8[%c2_44, %c0_45, %c0_46] : memref<18x18x128xf32, #tpu.memory_space<vmem>>, vector<16x16x128xf32>
    %48 = vector.shape_cast %47 : vector<16x16x128xf32> to vector<256x128xf32>
    %c0_47 = arith.constant 0 : index
    %c768 = arith.constant 768 : index
    %49 = vector.load %arg9[%c0_47, %c768] : memref<256x1152xf32, #tpu.memory_space<vmem>>, vector<256x128xf32>
    tpu.vector_store %arg9[%c0_47, %c768], %48 {strides = array<i32>} : memref<256x1152xf32, #tpu.memory_space<vmem>>, vector<256x128xf32>,
    %c2_48 = arith.constant 2 : index
    %c1_49 = arith.constant 1 : index
    %c0_50 = arith.constant 0 : index
    %50 = vector.load %arg8[%c2_48, %c1_49, %c0_50] : memref<18x18x128xf32, #tpu.memory_space<vmem>>, vector<16x16x128xf32>
    %51 = vector.shape_cast %50 : vector<16x16x128xf32> to vector<256x128xf32>
    %c0_51 = arith.constant 0 : index
    %c896 = arith.constant 896 : index
    %52 = vector.load %arg9[%c0_51, %c896] : memref<256x1152xf32, #tpu.memory_space<vmem>>, vector<256x128xf32>
    tpu.vector_store %arg9[%c0_51, %c896], %51 {strides = array<i32>} : memref<256x1152xf32, #tpu.memory_space<vmem>>, vector<256x128xf32>,
    %c2_52 = arith.constant 2 : index
    %c2_53 = arith.constant 2 : index
    %c0_54 = arith.constant 0 : index
    %53 = vector.load %arg8[%c2_52, %c2_53, %c0_54] : memref<18x18x128xf32, #tpu.memory_space<vmem>>, vector<16x16x128xf32>
    %54 = vector.shape_cast %53 : vector<16x16x128xf32> to vector<256x128xf32>
    %c0_55 = arith.constant 0 : index
    %c1024 = arith.constant 1024 : index
    %55 = vector.load %arg9[%c0_55, %c1024] : memref<256x1152xf32, #tpu.memory_space<vmem>>, vector<256x128xf32>
    tpu.vector_store %arg9[%c0_55, %c1024], %54 {strides = array<i32>} : memref<256x1152xf32, #tpu.memory_space<vmem>>, vector<256x128xf32>,
    %c0_56 = arith.constant 0 : index
    %c0_57 = arith.constant 0 : index
    %56 = vector.load %arg9[%c0_56, %c0_57] : memref<256x1152xf32, #tpu.memory_space<vmem>>, vector<256x1152xf32>
    %c0_58 = arith.constant 0 : index
    %c0_59 = arith.constant 0 : index
    %57 = vector.load %arg5[%c0_58, %c0_59] : memref<1152x128xf32, #tpu.memory_space<vmem>>, vector<1152x128xf32>
    %cst_60 = arith.constant dense<0.000000e+00> : vector<256x128xf32>
    %58 = tpu.matmul %56, %57, %cst_60 {dimension_numbers = #tpu.dot_dimension_numbers<[1], [0], [0], [1], [0, 0, 1, 1], [], []>} : vector<256x1152xf32>, vector<1152x128xf32>, vector<256x128xf32> -> vector<256x128xf32>
    %c0_61 = arith.constant 0 : index
    %c0_62 = arith.constant 0 : index
    %59 = vector.load %arg6[%c0_61, %c0_62] : memref<256x128xf32, #tpu.memory_space<vmem>>, vector<256x128xf32>
    tpu.vector_store %arg6[%c0_61, %c0_62], %58 {strides = array<i32>} : memref<256x128xf32, #tpu.memory_space<vmem>>, vector<256x128xf32>,
    %cst_63 = arith.constant dense<0.000000e+00> : vector<128xf32>
    %60 = vector.multi_reduction <add>, %58, %cst_63 [0] : vector<256x128xf32> to vector<128xf32>
    %61 = vector.shape_cast %60 : vector<128xf32> to vector<1x128xf32>
    %c0_64 = arith.constant 0 : index
    %c0_65 = arith.constant 0 : index
    %62 = vector.load %arg7[%c0_64, %c0_65] : memref<8x128xf32, #tpu.memory_space<vmem>>, vector<1x128xf32>
    tpu.vector_store %arg7[%c0_64, %c0_65], %61 {strides = array<i32>} : memref<8x128xf32, #tpu.memory_space<vmem>>, vector<1x128xf32>,
    %63 = arith.mulf %58, %58 : vector<256x128xf32>
    %cst_66 = arith.constant dense<0.000000e+00> : vector<128xf32>
    %64 = vector.multi_reduction <add>, %63, %cst_66 [0] : vector<256x128xf32> to vector<128xf32>
    %65 = vector.shape_cast %64 : vector<128xf32> to vector<1x128xf32>
    %c1_67 = arith.constant 1 : index
    %c0_68 = arith.constant 0 : index
    %66 = vector.load %arg7[%c1_67, %c0_68] : memref<8x128xf32, #tpu.memory_space<vmem>>, vector<1x128xf32>
    tpu.vector_store %arg7[%c1_67, %c0_68], %65 {strides = array<i32>} : memref<8x128xf32, #tpu.memory_space<vmem>>, vector<1x128xf32>,
    return
  }
  func.func @transform_0(%arg0: i32) -> (i32, i32, i32, i32) {
    %c0_i32 = arith.constant 0 : i32
    %c0_i32_0 = arith.constant 0 : i32
    %c0_i32_1 = arith.constant 0 : i32
    %c0_i32_2 = arith.constant 0 : i32
    return %arg0, %c0_i32, %c0_i32_0, %c0_i32_1 : i32, i32, i32, i32
  }
  func.func @transform_1(%arg0: i32) -> (i32, i32) {
    %c0_i32 = arith.constant 0 : i32
    %c0_i32_0 = arith.constant 0 : i32
    %c0_i32_1 = arith.constant 0 : i32
    return %c0_i32, %c0_i32_0 : i32, i32
  }
  func.func @transform_2(%arg0: i32) -> (i32, i32) {
    %c0_i32 = arith.constant 0 : i32
    %c0_i32_0 = arith.constant 0 : i32
    %c0_i32_1 = arith.constant 0 : i32
    return %c0_i32, %c0_i32_0 : i32, i32
  }
  func.func @transform_3(%arg0: i32) -> (i32, i32) {
    %c0_i32 = arith.constant 0 : i32
    %c0_i32_0 = arith.constant 0 : i32
    %c0_i32_1 = arith.constant 0 : i32
    return %c0_i32, %c0_i32_0 : i32, i32
  }
  func.func @transform_4(%arg0: i32) -> (i32, i32) {
    %c0_i32 = arith.constant 0 : i32
    %c0_i32_0 = arith.constant 0 : i32
    %c0_i32_1 = arith.constant 0 : i32
    return %c0_i32, %c0_i32_0 : i32, i32
  }
  func.func @transform_5(%arg0: i32) -> (i32, i32) {
    %c0_i32 = arith.constant 0 : i32
    %c0_i32_0 = arith.constant 0 : i32
    return %arg0, %c0_i32 : i32, i32
  }
  func.func @transform_6(%arg0: i32) -> (i32, i32) {
    %c0_i32 = arith.constant 0 : i32
    %c0_i32_0 = arith.constant 0 : i32
    return %arg0, %c0_i32 : i32, i32
  }
}

module attributes {stable_mosaic.version = 11 : i64} {
  func.func @kernel(%arg0: i32, %arg1: memref<128x128xf32, #tpu.memory_space<vmem>>, %arg2: memref<8x128xf32, #tpu.memory_space<vmem>>, %arg3: memref<1x128xf32, #tpu.memory_space<vmem>>, %arg4: memref<1x128xf32, #tpu.memory_space<vmem>>, %arg5: memref<128x128xf32, #tpu.memory_space<vmem>>, %arg6: memref<128x128xf32, #tpu.memory_space<vmem>>, %arg7: memref<8x128xf32, #tpu.memory_space<vmem>>) attributes {dimension_semantics = [#tpu.dimension_semantics<parallel>], iteration_bounds = array<i64: 4>, scalar_prefetch = 0 : i64, scratch_operands = 0 : i64, tpu.core_type = #tpu.core_type<tc>, window_params = [{transform_indices = @transform_0, window_bounds = array<i64: 128, 128>}, {pipeline_mode = #tpu.pipeline_mode<synchronous>, transform_indices = @transform_1, window_bounds = array<i64: 8, 128>}, {pipeline_mode = #tpu.pipeline_mode<synchronous>, transform_indices = @transform_2, window_bounds = array<i64: 1, 128>}, {pipeline_mode = #tpu.pipeline_mode<synchronous>, transform_indices = @transform_3, window_bounds = array<i64: 1, 128>}, {pipeline_mode = #tpu.pipeline_mode<synchronous>, transform_indices = @transform_4, window_bounds = array<i64: 128, 128>}, {transform_indices = @transform_5, window_bounds = array<i64: 128, 128>}, {transform_indices = @transform_6, window_bounds = array<i64: 8, 128>}]} {
    %c0 = arith.constant 0 : index
    %c0_0 = arith.constant 0 : index
    %0 = vector.load %arg2[%c0, %c0_0] : memref<8x128xf32, #tpu.memory_space<vmem>>, vector<1x128xf32>
    %cst = arith.constant 0.001953125 : f32
    %1 = vector.broadcast %cst : f32 to vector<1x128xf32>
    %2 = arith.mulf %0, %1 : vector<1x128xf32>
    %c1 = arith.constant 1 : index
    %c0_1 = arith.constant 0 : index
    %3 = vector.load %arg2[%c1, %c0_1] : memref<8x128xf32, #tpu.memory_space<vmem>>, vector<1x128xf32>
    %cst_2 = arith.constant 0.001953125 : f32
    %4 = vector.broadcast %cst_2 : f32 to vector<1x128xf32>
    %5 = arith.mulf %3, %4 : vector<1x128xf32>
    %6 = arith.mulf %2, %2 : vector<1x128xf32>
    %7 = arith.subf %5, %6 : vector<1x128xf32>
    %cst_3 = arith.constant 9.99999974E-6 : f32
    %8 = vector.broadcast %cst_3 : f32 to vector<1x128xf32>
    %9 = arith.addf %7, %8 : vector<1x128xf32>
    %10 = math.rsqrt %9 : vector<1x128xf32>
    %c0_4 = arith.constant 0 : index
    %c0_5 = arith.constant 0 : index
    %11 = vector.load %arg3[%c0_4, %c0_5] : memref<1x128xf32, #tpu.memory_space<vmem>>, vector<1x128xf32>
    %12 = arith.mulf %10, %11 : vector<1x128xf32>
    %c0_6 = arith.constant 0 : index
    %c0_7 = arith.constant 0 : index
    %13 = vector.load %arg4[%c0_6, %c0_7] : memref<1x128xf32, #tpu.memory_space<vmem>>, vector<1x128xf32>
    %14 = arith.mulf %2, %12 : vector<1x128xf32>
    %15 = arith.subf %13, %14 : vector<1x128xf32>
    %c0_8 = arith.constant 0 : index
    %c0_9 = arith.constant 0 : index
    %16 = vector.load %arg1[%c0_8, %c0_9] : memref<128x128xf32, #tpu.memory_space<vmem>>, vector<128x128xf32>
    %17 = vector.broadcast %12 : vector<1x128xf32> to vector<128x128xf32>
    %18 = arith.mulf %16, %17 : vector<128x128xf32>
    %19 = vector.broadcast %15 : vector<1x128xf32> to vector<128x128xf32>
    %20 = arith.addf %18, %19 : vector<128x128xf32>
    %cst_10 = arith.constant 0.000000e+00 : f32
    %21 = vector.broadcast %cst_10 : f32 to vector<128x128xf32>
    %22 = arith.maximumf %20, %21 : vector<128x128xf32>
    %c0_11 = arith.constant 0 : index
    %c0_12 = arith.constant 0 : index
    %23 = vector.load %arg5[%c0_11, %c0_12] : memref<128x128xf32, #tpu.memory_space<vmem>>, vector<128x128xf32>
    %cst_13 = arith.constant dense<0.000000e+00> : vector<128x128xf32>
    %24 = tpu.matmul %22, %23, %cst_13 {dimension_numbers = #tpu.dot_dimension_numbers<[1], [0], [0], [1], [0, 0, 1, 1], [], []>} : vector<128x128xf32>, vector<128x128xf32>, vector<128x128xf32> -> vector<128x128xf32>
    %c0_14 = arith.constant 0 : index
    %c0_15 = arith.constant 0 : index
    %25 = vector.load %arg6[%c0_14, %c0_15] : memref<128x128xf32, #tpu.memory_space<vmem>>, vector<128x128xf32>
    tpu.vector_store %arg6[%c0_14, %c0_15], %24 {strides = array<i32>} : memref<128x128xf32, #tpu.memory_space<vmem>>, vector<128x128xf32>,
    %cst_16 = arith.constant dense<0.000000e+00> : vector<128xf32>
    %26 = vector.multi_reduction <add>, %24, %cst_16 [0] : vector<128x128xf32> to vector<128xf32>
    %27 = vector.shape_cast %26 : vector<128xf32> to vector<1x128xf32>
    %c0_17 = arith.constant 0 : index
    %c0_18 = arith.constant 0 : index
    %28 = vector.load %arg7[%c0_17, %c0_18] : memref<8x128xf32, #tpu.memory_space<vmem>>, vector<1x128xf32>
    tpu.vector_store %arg7[%c0_17, %c0_18], %27 {strides = array<i32>} : memref<8x128xf32, #tpu.memory_space<vmem>>, vector<1x128xf32>,
    %29 = arith.mulf %24, %24 : vector<128x128xf32>
    %cst_19 = arith.constant dense<0.000000e+00> : vector<128xf32>
    %30 = vector.multi_reduction <add>, %29, %cst_19 [0] : vector<128x128xf32> to vector<128xf32>
    %31 = vector.shape_cast %30 : vector<128xf32> to vector<1x128xf32>
    %c1_20 = arith.constant 1 : index
    %c0_21 = arith.constant 0 : index
    %32 = vector.load %arg7[%c1_20, %c0_21] : memref<8x128xf32, #tpu.memory_space<vmem>>, vector<1x128xf32>
    tpu.vector_store %arg7[%c1_20, %c0_21], %31 {strides = array<i32>} : memref<8x128xf32, #tpu.memory_space<vmem>>, vector<1x128xf32>,
    return
  }
  func.func @transform_0(%arg0: i32) -> (i32, i32) {
    %c0_i32 = arith.constant 0 : i32
    %c0_i32_0 = arith.constant 0 : i32
    return %arg0, %c0_i32 : i32, i32
  }
  func.func @transform_1(%arg0: i32) -> (i32, i32) {
    %c0_i32 = arith.constant 0 : i32
    %c0_i32_0 = arith.constant 0 : i32
    %c0_i32_1 = arith.constant 0 : i32
    return %c0_i32, %c0_i32_0 : i32, i32
  }
  func.func @transform_2(%arg0: i32) -> (i32, i32) {
    %c0_i32 = arith.constant 0 : i32
    %c0_i32_0 = arith.constant 0 : i32
    %c0_i32_1 = arith.constant 0 : i32
    return %c0_i32, %c0_i32_0 : i32, i32
  }
  func.func @transform_3(%arg0: i32) -> (i32, i32) {
    %c0_i32 = arith.constant 0 : i32
    %c0_i32_0 = arith.constant 0 : i32
    %c0_i32_1 = arith.constant 0 : i32
    return %c0_i32, %c0_i32_0 : i32, i32
  }
  func.func @transform_4(%arg0: i32) -> (i32, i32) {
    %c0_i32 = arith.constant 0 : i32
    %c0_i32_0 = arith.constant 0 : i32
    %c0_i32_1 = arith.constant 0 : i32
    return %c0_i32, %c0_i32_0 : i32, i32
  }
  func.func @transform_5(%arg0: i32) -> (i32, i32) {
    %c0_i32 = arith.constant 0 : i32
    %c0_i32_0 = arith.constant 0 : i32
    return %arg0, %c0_i32 : i32, i32
  }
  func.func @transform_6(%arg0: i32) -> (i32, i32) {
    %c0_i32 = arith.constant 0 : i32
    %c0_i32_0 = arith.constant 0 : i32
    return %arg0, %c0_i32 : i32, i32
  }
}

</mosaic_0001>

<llo_original>
// kernel: bottleneck_forward.4
$region0: #{bottleneck_forward.4}
  #allocation0 [shape = 'u32[]', space=smem, size = 0x4, offset = 0x4, fixed_abs, tag = 'smem constant byte address 0x4 - core index']
  #allocation1 [shape = 'u32[144,128]{1,0:T(1,128)}', space=vmem, size = 0x12000, scoped, tag = 'internal scratch']
  %s0 = inlined_call_operand.vmem [shape: f32[512,128], index: 0, kind: input, shape index: {}]
  %s1 = inlined_call_operand.vmem [shape: f32[128,128], index: 1, kind: input, shape index: {}]
  %s2 = inlined_call_operand.vmem [shape: f32[512,128], index: 2, kind: output, shape index: {0}]
  %s3 = inlined_call_operand.vmem [shape: f32[32,128], index: 3, kind: output, shape index: {1}]
  %4 = xla_tuple %s2, %s3
  %s5 = sld [smem:[#allocation0]]
  $region49: #{bottleneck_forward.4} parent=0
    _
  %s7 = ssub.s32 1, %s5
  %s8 = scalar_select 0, %s7, %s5
  loop: start=0, step=1, limit=6
  $region2: #{bottleneck_forward.4} parent=0 // loop_pre_header
    _
  $region3: #{bottleneck_forward.4} parent=0 // loop_header
    %s10 = sphi 0, %s14
    %p11 = scmp.ge.s32.totalorder %s10, 6
    %s20 = sphi 0, %s22
    %s23 = sphi 0, %s20
    %s24 = sphi 0, %s23
    %s40 = sphi 0, %s24
    %s44 = sphi 0, %s44
    %s46 = sphi 0, %s44
    %s47 = sphi 0, %s46
    %s61 = sphi 0, %s47
    %s67 = sphi 0, %s69
    %s70 = sphi 0, %s67
    %s71 = sphi 0, %s70
    %s87 = sphi 0, %s71
    %s93 = sphi 0, %s95
    %s96 = sphi 0, %s93
    %s97 = sphi 0, %s96
    %s113 = sphi 0, %s97
  $region4: #{bottleneck_forward.4} parent=0 // loop_header_branch
    %13 = sbr.rel (%p11) target = $region8
  $region5: #{bottleneck_forward.4} parent=0 // loop_body
    %s15 = ssub.s32 %s10, 1
    %s16 = ssub.s32 %s10, 2
    %s17 = sadd.s32 %s10, 1
    %s18 = ssub.s32 %s10, %s17
    %p19 = scmp.eq.s32.totalorder %s18, 0
    %s21 = sadd.s32 %s20, 1
    %s22 = scalar_select %p19, %s20, %s21
    %p25 = pneg %p19
    %p26 = scmp.eq.s32.totalorder %s10, 3
    %p27 = por %p25, %p26
    %p28 = scmp.ne.s32.totalorder %s20, %s23
    %p29 = scmp.eq.s32.totalorder %s10, 0
    %p30 = por %p28, %p29
    %p31 = scmp.ne.s32.totalorder %s20, %s23
    %p32 = scmp.eq.s32.totalorder %s15, 3
    %p33 = por %p31, %p32
    %p34 = scmp.ne.s32.totalorder %s23, %s24
    %p35 = scmp.eq.s32.totalorder %s15, 0
    %p36 = por %p34, %p35
    %p37 = scmp.ne.s32.totalorder %s23, %s24
    %p38 = scmp.eq.s32.totalorder %s16, 3
    %p39 = por %p37, %p38
    %p41 = scmp.ne.s32.totalorder %s24, %s40
    %p42 = scmp.eq.s32.totalorder %s16, 0
    %p43 = por %p41, %p42
    %s45 = sadd.s32 %s44, 1
    %p48 = scmp.eq.s32.totalorder %s10, 3
    %p49 = scmp.ne.s32.totalorder %s44, %s46
    %p50 = scmp.eq.s32.totalorder %s10, 0
    %p51 = por %p49, %p50
    %p52 = scmp.ne.s32.totalorder %s44, %s46
    %p53 = scmp.eq.s32.totalorder %s15, 3
    %p54 = por %p52, %p53
    %p55 = scmp.ne.s32.totalorder %s46, %s47
    %p56 = scmp.eq.s32.totalorder %s15, 0
    %p57 = por %p55, %p56
    %p58 = scmp.ne.s32.totalorder %s46, %s47
    %p59 = scmp.eq.s32.totalorder %s16, 3
    %p60 = por %p58, %p59
    %p62 = scmp.ne.s32.totalorder %s47, %s61
    %p63 = scmp.eq.s32.totalorder %s16, 0
    %p64 = por %p62, %p63
    %s65 = ssub.s32 %s10, %s17
    %p66 = scmp.eq.s32.totalorder %s65, 0
    %s68 = sadd.s32 %s67, 1
    %s69 = scalar_select %p66, %s67, %s68
    %p72 = pneg %p66
    %p73 = scmp.eq.s32.totalorder %s10, 3
    %p74 = por %p72, %p73
    %p75 = scmp.ne.s32.totalorder %s67, %s70
    %p76 = scmp.eq.s32.totalorder %s10, 0
    %p77 = por %p75, %p76
    %p78 = scmp.ne.s32.totalorder %s67, %s70
    %p79 = scmp.eq.s32.totalorder %s15, 3
    %p80 = por %p78, %p79
    %p81 = scmp.ne.s32.totalorder %s70, %s71
    %p82 = scmp.eq.s32.totalorder %s15, 0
    %p83 = por %p81, %p82
    %p84 = scmp.ne.s32.totalorder %s70, %s71
    %p85 = scmp.eq.s32.totalorder %s16, 3
    %p86 = por %p84, %p85
    %p88 = scmp.ne.s32.totalorder %s71, %s87
    %p89 = scmp.eq.s32.totalorder %s16, 0
    %p90 = por %p88, %p89
    %s91 = ssub.s32 %s10, %s17
    %p92 = scmp.eq.s32.totalorder %s91, 0
    %s94 = sadd.s32 %s93, 1
    %s95 = scalar_select %p92, %s93, %s94
    %p98 = pneg %p92
    %p99 = scmp.eq.s32.totalorder %s10, 3
    %p100 = por %p98, %p99
    %p101 = scmp.ne.s32.totalorder %s93, %s96
    %p102 = scmp.eq.s32.totalorder %s10, 0
    %p103 = por %p101, %p102
    %p104 = scmp.ne.s32.totalorder %s93, %s96
    %p105 = scmp.eq.s32.totalorder %s15, 3
    %p106 = por %p104, %p105
    %p107 = scmp.ne.s32.totalorder %s96, %s97
    %p108 = scmp.eq.s32.totalorder %s15, 0
    %p109 = por %p107, %p108
    %p110 = scmp.ne.s32.totalorder %s96, %s97
    %p111 = scmp.eq.s32.totalorder %s16, 3
    %p112 = por %p110, %p111
    %p114 = scmp.ne.s32.totalorder %s97, %s113
    %p115 = scmp.eq.s32.totalorder %s16, 0
    %p116 = por %p114, %p115
    %p117 = scmp.le.s32.totalorder 1, %s10
    %p118 = scmp.lt.s32.totalorder %s10, 5
    %p119 = pnand %p117, %p118
    %p120 = pneg %p119
    // Predicated region
    $region9: #{bottleneck_forward.4} parent=5 // pred_check
      _
    $region10: #{bottleneck_forward.4} parent=5 // pred_check_branch
      %122 = sbr.rel (%p119) target = $region12
    $region11: #{bottleneck_forward.4} parent=5 // pred_region
      %s123 = ssub.s32 %s10, 1
      // Predicated region
      $region13: #{bottleneck_forward.4} parent=11 // pred_check
        %p124 = pneg %p57
      $region14: #{bottleneck_forward.4} parent=11 // pred_check_branch
        %126 = sbr.rel (%p124) target = $region16
      $region15: #{bottleneck_forward.4} parent=11 // pred_region
        _
      $region16: #{bottleneck_forward.4} parent=11 // pred_fallthru
        _
    $region12: #{bottleneck_forward.4} parent=5 // pred_fallthru
      _
    %p127 = scmp.lt.s32.totalorder %s10, 4
    // Predicated region
    $region17: #{bottleneck_forward.4} parent=5 // pred_check
      %p128 = pneg %p127
    $region18: #{bottleneck_forward.4} parent=5 // pred_check_branch
      %130 = sbr.rel (%p128) target = $region20
    $region19: #{bottleneck_forward.4} parent=5 // pred_region
      // Predicated region
      $region21: #{bottleneck_forward.4} parent=19 // pred_check
        %p131 = pneg %p30
      $region22: #{bottleneck_forward.4} parent=19 // pred_check_branch
        %133 = sbr.rel (%p131) target = $region24
      $region23: #{bottleneck_forward.4} parent=19 // pred_region
        %s134 = smul.u32 16, %s10
        %p135 = scmp.lt.s32.totalorder %s134, 63
        %s136 = scalar_select %p135, %s134, 63
        %s137 = smul.addr %s136, 8
        %s138 = scalar_lea.vmem %s0, %s137
        %s139 = smul.u32 16, %s10
      $region24: #{bottleneck_forward.4} parent=19 // pred_fallthru
        _
    $region20: #{bottleneck_forward.4} parent=5 // pred_fallthru
      _
    %p140 = scmp.le.s32.totalorder 1, %s10
    %p141 = scmp.lt.s32.totalorder %s10, 5
    %p142 = pnand %p140, %p141
    %p143 = pneg %p142
    // Predicated region
    $region25: #{bottleneck_forward.4} parent=5 // pred_check
      _
    $region26: #{bottleneck_forward.4} parent=5 // pred_check_branch
      %145 = sbr.rel (%p142) target = $region28
    $region27: #{bottleneck_forward.4} parent=5 // pred_region
      %s146 = ssub.s32 %s10, 1
      %s147 = smul.u32 16, %s15
      %p148 = scmp.lt.s32.totalorder %s147, 63
      %s149 = scalar_select %p148, %s147, 63
      %s150 = smul.addr %s149, 8
      %s151 = scalar_lea.vmem %s0, %s150
      %p152 = pneg %p36
      %p153 = pneg %p33
      %p154 = pneg %p57
      %p155 = pneg %p54
      %p156 = pneg %p83
      %p157 = pneg %p80
      %s158 = smul.u32 16, %s15
      %p159 = scmp.lt.s32.totalorder %s158, 63
      %s160 = scalar_select %p159, %s158, 63
      %s161 = smul.addr %s160, 8
      %s162 = scalar_lea.vmem %s2, %s161
      %p163 = pneg %p109
      %p164 = pneg %p106
      %p165 = scmp.lt.s32.totalorder %s15, 3
      %s166 = scalar_select %p165, %s15, 3
      %s167 = smul.addr %s166, 8
      %s168 = scalar_lea.vmem %s3, %s167
      %s169 = smul.u32 16, %s15
      %p170 = scmp.lt.s32.totalorder %s169, 63
      %s171 = scalar_select %p170, %s169, 63
      %s172 = smul.addr %s171, 8
      %s173 = scalar_lea.vmem %s0, %s172
      %s174 = smul.u32 16, %s15
      %s175 = smul.u32 16, %s15
      %p176 = scmp.lt.s32.totalorder %s175, 63
      %s177 = scalar_select %p176, %s175, 63
      %s178 = smul.addr %s177, 8
      %s179 = scalar_lea.vmem %s2, %s178
      %s180 = smul.u32 16, %s15
      %p181 = scmp.lt.s32.totalorder %s15, 3
      %s182 = scalar_select %p181, %s15, 3
      %s183 = smul.addr %s182, 8
      %s184 = scalar_lea.vmem %s3, %s183
      %v185 = vld [vmem:[%s173] sm:$0xff]
      %v186 = vld [vmem:[%s173 + $0x8] sm:$0xff]
      %v187 = vld [vmem:[%s173 + $0x10] sm:$0xff]
      %v188 = vld [vmem:[%s173 + $0x18] sm:$0xff]
      %v189 = vld [vmem:[%s173 + $0x20] sm:$0xff]
      %v190 = vld [vmem:[%s173 + $0x28] sm:$0xff]
      %v191 = vld [vmem:[%s173 + $0x30] sm:$0xff]
      %v192 = vld [vmem:[%s173 + $0x38] sm:$0xff]
      %v193 = vld [vmem:[%s173 + $0x40] sm:$0xff]
      %v194 = vld [vmem:[%s173 + $0x48] sm:$0xff]
      %v195 = vld [vmem:[%s173 + $0x50] sm:$0xff]
      %v196 = vld [vmem:[%s173 + $0x58] sm:$0xff]
      %v197 = vld [vmem:[%s173 + $0x60] sm:$0xff]
      %v198 = vld [vmem:[%s173 + $0x68] sm:$0xff]
      %v199 = vld [vmem:[%s173 + $0x70] sm:$0xff]
      %v200 = vld [vmem:[%s173 + $0x78] sm:$0xff]
      %v201 = vld [vmem:[%s1] sm:$0xff]
      %v202 = vld [vmem:[%s1 + $0x8] sm:$0xff]
      %v203 = vld [vmem:[%s1 + $0x10] sm:$0xff]
      %v204 = vld [vmem:[%s1 + $0x18] sm:$0xff]
      %v205 = vld [vmem:[%s1 + $0x20] sm:$0xff]
      %v206 = vld [vmem:[%s1 + $0x28] sm:$0xff]
      %v207 = vld [vmem:[%s1 + $0x30] sm:$0xff]
      %v208 = vld [vmem:[%s1 + $0x38] sm:$0xff]
      %v209 = vld [vmem:[%s1 + $0x40] sm:$0xff]
      %v210 = vld [vmem:[%s1 + $0x48] sm:$0xff]
      %v211 = vld [vmem:[%s1 + $0x50] sm:$0xff]
      %v212 = vld [vmem:[%s1 + $0x58] sm:$0xff]
      %v213 = vld [vmem:[%s1 + $0x60] sm:$0xff]
      %v214 = vld [vmem:[%s1 + $0x68] sm:$0xff]
      %v215 = vld [vmem:[%s1 + $0x70] sm:$0xff]
      %v216 = vld [vmem:[%s1 + $0x78] sm:$0xff]
      %217 = vmatprep.subr.mxu0 0.0
      %218 = vmatpush1.msra.mxu0 %v201
      %219 = vmatprep.subr.mxu0 0.0
      %220 = vmatpush1.msra.mxu0 %v202
      %221 = vmatprep.subr.mxu0 0.0
      %222 = vmatpush1.msra.mxu0 %v203
      %223 = vmatprep.subr.mxu0 0.0
      %224 = vmatpush1.msra.mxu0 %v204
      %225 = vmatprep.subr.mxu0 0.0
      %226 = vmatpush1.msra.mxu0 %v205
      %227 = vmatprep.subr.mxu0 0.0
      %228 = vmatpush1.msra.mxu0 %v206
      %229 = vmatprep.subr.mxu0 0.0
      %230 = vmatpush1.msra.mxu0 %v207
      %231 = vmatprep.subr.mxu0 0.0
      %232 = vmatpush1.msra.mxu0 %v208
      %233 = vmatprep.subr.mxu0 0.0
      %234 = vmatpush1.msra.mxu0 %v209
      %235 = vmatprep.subr.mxu0 0.0
      %236 = vmatpush1.msra.mxu0 %v210
      %237 = vmatprep.subr.mxu0 0.0
      %238 = vmatpush1.msra.mxu0 %v211
      %239 = vmatprep.subr.mxu0 0.0
      %240 = vmatpush1.msra.mxu0 %v212
      %241 = vmatprep.subr.mxu0 0.0
      %242 = vmatpush1.msra.mxu0 %v213
      %243 = vmatprep.subr.mxu0 0.0
      %244 = vmatpush1.msra.mxu0 %v214
      %245 = vmatprep.subr.mxu0 0.0
      %246 = vmatpush1.msra.mxu0 %v215
      %247 = vmatprep.subr.mxu0 0.0
      %248 = vmatpush1.msra.mxu0 %v216
      %249 = vmatprep.subr.mxu0 0.0
      %250 = vmatpush1.msra.mxu0 0.0
      %251 = vmatprep.subr.mxu0 0.0
      %252 = vmatpush1.msra.mxu0 0.0
      %253 = vmatprep.subr.mxu0 0.0
      %254 = vmatpush1.msra.mxu0 0.0
      %255 = vmatprep.subr.mxu0 0.0
      %256 = vmatpush1.msra.mxu0 0.0
      %257 = vmatprep.subr.mxu0 0.0
      %258 = vmatpush1.msra.mxu0 0.0
      %259 = vmatprep.subr.mxu0 0.0
      %260 = vmatpush1.msra.mxu0 0.0
      %261 = vmatprep.subr.mxu0 0.0
      %262 = vmatpush1.msra.mxu0 0.0
      %263 = vmatprep.subr.mxu0 0.0
      %264 = vmatpush1.msra.mxu0 0.0
      %265 = vmatprep.subr.mxu0 0.0
      %266 = vmatpush1.msra.mxu0 0.0
      %267 = vmatprep.subr.mxu0 0.0
      %268 = vmatpush1.msra.mxu0 0.0
      %269 = vmatprep.subr.mxu0 0.0
      %270 = vmatpush1.msra.mxu0 0.0
      %271 = vmatprep.subr.mxu0 0.0
      %272 = vmatpush1.msra.mxu0 0.0
      %273 = vmatprep.subr.mxu0 0.0
      %274 = vmatpush1.msra.mxu0 0.0
      %275 = vmatprep.subr.mxu0 0.0
      %276 = vmatpush1.msra.mxu0 0.0
      %277 = vmatprep.subr.mxu0 0.0
      %278 = vmatpush1.msra.mxu0 0.0
      %279 = vmatprep.subr.mxu0 0.0
      %280 = vmatpush1.msra.mxu0 0.0
      %281 = vmatprep.mubr.f32.mxu0 0.0
      %282 = vmatmul.mubr.f32.gmra.mrb[0].mxu0 %v185
      %v283 = vpop.f32.mrb[0].mxu0
      %v284 = vadd.f32 0.0, %v283
      %v285 = vpop.f32.mrb[0].mxu0
      %286 = vmatprep.mubr.f32.mxu0 0.0
      %287 = vmatmul.mubr.f32.gmra.mrb[0].mxu0 %v186
      %v288 = vpop.f32.mrb[0].mxu0
      %v289 = vadd.f32 0.0, %v288
      %v290 = vpop.f32.mrb[0].mxu0
      %291 = vmatprep.mubr.f32.mxu0 0.0
      %292 = vmatmul.mubr.f32.gmra.mrb[0].mxu0 %v187
      %v293 = vpop.f32.mrb[0].mxu0
      %v294 = vadd.f32 0.0, %v293
      %v295 = vpop.f32.mrb[0].mxu0
      %296 = vmatprep.mubr.f32.mxu0 0.0
      %297 = vmatmul.mubr.f32.gmra.mrb[0].mxu0 %v188
      %v298 = vpop.f32.mrb[0].mxu0
      %v299 = vadd.f32 0.0, %v298
      %v300 = vpop.f32.mrb[0].mxu0
      %301 = vmatprep.mubr.f32.mxu0 0.0
      %302 = vmatmul.mubr.f32.gmra.mrb[0].mxu0 %v189
      %v303 = vpop.f32.mrb[0].mxu0
      %v304 = vadd.f32 0.0, %v303
      %v305 = vpop.f32.mrb[0].mxu0
      %306 = vmatprep.mubr.f32.mxu0 0.0
      %307 = vmatmul.mubr.f32.gmra.mrb[0].mxu0 %v190
      %v308 = vpop.f32.mrb[0].mxu0
      %v309 = vadd.f32 0.0, %v308
      %v310 = vpop.f32.mrb[0].mxu0
      %311 = vmatprep.mubr.f32.mxu0 0.0
      %312 = vmatmul.mubr.f32.gmra.mrb[0].mxu0 %v191
      %v313 = vpop.f32.mrb[0].mxu0
      %v314 = vadd.f32 0.0, %v313
      %v315 = vpop.f32.mrb[0].mxu0
      %316 = vmatprep.mubr.f32.mxu0 0.0
      %317 = vmatmul.mubr.f32.gmra.mrb[0].mxu0 %v192
      %v318 = vpop.f32.mrb[0].mxu0
      %v319 = vadd.f32 0.0, %v318
      %v320 = vpop.f32.mrb[0].mxu0
      %321 = vmatprep.mubr.f32.mxu0 0.0
      %322 = vmatmul.mubr.f32.gmra.mrb[0].mxu0 %v193
      %v323 = vpop.f32.mrb[0].mxu0
      %v324 = vadd.f32 0.0, %v323
      %v325 = vpop.f32.mrb[0].mxu0
      %326 = vmatprep.mubr.f32.mxu0 0.0
      %327 = vmatmul.mubr.f32.gmra.mrb[0].mxu0 %v194
      %v328 = vpop.f32.mrb[0].mxu0
      %v329 = vadd.f32 0.0, %v328
      %v330 = vpop.f32.mrb[0].mxu0
      %331 = vmatprep.mubr.f32.mxu0 0.0
      %332 = vmatmul.mubr.f32.gmra.mrb[0].mxu0 %v195
      %v333 = vpop.f32.mrb[0].mxu0
      %v334 = vadd.f32 0.0, %v333
      %v335 = vpop.f32.mrb[0].mxu0
      %336 = vmatprep.mubr.f32.mxu0 0.0
      %337 = vmatmul.mubr.f32.gmra.mrb[0].mxu0 %v196
      %v338 = vpop.f32.mrb[0].mxu0
      %v339 = vadd.f32 0.0, %v338
      %v340 = vpop.f32.mrb[0].mxu0
      %341 = vmatprep.mubr.f32.mxu0 0.0
      %342 = vmatmul.mubr.f32.gmra.mrb[0].mxu0 %v197
      %v343 = vpop.f32.mrb[0].mxu0
      %v344 = vadd.f32 0.0, %v343
      %v345 = vpop.f32.mrb[0].mxu0
      %346 = vmatprep.mubr.f32.mxu0 0.0
      %347 = vmatmul.mubr.f32.gmra.mrb[0].mxu0 %v198
      %v348 = vpop.f32.mrb[0].mxu0
      %v349 = vadd.f32 0.0, %v348
      %v350 = vpop.f32.mrb[0].mxu0
      %351 = vmatprep.mubr.f32.mxu0 0.0
      %352 = vmatmul.mubr.f32.gmra.mrb[0].mxu0 %v199
      %v353 = vpop.f32.mrb[0].mxu0
      %v354 = vadd.f32 0.0, %v353
      %v355 = vpop.f32.mrb[0].mxu0
      %356 = vmatprep.mubr.f32.mxu0 0.0
      %357 = vmatmul.mubr.f32.gmra.mrb[0].mxu0 %v200
      %v358 = vpop.f32.mrb[0].mxu0
      %v359 = vadd.f32 0.0, %v358
      %v360 = vpop.f32.mrb[0].mxu0
      %361 = vdwg.mxu0
      %362 = vst [vmem:[%s179] sm:$0xff] %v284
      %363 = vst [vmem:[%s179 + $0x8] sm:$0xff] %v289
      %364 = vst [vmem:[%s179 + $0x10] sm:$0xff] %v294
      %365 = vst [vmem:[%s179 + $0x18] sm:$0xff] %v299
      %366 = vst [vmem:[%s179 + $0x20] sm:$0xff] %v304
      %367 = vst [vmem:[%s179 + $0x28] sm:$0xff] %v309
      %368 = vst [vmem:[%s179 + $0x30] sm:$0xff] %v314
      %369 = vst [vmem:[%s179 + $0x38] sm:$0xff] %v319
      %370 = vst [vmem:[%s179 + $0x40] sm:$0xff] %v324
      %371 = vst [vmem:[%s179 + $0x48] sm:$0xff] %v329
      %372 = vst [vmem:[%s179 + $0x50] sm:$0xff] %v334
      %373 = vst [vmem:[%s179 + $0x58] sm:$0xff] %v339
      %374 = vst [vmem:[%s179 + $0x60] sm:$0xff] %v344
      %375 = vst [vmem:[%s179 + $0x68] sm:$0xff] %v349
      %376 = vst [vmem:[%s179 + $0x70] sm:$0xff] %v354
      %377 = vst [vmem:[%s179 + $0x78] sm:$0xff] %v359
      %v378 = vadd.f32 %v284, %v289
      %v379 = vadd.f32 %v378, %v294
      %v380 = vadd.f32 %v379, %v299
      %v381 = vadd.f32 %v380, %v304
      %v382 = vadd.f32 %v381, %v309
      %v383 = vadd.f32 %v382, %v314
      %v384 = vadd.f32 %v383, %v319
      %v385 = vadd.f32 %v384, %v324
      %v386 = vadd.f32 %v385, %v329
      %v387 = vadd.f32 %v386, %v334
      %v388 = vadd.f32 %v387, %v339
      %v389 = vadd.f32 %v388, %v344
      %v390 = vadd.f32 %v389, %v349
      %v391 = vadd.f32 %v390, %v354
      %v392 = vadd.f32 %v391, %v359
      %v393 = vrot.slane %v392, 4
      %v394 = vadd.f32 %v392, %v393
      %v395 = vrot.slane %v394, 2
      %v396 = vadd.f32 %v394, %v395
      %v397 = vrot.slane %v396, 1
      %v398 = vadd.f32 %v396, %v397
      %399 = vst [vmem:[%s184] sm:$0x1] %v398
      %v400 = vmul.f32 %v284, %v284
      %v401 = vmul.f32 %v289, %v289
      %v402 = vmul.f32 %v294, %v294
      %v403 = vmul.f32 %v299, %v299
      %v404 = vmul.f32 %v304, %v304
      %v405 = vmul.f32 %v309, %v309
      %v406 = vmul.f32 %v314, %v314
      %v407 = vmul.f32 %v319, %v319
      %v408 = vmul.f32 %v324, %v324
      %v409 = vmul.f32 %v329, %v329
      %v410 = vmul.f32 %v334, %v334
      %v411 = vmul.f32 %v339, %v339
      %v412 = vmul.f32 %v344, %v344
      %v413 = vmul.f32 %v349, %v349
      %v414 = vmul.f32 %v354, %v354
      %v415 = vmul.f32 %v359, %v359
      %v416 = vadd.f32 %v400, %v401
      %v417 = vadd.f32 %v416, %v402
      %v418 = vadd.f32 %v417, %v403
      %v419 = vadd.f32 %v418, %v404
      %v420 = vadd.f32 %v419, %v405
      %v421 = vadd.f32 %v420, %v406
      %v422 = vadd.f32 %v421, %v407
      %v423 = vadd.f32 %v422, %v408
      %v424 = vadd.f32 %v423, %v409
      %v425 = vadd.f32 %v424, %v410
      %v426 = vadd.f32 %v425, %v411
      %v427 = vadd.f32 %v426, %v412
      %v428 = vadd.f32 %v427, %v413
      %v429 = vadd.f32 %v428, %v414
      %v430 = vadd.f32 %v429, %v415
      %v431 = vrot.slane %v430, 4
      %v432 = vadd.f32 %v430, %v431
      %v433 = vrot.slane %v432, 2
      %v434 = vadd.f32 %v432, %v433
      %v435 = vrot.slane %v434, 1
      %v436 = vadd.f32 %v434, %v435
      %437 = vst [vmem:[%s184 + $0x1] sm:$0x1] %v436
      %s438 = smul.u32 16, %s15
      %p439 = scmp.lt.s32.totalorder %s438, 63
      %s440 = scalar_select %p439, %s438, 63
      %s441 = smul.addr %s440, 8
      %s442 = scalar_lea.vmem %s2, %s441
      %p443 = scmp.lt.s32.totalorder %s15, 3
      %s444 = scalar_select %p443, %s15, 3
      %s445 = smul.addr %s444, 8
      %s446 = scalar_lea.vmem %s3, %s445
      // Predicated region
      $region29: #{bottleneck_forward.4} parent=27 // pred_check
        %p447 = pneg %p80
      $region30: #{bottleneck_forward.4} parent=27 // pred_check_branch
        %449 = sbr.rel (%p447) target = $region32
      $region31: #{bottleneck_forward.4} parent=27 // pred_region
        %s450 = smul.u32 16, %s15
      $region32: #{bottleneck_forward.4} parent=27 // pred_fallthru
        _
      // Predicated region
      $region33: #{bottleneck_forward.4} parent=27 // pred_check
        %p451 = pneg %p106
      $region34: #{bottleneck_forward.4} parent=27 // pred_check_branch
        %453 = sbr.rel (%p451) target = $region36
      $region35: #{bottleneck_forward.4} parent=27 // pred_region
        _
      $region36: #{bottleneck_forward.4} parent=27 // pred_fallthru
        _
    $region28: #{bottleneck_forward.4} parent=5 // pred_fallthru
      _
    %p454 = scmp.le.s32.totalorder 2, %s10
    // Predicated region
    $region37: #{bottleneck_forward.4} parent=5 // pred_check
      %p455 = pneg %p454
    $region38: #{bottleneck_forward.4} parent=5 // pred_check_branch
      %457 = sbr.rel (%p455) target = $region40
    $region39: #{bottleneck_forward.4} parent=5 // pred_region
      %s458 = ssub.s32 %s10, 2
      // Predicated region
      $region41: #{bottleneck_forward.4} parent=39 // pred_check
        %p459 = pneg %p86
      $region42: #{bottleneck_forward.4} parent=39 // pred_check_branch
        %461 = sbr.rel (%p459) target = $region44
      $region43: #{bottleneck_forward.4} parent=39 // pred_region
        %s462 = smul.u32 16, %s16
        %p463 = scmp.lt.s32.totalorder %s462, 63
        %s464 = scalar_select %p463, %s462, 63
        %s465 = smul.addr %s464, 8
        %s466 = scalar_lea.vmem %s2, %s465
      $region44: #{bottleneck_forward.4} parent=39 // pred_fallthru
        _
      // Predicated region
      $region45: #{bottleneck_forward.4} parent=39 // pred_check
        %p467 = pneg %p112
      $region46: #{bottleneck_forward.4} parent=39 // pred_check_branch
        %469 = sbr.rel (%p467) target = $region48
      $region47: #{bottleneck_forward.4} parent=39 // pred_region
        %p470 = scmp.lt.s32.totalorder %s16, 3
        %s471 = scalar_select %p470, %s16, 3
        %s472 = smul.addr %s471, 8
        %s473 = scalar_lea.vmem %s3, %s472
      $region48: #{bottleneck_forward.4} parent=39 // pred_fallthru
        _
    $region40: #{bottleneck_forward.4} parent=5 // pred_fallthru
      _
  $region6: #{bottleneck_forward.4} parent=0 // loop_footer
    %s14 = sadd.s32 1, %s10
  $region7: #{bottleneck_forward.4} parent=0 // loop_footer_branch
    %9 = sbr.rel target = $region3
  $region8: #{bottleneck_forward.4} parent=0 // loop_exit
    _

// kernel: bottleneck_forward.7
$region0: #{bottleneck_forward.7}
  #allocation0 [shape = 'u32[]', space=smem, size = 0x4, offset = 0x4, fixed_abs, tag = 'smem constant byte address 0x4 - core index']
  #allocation1 [shape = 'u32[144,128]{1,0:T(1,128)}', space=vmem, size = 0x12000, scoped, tag = 'internal scratch']
  %s0 = inlined_call_operand.vmem [shape: f32[512,128], index: 0, kind: input, shape index: {}]
  %s1 = inlined_call_operand.vmem [shape: f32[8,128], index: 1, kind: input, shape index: {}]
  %s2 = inlined_call_operand.vmem [shape: f32[1,128], index: 2, kind: input, shape index: {}]
  %s3 = inlined_call_operand.vmem [shape: f32[1,128], index: 3, kind: input, shape index: {}]
  %s4 = inlined_call_operand.vmem [shape: f32[512,128], index: 4, kind: input, shape index: {}]
  %s5 = inlined_call_operand.vmem [shape: f32[512,128], index: 5, kind: output, shape index: {}]
  %s6 = sld [smem:[#allocation0]]
  $region53: #{bottleneck_forward.7} parent=0
    _
  %s8 = ssub.s32 1, %s6
  %s9 = scalar_select 0, %s8, %s6
  loop: start=0, step=1, limit=6
  $region2: #{bottleneck_forward.7} parent=0 // loop_pre_header
    _
  $region3: #{bottleneck_forward.7} parent=0 // loop_header
    %s11 = sphi 0, %s15
    %p12 = scmp.ge.s32.totalorder %s11, 6
    %s21 = sphi 0, %s23
    %s24 = sphi 0, %s21
    %s25 = sphi 0, %s24
    %s41 = sphi 0, %s25
    %s45 = sphi 0, %s45
    %s47 = sphi 0, %s45
    %s48 = sphi 0, %s47
    %s62 = sphi 0, %s48
    %s66 = sphi 0, %s66
    %s68 = sphi 0, %s66
    %s69 = sphi 0, %s68
    %s83 = sphi 0, %s69
    %s87 = sphi 0, %s87
    %s89 = sphi 0, %s87
    %s90 = sphi 0, %s89
    %s104 = sphi 0, %s90
    %s110 = sphi 0, %s112
    %s113 = sphi 0, %s110
    %s114 = sphi 0, %s113
    %s130 = sphi 0, %s114
    %s136 = sphi 0, %s138
    %s139 = sphi 0, %s136
    %s140 = sphi 0, %s139
    %s156 = sphi 0, %s140
  $region4: #{bottleneck_forward.7} parent=0 // loop_header_branch
    %14 = sbr.rel (%p12) target = $region8
  $region5: #{bottleneck_forward.7} parent=0 // loop_body
    %s16 = ssub.s32 %s11, 1
    %s17 = ssub.s32 %s11, 2
    %s18 = sadd.s32 %s11, 1
    %s19 = ssub.s32 %s11, %s18
    %p20 = scmp.eq.s32.totalorder %s19, 0
    %s22 = sadd.s32 %s21, 1
    %s23 = scalar_select %p20, %s21, %s22
    %p26 = pneg %p20
    %p27 = scmp.eq.s32.totalorder %s11, 3
    %p28 = por %p26, %p27
    %p29 = scmp.ne.s32.totalorder %s21, %s24
    %p30 = scmp.eq.s32.totalorder %s11, 0
    %p31 = por %p29, %p30
    %p32 = scmp.ne.s32.totalorder %s21, %s24
    %p33 = scmp.eq.s32.totalorder %s16, 3
    %p34 = por %p32, %p33
    %p35 = scmp.ne.s32.totalorder %s24, %s25
    %p36 = scmp.eq.s32.totalorder %s16, 0
    %p37 = por %p35, %p36
    %p38 = scmp.ne.s32.totalorder %s24, %s25
    %p39 = scmp.eq.s32.totalorder %s17, 3
    %p40 = por %p38, %p39
    %p42 = scmp.ne.s32.totalorder %s25, %s41
    %p43 = scmp.eq.s32.totalorder %s17, 0
    %p44 = por %p42, %p43
    %s46 = sadd.s32 %s45, 1
    %p49 = scmp.eq.s32.totalorder %s11, 3
    %p50 = scmp.ne.s32.totalorder %s45, %s47
    %p51 = scmp.eq.s32.totalorder %s11, 0
    %p52 = por %p50, %p51
    %p53 = scmp.ne.s32.totalorder %s45, %s47
    %p54 = scmp.eq.s32.totalorder %s16, 3
    %p55 = por %p53, %p54
    %p56 = scmp.ne.s32.totalorder %s47, %s48
    %p57 = scmp.eq.s32.totalorder %s16, 0
    %p58 = por %p56, %p57
    %p59 = scmp.ne.s32.totalorder %s47, %s48
    %p60 = scmp.eq.s32.totalorder %s17, 3
    %p61 = por %p59, %p60
    %p63 = scmp.ne.s32.totalorder %s48, %s62
    %p64 = scmp.eq.s32.totalorder %s17, 0
    %p65 = por %p63, %p64
    %s67 = sadd.s32 %s66, 1
    %p70 = scmp.eq.s32.totalorder %s11, 3
    %p71 = scmp.ne.s32.totalorder %s66, %s68
    %p72 = scmp.eq.s32.totalorder %s11, 0
    %p73 = por %p71, %p72
    %p74 = scmp.ne.s32.totalorder %s66, %s68
    %p75 = scmp.eq.s32.totalorder %s16, 3
    %p76 = por %p74, %p75
    %p77 = scmp.ne.s32.totalorder %s68, %s69
    %p78 = scmp.eq.s32.totalorder %s16, 0
    %p79 = por %p77, %p78
    %p80 = scmp.ne.s32.totalorder %s68, %s69
    %p81 = scmp.eq.s32.totalorder %s17, 3
    %p82 = por %p80, %p81
    %p84 = scmp.ne.s32.totalorder %s69, %s83
    %p85 = scmp.eq.s32.totalorder %s17, 0
    %p86 = por %p84, %p85
    %s88 = sadd.s32 %s87, 1
    %p91 = scmp.eq.s32.totalorder %s11, 3
    %p92 = scmp.ne.s32.totalorder %s87, %s89
    %p93 = scmp.eq.s32.totalorder %s11, 0
    %p94 = por %p92, %p93
    %p95 = scmp.ne.s32.totalorder %s87, %s89
    %p96 = scmp.eq.s32.totalorder %s16, 3
    %p97 = por %p95, %p96
    %p98 = scmp.ne.s32.totalorder %s89, %s90
    %p99 = scmp.eq.s32.totalorder %s16, 0
    %p100 = por %p98, %p99
    %p101 = scmp.ne.s32.totalorder %s89, %s90
    %p102 = scmp.eq.s32.totalorder %s17, 3
    %p103 = por %p101, %p102
    %p105 = scmp.ne.s32.totalorder %s90, %s104
    %p106 = scmp.eq.s32.totalorder %s17, 0
    %p107 = por %p105, %p106
    %s108 = ssub.s32 %s11, %s18
    %p109 = scmp.eq.s32.totalorder %s108, 0
    %s111 = sadd.s32 %s110, 1
    %s112 = scalar_select %p109, %s110, %s111
    %p115 = pneg %p109
    %p116 = scmp.eq.s32.totalorder %s11, 3
    %p117 = por %p115, %p116
    %p118 = scmp.ne.s32.totalorder %s110, %s113
    %p119 = scmp.eq.s32.totalorder %s11, 0
    %p120 = por %p118, %p119
    %p121 = scmp.ne.s32.totalorder %s110, %s113
    %p122 = scmp.eq.s32.totalorder %s16, 3
    %p123 = por %p121, %p122
    %p124 = scmp.ne.s32.totalorder %s113, %s114
    %p125 = scmp.eq.s32.totalorder %s16, 0
    %p126 = por %p124, %p125
    %p127 = scmp.ne.s32.totalorder %s113, %s114
    %p128 = scmp.eq.s32.totalorder %s17, 3
    %p129 = por %p127, %p128
    %p131 = scmp.ne.s32.totalorder %s114, %s130
    %p132 = scmp.eq.s32.totalorder %s17, 0
    %p133 = por %p131, %p132
    %s134 = ssub.s32 %s11, %s18
    %p135 = scmp.eq.s32.totalorder %s134, 0
    %s137 = sadd.s32 %s136, 1
    %s138 = scalar_select %p135, %s136, %s137
    %p141 = pneg %p135
    %p142 = scmp.eq.s32.totalorder %s11, 3
    %p143 = por %p141, %p142
    %p144 = scmp.ne.s32.totalorder %s136, %s139
    %p145 = scmp.eq.s32.totalorder %s11, 0
    %p146 = por %p144, %p145
    %p147 = scmp.ne.s32.totalorder %s136, %s139
    %p148 = scmp.eq.s32.totalorder %s16, 3
    %p149 = por %p147, %p148
    %p150 = scmp.ne.s32.totalorder %s139, %s140
    %p151 = scmp.eq.s32.totalorder %s16, 0
    %p152 = por %p150, %p151
    %p153 = scmp.ne.s32.totalorder %s139, %s140
    %p154 = scmp.eq.s32.totalorder %s17, 3
    %p155 = por %p153, %p154
    %p157 = scmp.ne.s32.totalorder %s140, %s156
    %p158 = scmp.eq.s32.totalorder %s17, 0
    %p159 = por %p157, %p158
    %p160 = scmp.le.s32.totalorder 1, %s11
    %p161 = scmp.lt.s32.totalorder %s11, 5
    %p162 = pnand %p160, %p161
    %p163 = pneg %p162
    // Predicated region
    $region9: #{bottleneck_forward.7} parent=5 // pred_check
      _
    $region10: #{bottleneck_forward.7} parent=5 // pred_check_branch
      %165 = sbr.rel (%p162) target = $region12
    $region11: #{bottleneck_forward.7} parent=5 // pred_region
      %s166 = ssub.s32 %s11, 1
      // Predicated region
      $region13: #{bottleneck_forward.7} parent=11 // pred_check
        %p167 = pneg %p58
      $region14: #{bottleneck_forward.7} parent=11 // pred_check_branch
        %169 = sbr.rel (%p167) target = $region16
      $region15: #{bottleneck_forward.7} parent=11 // pred_region
        _
      $region16: #{bottleneck_forward.7} parent=11 // pred_fallthru
        _
      // Predicated region
      $region17: #{bottleneck_forward.7} parent=11 // pred_check
        %p170 = pneg %p79
      $region18: #{bottleneck_forward.7} parent=11 // pred_check_branch
        %172 = sbr.rel (%p170) target = $region20
      $region19: #{bottleneck_forward.7} parent=11 // pred_region
        _
      $region20: #{bottleneck_forward.7} parent=11 // pred_fallthru
        _
      // Predicated region
      $region21: #{bottleneck_forward.7} parent=11 // pred_check
        %p173 = pneg %p100
      $region22: #{bottleneck_forward.7} parent=11 // pred_check_branch
        %175 = sbr.rel (%p173) target = $region24
      $region23: #{bottleneck_forward.7} parent=11 // pred_region
        _
      $region24: #{bottleneck_forward.7} parent=11 // pred_fallthru
        _
    $region12: #{bottleneck_forward.7} parent=5 // pred_fallthru
      _
    %p176 = scmp.lt.s32.totalorder %s11, 4
    // Predicated region
    $region25: #{bottleneck_forward.7} parent=5 // pred_check
      %p177 = pneg %p176
    $region26: #{bottleneck_forward.7} parent=5 // pred_check_branch
      %179 = sbr.rel (%p177) target = $region28
    $region27: #{bottleneck_forward.7} parent=5 // pred_region
      // Predicated region
      $region29: #{bottleneck_forward.7} parent=27 // pred_check
        %p180 = pneg %p31
      $region30: #{bottleneck_forward.7} parent=27 // pred_check_branch
        %182 = sbr.rel (%p180) target = $region32
      $region31: #{bottleneck_forward.7} parent=27 // pred_region
        %s183 = smul.u32 16, %s11
        %p184 = scmp.lt.s32.totalorder %s183, 63
        %s185 = scalar_select %p184, %s183, 63
        %s186 = smul.addr %s185, 8
        %s187 = scalar_lea.vmem %s0, %s186
        %s188 = smul.u32 16, %s11
      $region32: #{bottleneck_forward.7} parent=27 // pred_fallthru
        _
      // Predicated region
      $region33: #{bottleneck_forward.7} parent=27 // pred_check
        %p189 = pneg %p120
      $region34: #{bottleneck_forward.7} parent=27 // pred_check_branch
        %191 = sbr.rel (%p189) target = $region36
      $region35: #{bottleneck_forward.7} parent=27 // pred_region
        %s192 = smul.u32 16, %s11
        %p193 = scmp.lt.s32.totalorder %s192, 63
        %s194 = scalar_select %p193, %s192, 63
        %s195 = smul.addr %s194, 8
        %s196 = scalar_lea.vmem %s4, %s195
        %s197 = smul.u32 16, %s11
      $region36: #{bottleneck_forward.7} parent=27 // pred_fallthru
        _
    $region28: #{bottleneck_forward.7} parent=5 // pred_fallthru
      _
    %p198 = scmp.le.s32.totalorder 1, %s11
    %p199 = scmp.lt.s32.totalorder %s11, 5
    %p200 = pnand %p198, %p199
    %p201 = pneg %p200
    // Predicated region
    $region37: #{bottleneck_forward.7} parent=5 // pred_check
      _
    $region38: #{bottleneck_forward.7} parent=5 // pred_check_branch
      %203 = sbr.rel (%p200) target = $region40
    $region39: #{bottleneck_forward.7} parent=5 // pred_region
      %s204 = ssub.s32 %s11, 1
      %s205 = smul.u32 16, %s16
      %p206 = scmp.lt.s32.totalorder %s205, 63
      %s207 = scalar_select %p206, %s205, 63
      %s208 = smul.addr %s207, 8
      %s209 = scalar_lea.vmem %s0, %s208
      %p210 = pneg %p37
      %p211 = pneg %p34
      %p212 = pneg %p58
      %p213 = pneg %p55
      %p214 = pneg %p79
      %p215 = pneg %p76
      %p216 = pneg %p100
      %p217 = pneg %p97
      %s218 = smul.u32 16, %s16
      %p219 = scmp.lt.s32.totalorder %s218, 63
      %s220 = scalar_select %p219, %s218, 63
      %s221 = smul.addr %s220, 8
      %s222 = scalar_lea.vmem %s4, %s221
      %p223 = pneg %p126
      %p224 = pneg %p123
      %p225 = pneg %p152
      %p226 = pneg %p149
      %s227 = smul.u32 16, %s16
      %p228 = scmp.lt.s32.totalorder %s227, 63
      %s229 = scalar_select %p228, %s227, 63
      %s230 = smul.addr %s229, 8
      %s231 = scalar_lea.vmem %s5, %s230
      %s232 = smul.u32 16, %s16
      %p233 = scmp.lt.s32.totalorder %s232, 63
      %s234 = scalar_select %p233, %s232, 63
      %s235 = smul.addr %s234, 8
      %s236 = scalar_lea.vmem %s0, %s235
      %s237 = smul.u32 16, %s16
      %s238 = smul.u32 16, %s16
      %p239 = scmp.lt.s32.totalorder %s238, 63
      %s240 = scalar_select %p239, %s238, 63
      %s241 = smul.addr %s240, 8
      %s242 = scalar_lea.vmem %s4, %s241
      %s243 = smul.u32 16, %s16
      %s244 = smul.u32 16, %s16
      %p245 = scmp.lt.s32.totalorder %s244, 63
      %s246 = scalar_select %p245, %s244, 63
      %s247 = smul.addr %s246, 8
      %s248 = scalar_lea.vmem %s5, %s247
      %s249 = smul.u32 16, %s16
      %v250 = vld [vmem:[%s1] sm:$0x1]
      %v251 = vmul.f32 %v250, 0.001953125
      %v252 = vld [vmem:[%s1 + $0x1] sm:$0x1]
      %v253 = vmul.f32 %v252, 0.001953125
      %v254 = vmul.f32 %v251, %v251
      %v255 = vsub.f32 %v253, %v254
      %v256 = vadd.f32 %v255, 1e-05
      %v257 = vrsqrt.pop %v256
      %v258 = vld [vmem:[%s2] sm:$0x1]
      %v259 = vmul.f32 %v257, %v258
      %v260 = vld [vmem:[%s3] sm:$0x1]
      %v261 = vmul.f32 %v251, %v259
      %v262 = vsub.f32 %v260, %v261
      %v263 = vld [vmem:[%s236] sm:$0xff]
      %v264 = vld [vmem:[%s236 + $0x8] sm:$0xff]
      %v265 = vld [vmem:[%s236 + $0x10] sm:$0xff]
      %v266 = vld [vmem:[%s236 + $0x18] sm:$0xff]
      %v267 = vld [vmem:[%s236 + $0x20] sm:$0xff]
      %v268 = vld [vmem:[%s236 + $0x28] sm:$0xff]
      %v269 = vld [vmem:[%s236 + $0x30] sm:$0xff]
      %v270 = vld [vmem:[%s236 + $0x38] sm:$0xff]
      %v271 = vld [vmem:[%s236 + $0x40] sm:$0xff]
      %v272 = vld [vmem:[%s236 + $0x48] sm:$0xff]
      %v273 = vld [vmem:[%s236 + $0x50] sm:$0xff]
      %v274 = vld [vmem:[%s236 + $0x58] sm:$0xff]
      %v275 = vld [vmem:[%s236 + $0x60] sm:$0xff]
      %v276 = vld [vmem:[%s236 + $0x68] sm:$0xff]
      %v277 = vld [vmem:[%s236 + $0x70] sm:$0xff]
      %v278 = vld [vmem:[%s236 + $0x78] sm:$0xff]
      %v279 = vlaneseq
      %v280 = vshrl.u32 %v279, 7
      %v281 = vsub.s32 0, %v280
      %v282 = vrot.slane %v259, %v281
      %v283 = vmul.f32 %v263, %v282
      %v284 = vmul.f32 %v264, %v282
      %v285 = vmul.f32 %v265, %v282
      %v286 = vmul.f32 %v266, %v282
      %v287 = vmul.f32 %v267, %v282
      %v288 = vmul.f32 %v268, %v282
      %v289 = vmul.f32 %v269, %v282
      %v290 = vmul.f32 %v270, %v282
      %v291 = vmul.f32 %v271, %v282
      %v292 = vmul.f32 %v272, %v282
      %v293 = vmul.f32 %v273, %v282
      %v294 = vmul.f32 %v274, %v282
      %v295 = vmul.f32 %v275, %v282
      %v296 = vmul.f32 %v276, %v282
      %v297 = vmul.f32 %v277, %v282
      %v298 = vmul.f32 %v278, %v282
      %v300 = vlaneseq
      %v301 = vshrl.u32 %v300, 7
      %v302 = vsub.s32 0, %v301
      %v303 = vrot.slane %v262, %v302
      %v305 = vadd.f32 %v283, %v303
      %v306 = vadd.f32 %v284, %v303
      %v307 = vadd.f32 %v285, %v303
      %v308 = vadd.f32 %v286, %v303
      %v309 = vadd.f32 %v287, %v303
      %v310 = vadd.f32 %v288, %v303
      %v311 = vadd.f32 %v289, %v303
      %v312 = vadd.f32 %v290, %v303
      %v313 = vadd.f32 %v291, %v303
      %v314 = vadd.f32 %v292, %v303
      %v315 = vadd.f32 %v293, %v303
      %v316 = vadd.f32 %v294, %v303
      %v317 = vadd.f32 %v295, %v303
      %v318 = vadd.f32 %v296, %v303
      %v319 = vadd.f32 %v297, %v303
      %v320 = vadd.f32 %v298, %v303
      %v321 = vld [vmem:[%s242] sm:$0xff]
      %v322 = vld [vmem:[%s242 + $0x8] sm:$0xff]
      %v323 = vld [vmem:[%s242 + $0x10] sm:$0xff]
      %v324 = vld [vmem:[%s242 + $0x18] sm:$0xff]
      %v325 = vld [vmem:[%s242 + $0x20] sm:$0xff]
      %v326 = vld [vmem:[%s242 + $0x28] sm:$0xff]
      %v327 = vld [vmem:[%s242 + $0x30] sm:$0xff]
      %v328 = vld [vmem:[%s242 + $0x38] sm:$0xff]
      %v329 = vld [vmem:[%s242 + $0x40] sm:$0xff]
      %v330 = vld [vmem:[%s242 + $0x48] sm:$0xff]
      %v331 = vld [vmem:[%s242 + $0x50] sm:$0xff]
      %v332 = vld [vmem:[%s242 + $0x58] sm:$0xff]
      %v333 = vld [vmem:[%s242 + $0x60] sm:$0xff]
      %v334 = vld [vmem:[%s242 + $0x68] sm:$0xff]
      %v335 = vld [vmem:[%s242 + $0x70] sm:$0xff]
      %v336 = vld [vmem:[%s242 + $0x78] sm:$0xff]
      %v337 = vadd.f32 %v305, %v321
      %v338 = vadd.f32 %v306, %v322
      %v339 = vadd.f32 %v307, %v323
      %v340 = vadd.f32 %v308, %v324
      %v341 = vadd.f32 %v309, %v325
      %v342 = vadd.f32 %v310, %v326
      %v343 = vadd.f32 %v311, %v327
      %v344 = vadd.f32 %v312, %v328
      %v345 = vadd.f32 %v313, %v329
      %v346 = vadd.f32 %v314, %v330
      %v347 = vadd.f32 %v315, %v331
      %v348 = vadd.f32 %v316, %v332
      %v349 = vadd.f32 %v317, %v333
      %v350 = vadd.f32 %v318, %v334
      %v351 = vadd.f32 %v319, %v335
      %v352 = vadd.f32 %v320, %v336
      %v353 = vmax.f32 %v337, 0.0
      %v354 = vmax.f32 %v338, 0.0
      %v355 = vmax.f32 %v339, 0.0
      %v356 = vmax.f32 %v340, 0.0
      %v357 = vmax.f32 %v341, 0.0
      %v358 = vmax.f32 %v342, 0.0
      %v359 = vmax.f32 %v343, 0.0
      %v360 = vmax.f32 %v344, 0.0
      %v361 = vmax.f32 %v345, 0.0
      %v362 = vmax.f32 %v346, 0.0
      %v363 = vmax.f32 %v347, 0.0
      %v364 = vmax.f32 %v348, 0.0
      %v365 = vmax.f32 %v349, 0.0
      %v366 = vmax.f32 %v350, 0.0
      %v367 = vmax.f32 %v351, 0.0
      %v368 = vmax.f32 %v352, 0.0
      %369 = vst [vmem:[%s248] sm:$0xff] %v353
      %370 = vst [vmem:[%s248 + $0x8] sm:$0xff] %v354
      %371 = vst [vmem:[%s248 + $0x10] sm:$0xff] %v355
      %372 = vst [vmem:[%s248 + $0x18] sm:$0xff] %v356
      %373 = vst [vmem:[%s248 + $0x20] sm:$0xff] %v357
      %374 = vst [vmem:[%s248 + $0x28] sm:$0xff] %v358
      %375 = vst [vmem:[%s248 + $0x30] sm:$0xff] %v359
      %376 = vst [vmem:[%s248 + $0x38] sm:$0xff] %v360
      %377 = vst [vmem:[%s248 + $0x40] sm:$0xff] %v361
      %378 = vst [vmem:[%s248 + $0x48] sm:$0xff] %v362
      %379 = vst [vmem:[%s248 + $0x50] sm:$0xff] %v363
      %380 = vst [vmem:[%s248 + $0x58] sm:$0xff] %v364
      %381 = vst [vmem:[%s248 + $0x60] sm:$0xff] %v365
      %382 = vst [vmem:[%s248 + $0x68] sm:$0xff] %v366
      %383 = vst [vmem:[%s248 + $0x70] sm:$0xff] %v367
      %384 = vst [vmem:[%s248 + $0x78] sm:$0xff] %v368
      %s385 = smul.u32 16, %s16
      %p386 = scmp.lt.s32.totalorder %s385, 63
      %s387 = scalar_select %p386, %s385, 63
      %s388 = smul.addr %s387, 8
      %s389 = scalar_lea.vmem %s5, %s388
      // Predicated region
      $region41: #{bottleneck_forward.7} parent=39 // pred_check
        %p390 = pneg %p149
      $region42: #{bottleneck_forward.7} parent=39 // pred_check_branch
        %392 = sbr.rel (%p390) target = $region44
      $region43: #{bottleneck_forward.7} parent=39 // pred_region
        %s393 = smul.u32 16, %s16
      $region44: #{bottleneck_forward.7} parent=39 // pred_fallthru
        _
    $region40: #{bottleneck_forward.7} parent=5 // pred_fallthru
      _
    %p394 = scmp.le.s32.totalorder 2, %s11
    // Predicated region
    $region45: #{bottleneck_forward.7} parent=5 // pred_check
      %p395 = pneg %p394
    $region46: #{bottleneck_forward.7} parent=5 // pred_check_branch
      %397 = sbr.rel (%p395) target = $region48
    $region47: #{bottleneck_forward.7} parent=5 // pred_region
      %s398 = ssub.s32 %s11, 2
      // Predicated region
      $region49: #{bottleneck_forward.7} parent=47 // pred_check
        %p399 = pneg %p155
      $region50: #{bottleneck_forward.7} parent=47 // pred_check_branch
        %401 = sbr.rel (%p399) target = $region52
      $region51: #{bottleneck_forward.7} parent=47 // pred_region
        %s402 = smul.u32 16, %s17
        %p403 = scmp.lt.s32.totalorder %s402, 63
        %s404 = scalar_select %p403, %s402, 63
        %s405 = smul.addr %s404, 8
        %s406 = scalar_lea.vmem %s5, %s405
      $region52: #{bottleneck_forward.7} parent=47 // pred_fallthru
        _
    $region48: #{bottleneck_forward.7} parent=5 // pred_fallthru
      _
  $region6: #{bottleneck_forward.7} parent=0 // loop_footer
    %s15 = sadd.s32 1, %s11
  $region7: #{bottleneck_forward.7} parent=0 // loop_footer_branch
    %10 = sbr.rel target = $region3
  $region8: #{bottleneck_forward.7} parent=0 // loop_exit
    _

// kernel: bottleneck_forward.6
$region0: #{bottleneck_forward.6}
  #allocation0 [shape = 'u32[]', space=smem, size = 0x4, offset = 0x4, fixed_abs, tag = 'smem constant byte address 0x4 - core index']
  #allocation1 [shape = 'u32[144,128]{1,0:T(1,128)}', space=vmem, size = 0x12000, scoped, tag = 'internal scratch']
  %s0 = inlined_call_operand.vmem [shape: f32[512,128], index: 0, kind: input, shape index: {}]
  %s1 = inlined_call_operand.vmem [shape: f32[8,128], index: 1, kind: input, shape index: {}]
  %s2 = inlined_call_operand.vmem [shape: f32[1,128], index: 2, kind: input, shape index: {}]
  %s3 = inlined_call_operand.vmem [shape: f32[1,128], index: 3, kind: input, shape index: {}]
  %s4 = inlined_call_operand.vmem [shape: f32[128,128], index: 4, kind: input, shape index: {}]
  %s5 = inlined_call_operand.vmem [shape: f32[512,128], index: 5, kind: output, shape index: {0}]
  %s6 = inlined_call_operand.vmem [shape: f32[32,128], index: 6, kind: output, shape index: {1}]
  %7 = xla_tuple %s5, %s6
  %s8 = sld [smem:[#allocation0]]
  $region61: #{bottleneck_forward.6} parent=0
    _
  %s10 = ssub.s32 1, %s8
  %s11 = scalar_select 0, %s10, %s8
  loop: start=0, step=1, limit=6
  $region2: #{bottleneck_forward.6} parent=0 // loop_pre_header
    _
  $region3: #{bottleneck_forward.6} parent=0 // loop_header
    %s13 = sphi 0, %s17
    %p14 = scmp.ge.s32.totalorder %s13, 6
    %s23 = sphi 0, %s25
    %s26 = sphi 0, %s23
    %s27 = sphi 0, %s26
    %s43 = sphi 0, %s27
    %s47 = sphi 0, %s47
    %s49 = sphi 0, %s47
    %s50 = sphi 0, %s49
    %s64 = sphi 0, %s50
    %s68 = sphi 0, %s68
    %s70 = sphi 0, %s68
    %s71 = sphi 0, %s70
    %s85 = sphi 0, %s71
    %s89 = sphi 0, %s89
    %s91 = sphi 0, %s89
    %s92 = sphi 0, %s91
    %s106 = sphi 0, %s92
    %s110 = sphi 0, %s110
    %s112 = sphi 0, %s110
    %s113 = sphi 0, %s112
    %s127 = sphi 0, %s113
    %s133 = sphi 0, %s135
    %s136 = sphi 0, %s133
    %s137 = sphi 0, %s136
    %s153 = sphi 0, %s137
    %s159 = sphi 0, %s161
    %s162 = sphi 0, %s159
    %s163 = sphi 0, %s162
    %s179 = sphi 0, %s163
  $region4: #{bottleneck_forward.6} parent=0 // loop_header_branch
    %16 = sbr.rel (%p14) target = $region8
  $region5: #{bottleneck_forward.6} parent=0 // loop_body
    %s18 = ssub.s32 %s13, 1
    %s19 = ssub.s32 %s13, 2
    %s20 = sadd.s32 %s13, 1
    %s21 = ssub.s32 %s13, %s20
    %p22 = scmp.eq.s32.totalorder %s21, 0
    %s24 = sadd.s32 %s23, 1
    %s25 = scalar_select %p22, %s23, %s24
    %p28 = pneg %p22
    %p29 = scmp.eq.s32.totalorder %s13, 3
    %p30 = por %p28, %p29
    %p31 = scmp.ne.s32.totalorder %s23, %s26
    %p32 = scmp.eq.s32.totalorder %s13, 0
    %p33 = por %p31, %p32
    %p34 = scmp.ne.s32.totalorder %s23, %s26
    %p35 = scmp.eq.s32.totalorder %s18, 3
    %p36 = por %p34, %p35
    %p37 = scmp.ne.s32.totalorder %s26, %s27
    %p38 = scmp.eq.s32.totalorder %s18, 0
    %p39 = por %p37, %p38
    %p40 = scmp.ne.s32.totalorder %s26, %s27
    %p41 = scmp.eq.s32.totalorder %s19, 3
    %p42 = por %p40, %p41
    %p44 = scmp.ne.s32.totalorder %s27, %s43
    %p45 = scmp.eq.s32.totalorder %s19, 0
    %p46 = por %p44, %p45
    %s48 = sadd.s32 %s47, 1
    %p51 = scmp.eq.s32.totalorder %s13, 3
    %p52 = scmp.ne.s32.totalorder %s47, %s49
    %p53 = scmp.eq.s32.totalorder %s13, 0
    %p54 = por %p52, %p53
    %p55 = scmp.ne.s32.totalorder %s47, %s49
    %p56 = scmp.eq.s32.totalorder %s18, 3
    %p57 = por %p55, %p56
    %p58 = scmp.ne.s32.totalorder %s49, %s50
    %p59 = scmp.eq.s32.totalorder %s18, 0
    %p60 = por %p58, %p59
    %p61 = scmp.ne.s32.totalorder %s49, %s50
    %p62 = scmp.eq.s32.totalorder %s19, 3
    %p63 = por %p61, %p62
    %p65 = scmp.ne.s32.totalorder %s50, %s64
    %p66 = scmp.eq.s32.totalorder %s19, 0
    %p67 = por %p65, %p66
    %s69 = sadd.s32 %s68, 1
    %p72 = scmp.eq.s32.totalorder %s13, 3
    %p73 = scmp.ne.s32.totalorder %s68, %s70
    %p74 = scmp.eq.s32.totalorder %s13, 0
    %p75 = por %p73, %p74
    %p76 = scmp.ne.s32.totalorder %s68, %s70
    %p77 = scmp.eq.s32.totalorder %s18, 3
    %p78 = por %p76, %p77
    %p79 = scmp.ne.s32.totalorder %s70, %s71
    %p80 = scmp.eq.s32.totalorder %s18, 0
    %p81 = por %p79, %p80
    %p82 = scmp.ne.s32.totalorder %s70, %s71
    %p83 = scmp.eq.s32.totalorder %s19, 3
    %p84 = por %p82, %p83
    %p86 = scmp.ne.s32.totalorder %s71, %s85
    %p87 = scmp.eq.s32.totalorder %s19, 0
    %p88 = por %p86, %p87
    %s90 = sadd.s32 %s89, 1
    %p93 = scmp.eq.s32.totalorder %s13, 3
    %p94 = scmp.ne.s32.totalorder %s89, %s91
    %p95 = scmp.eq.s32.totalorder %s13, 0
    %p96 = por %p94, %p95
    %p97 = scmp.ne.s32.totalorder %s89, %s91
    %p98 = scmp.eq.s32.totalorder %s18, 3
    %p99 = por %p97, %p98
    %p100 = scmp.ne.s32.totalorder %s91, %s92
    %p101 = scmp.eq.s32.totalorder %s18, 0
    %p102 = por %p100, %p101
    %p103 = scmp.ne.s32.totalorder %s91, %s92
    %p104 = scmp.eq.s32.totalorder %s19, 3
    %p105 = por %p103, %p104
    %p107 = scmp.ne.s32.totalorder %s92, %s106
    %p108 = scmp.eq.s32.totalorder %s19, 0
    %p109 = por %p107, %p108
    %s111 = sadd.s32 %s110, 1
    %p114 = scmp.eq.s32.totalorder %s13, 3
    %p115 = scmp.ne.s32.totalorder %s110, %s112
    %p116 = scmp.eq.s32.totalorder %s13, 0
    %p117 = por %p115, %p116
    %p118 = scmp.ne.s32.totalorder %s110, %s112
    %p119 = scmp.eq.s32.totalorder %s18, 3
    %p120 = por %p118, %p119
    %p121 = scmp.ne.s32.totalorder %s112, %s113
    %p122 = scmp.eq.s32.totalorder %s18, 0
    %p123 = por %p121, %p122
    %p124 = scmp.ne.s32.totalorder %s112, %s113
    %p125 = scmp.eq.s32.totalorder %s19, 3
    %p126 = por %p124, %p125
    %p128 = scmp.ne.s32.totalorder %s113, %s127
    %p129 = scmp.eq.s32.totalorder %s19, 0
    %p130 = por %p128, %p129
    %s131 = ssub.s32 %s13, %s20
    %p132 = scmp.eq.s32.totalorder %s131, 0
    %s134 = sadd.s32 %s133, 1
    %s135 = scalar_select %p132, %s133, %s134
    %p138 = pneg %p132
    %p139 = scmp.eq.s32.totalorder %s13, 3
    %p140 = por %p138, %p139
    %p141 = scmp.ne.s32.totalorder %s133, %s136
    %p142 = scmp.eq.s32.totalorder %s13, 0
    %p143 = por %p141, %p142
    %p144 = scmp.ne.s32.totalorder %s133, %s136
    %p145 = scmp.eq.s32.totalorder %s18, 3
    %p146 = por %p144, %p145
    %p147 = scmp.ne.s32.totalorder %s136, %s137
    %p148 = scmp.eq.s32.totalorder %s18, 0
    %p149 = por %p147, %p148
    %p150 = scmp.ne.s32.totalorder %s136, %s137
    %p151 = scmp.eq.s32.totalorder %s19, 3
    %p152 = por %p150, %p151
    %p154 = scmp.ne.s32.totalorder %s137, %s153
    %p155 = scmp.eq.s32.totalorder %s19, 0
    %p156 = por %p154, %p155
    %s157 = ssub.s32 %s13, %s20
    %p158 = scmp.eq.s32.totalorder %s157, 0
    %s160 = sadd.s32 %s159, 1
    %s161 = scalar_select %p158, %s159, %s160
    %p164 = pneg %p158
    %p165 = scmp.eq.s32.totalorder %s13, 3
    %p166 = por %p164, %p165
    %p167 = scmp.ne.s32.totalorder %s159, %s162
    %p168 = scmp.eq.s32.totalorder %s13, 0
    %p169 = por %p167, %p168
    %p170 = scmp.ne.s32.totalorder %s159, %s162
    %p171 = scmp.eq.s32.totalorder %s18, 3
    %p172 = por %p170, %p171
    %p173 = scmp.ne.s32.totalorder %s162, %s163
    %p174 = scmp.eq.s32.totalorder %s18, 0
    %p175 = por %p173, %p174
    %p176 = scmp.ne.s32.totalorder %s162, %s163
    %p177 = scmp.eq.s32.totalorder %s19, 3
    %p178 = por %p176, %p177
    %p180 = scmp.ne.s32.totalorder %s163, %s179
    %p181 = scmp.eq.s32.totalorder %s19, 0
    %p182 = por %p180, %p181
    %p183 = scmp.le.s32.totalorder 1, %s13
    %p184 = scmp.lt.s32.totalorder %s13, 5
    %p185 = pnand %p183, %p184
    %p186 = pneg %p185
    // Predicated region
    $region9: #{bottleneck_forward.6} parent=5 // pred_check
      _
    $region10: #{bottleneck_forward.6} parent=5 // pred_check_branch
      %188 = sbr.rel (%p185) target = $region12
    $region11: #{bottleneck_forward.6} parent=5 // pred_region
      %s189 = ssub.s32 %s13, 1
      // Predicated region
      $region13: #{bottleneck_forward.6} parent=11 // pred_check
        %p190 = pneg %p60
      $region14: #{bottleneck_forward.6} parent=11 // pred_check_branch
        %192 = sbr.rel (%p190) target = $region16
      $region15: #{bottleneck_forward.6} parent=11 // pred_region
        _
      $region16: #{bottleneck_forward.6} parent=11 // pred_fallthru
        _
      // Predicated region
      $region17: #{bottleneck_forward.6} parent=11 // pred_check
        %p193 = pneg %p81
      $region18: #{bottleneck_forward.6} parent=11 // pred_check_branch
        %195 = sbr.rel (%p193) target = $region20
      $region19: #{bottleneck_forward.6} parent=11 // pred_region
        _
      $region20: #{bottleneck_forward.6} parent=11 // pred_fallthru
        _
      // Predicated region
      $region21: #{bottleneck_forward.6} parent=11 // pred_check
        %p196 = pneg %p102
      $region22: #{bottleneck_forward.6} parent=11 // pred_check_branch
        %198 = sbr.rel (%p196) target = $region24
      $region23: #{bottleneck_forward.6} parent=11 // pred_region
        _
      $region24: #{bottleneck_forward.6} parent=11 // pred_fallthru
        _
      // Predicated region
      $region25: #{bottleneck_forward.6} parent=11 // pred_check
        %p199 = pneg %p123
      $region26: #{bottleneck_forward.6} parent=11 // pred_check_branch
        %201 = sbr.rel (%p199) target = $region28
      $region27: #{bottleneck_forward.6} parent=11 // pred_region
        _
      $region28: #{bottleneck_forward.6} parent=11 // pred_fallthru
        _
    $region12: #{bottleneck_forward.6} parent=5 // pred_fallthru
      _
    %p202 = scmp.lt.s32.totalorder %s13, 4
    // Predicated region
    $region29: #{bottleneck_forward.6} parent=5 // pred_check
      %p203 = pneg %p202
    $region30: #{bottleneck_forward.6} parent=5 // pred_check_branch
      %205 = sbr.rel (%p203) target = $region32
    $region31: #{bottleneck_forward.6} parent=5 // pred_region
      // Predicated region
      $region33: #{bottleneck_forward.6} parent=31 // pred_check
        %p206 = pneg %p33
      $region34: #{bottleneck_forward.6} parent=31 // pred_check_branch
        %208 = sbr.rel (%p206) target = $region36
      $region35: #{bottleneck_forward.6} parent=31 // pred_region
        %s209 = smul.u32 16, %s13
        %p210 = scmp.lt.s32.totalorder %s209, 63
        %s211 = scalar_select %p210, %s209, 63
        %s212 = smul.addr %s211, 8
        %s213 = scalar_lea.vmem %s0, %s212
        %s214 = smul.u32 16, %s13
      $region36: #{bottleneck_forward.6} parent=31 // pred_fallthru
        _
    $region32: #{bottleneck_forward.6} parent=5 // pred_fallthru
      _
    %p215 = scmp.le.s32.totalorder 1, %s13
    %p216 = scmp.lt.s32.totalorder %s13, 5
    %p217 = pnand %p215, %p216
    %p218 = pneg %p217
    // Predicated region
    $region37: #{bottleneck_forward.6} parent=5 // pred_check
      _
    $region38: #{bottleneck_forward.6} parent=5 // pred_check_branch
      %220 = sbr.rel (%p217) target = $region40
    $region39: #{bottleneck_forward.6} parent=5 // pred_region
      %s221 = ssub.s32 %s13, 1
      %s222 = smul.u32 16, %s18
      %p223 = scmp.lt.s32.totalorder %s222, 63
      %s224 = scalar_select %p223, %s222, 63
      %s225 = smul.addr %s224, 8
      %s226 = scalar_lea.vmem %s0, %s225
      %p227 = pneg %p39
      %p228 = pneg %p36
      %p229 = pneg %p60
      %p230 = pneg %p57
      %p231 = pneg %p81
      %p232 = pneg %p78
      %p233 = pneg %p102
      %p234 = pneg %p99
      %p235 = pneg %p123
      %p236 = pneg %p120
      %p237 = pneg %p149
      %p238 = pneg %p146
      %s239 = smul.u32 16, %s18
      %p240 = scmp.lt.s32.totalorder %s239, 63
      %s241 = scalar_select %p240, %s239, 63
      %s242 = smul.addr %s241, 8
      %s243 = scalar_lea.vmem %s5, %s242
      %p244 = pneg %p175
      %p245 = pneg %p172
      %p246 = scmp.lt.s32.totalorder %s18, 3
      %s247 = scalar_select %p246, %s18, 3
      %s248 = smul.addr %s247, 8
      %s249 = scalar_lea.vmem %s6, %s248
      %s250 = smul.u32 16, %s18
      %p251 = scmp.lt.s32.totalorder %s250, 63
      %s252 = scalar_select %p251, %s250, 63
      %s253 = smul.addr %s252, 8
      %s254 = scalar_lea.vmem %s0, %s253
      %s255 = smul.u32 16, %s18
      %s256 = smul.u32 16, %s18
      %p257 = scmp.lt.s32.totalorder %s256, 63
      %s258 = scalar_select %p257, %s256, 63
      %s259 = smul.addr %s258, 8
      %s260 = scalar_lea.vmem %s5, %s259
      %s261 = smul.u32 16, %s18
      %p262 = scmp.lt.s32.totalorder %s18, 3
      %s263 = scalar_select %p262, %s18, 3
      %s264 = smul.addr %s263, 8
      %s265 = scalar_lea.vmem %s6, %s264
      %v266 = vld [vmem:[%s1] sm:$0x1]
      %v267 = vmul.f32 %v266, 0.001953125
      %v268 = vld [vmem:[%s1 + $0x1] sm:$0x1]
      %v269 = vmul.f32 %v268, 0.001953125
      %v270 = vmul.f32 %v267, %v267
      %v271 = vsub.f32 %v269, %v270
      %v272 = vadd.f32 %v271, 1e-05
      %v273 = vrsqrt.pop %v272
      %v274 = vld [vmem:[%s2] sm:$0x1]
      %v275 = vmul.f32 %v273, %v274
      %v276 = vld [vmem:[%s3] sm:$0x1]
      %v277 = vmul.f32 %v267, %v275
      %v278 = vsub.f32 %v276, %v277
      %v279 = vld [vmem:[%s254] sm:$0xff]
      %v280 = vld [vmem:[%s254 + $0x8] sm:$0xff]
      %v281 = vld [vmem:[%s254 + $0x10] sm:$0xff]
      %v282 = vld [vmem:[%s254 + $0x18] sm:$0xff]
      %v283 = vld [vmem:[%s254 + $0x20] sm:$0xff]
      %v284 = vld [vmem:[%s254 + $0x28] sm:$0xff]
      %v285 = vld [vmem:[%s254 + $0x30] sm:$0xff]
      %v286 = vld [vmem:[%s254 + $0x38] sm:$0xff]
      %v287 = vld [vmem:[%s254 + $0x40] sm:$0xff]
      %v288 = vld [vmem:[%s254 + $0x48] sm:$0xff]
      %v289 = vld [vmem:[%s254 + $0x50] sm:$0xff]
      %v290 = vld [vmem:[%s254 + $0x58] sm:$0xff]
      %v291 = vld [vmem:[%s254 + $0x60] sm:$0xff]
      %v292 = vld [vmem:[%s254 + $0x68] sm:$0xff]
      %v293 = vld [vmem:[%s254 + $0x70] sm:$0xff]
      %v294 = vld [vmem:[%s254 + $0x78] sm:$0xff]
      %v295 = vlaneseq
      %v296 = vshrl.u32 %v295, 7
      %v297 = vsub.s32 0, %v296
      %v298 = vrot.slane %v275, %v297
      %v299 = vmul.f32 %v279, %v298
      %v300 = vmul.f32 %v280, %v298
      %v301 = vmul.f32 %v281, %v298
      %v302 = vmul.f32 %v282, %v298
      %v303 = vmul.f32 %v283, %v298
      %v304 = vmul.f32 %v284, %v298
      %v305 = vmul.f32 %v285, %v298
      %v306 = vmul.f32 %v286, %v298
      %v307 = vmul.f32 %v287, %v298
      %v308 = vmul.f32 %v288, %v298
      %v309 = vmul.f32 %v289, %v298
      %v310 = vmul.f32 %v290, %v298
      %v311 = vmul.f32 %v291, %v298
      %v312 = vmul.f32 %v292, %v298
      %v313 = vmul.f32 %v293, %v298
      %v314 = vmul.f32 %v294, %v298
      %v316 = vlaneseq
      %v317 = vshrl.u32 %v316, 7
      %v318 = vsub.s32 0, %v317
      %v319 = vrot.slane %v278, %v318
      %v321 = vadd.f32 %v299, %v319
      %v322 = vadd.f32 %v300, %v319
      %v323 = vadd.f32 %v301, %v319
      %v324 = vadd.f32 %v302, %v319
      %v325 = vadd.f32 %v303, %v319
      %v326 = vadd.f32 %v304, %v319
      %v327 = vadd.f32 %v305, %v319
      %v328 = vadd.f32 %v306, %v319
      %v329 = vadd.f32 %v307, %v319
      %v330 = vadd.f32 %v308, %v319
      %v331 = vadd.f32 %v309, %v319
      %v332 = vadd.f32 %v310, %v319
      %v333 = vadd.f32 %v311, %v319
      %v334 = vadd.f32 %v312, %v319
      %v335 = vadd.f32 %v313, %v319
      %v336 = vadd.f32 %v314, %v319
      %v337 = vmax.f32 %v321, 0.0
      %v338 = vmax.f32 %v322, 0.0
      %v339 = vmax.f32 %v323, 0.0
      %v340 = vmax.f32 %v324, 0.0
      %v341 = vmax.f32 %v325, 0.0
      %v342 = vmax.f32 %v326, 0.0
      %v343 = vmax.f32 %v327, 0.0
      %v344 = vmax.f32 %v328, 0.0
      %v345 = vmax.f32 %v329, 0.0
      %v346 = vmax.f32 %v330, 0.0
      %v347 = vmax.f32 %v331, 0.0
      %v348 = vmax.f32 %v332, 0.0
      %v349 = vmax.f32 %v333, 0.0
      %v350 = vmax.f32 %v334, 0.0
      %v351 = vmax.f32 %v335, 0.0
      %v352 = vmax.f32 %v336, 0.0
      %v353 = vld [vmem:[%s4] sm:$0xff]
      %v354 = vld [vmem:[%s4 + $0x8] sm:$0xff]
      %v355 = vld [vmem:[%s4 + $0x10] sm:$0xff]
      %v356 = vld [vmem:[%s4 + $0x18] sm:$0xff]
      %v357 = vld [vmem:[%s4 + $0x20] sm:$0xff]
      %v358 = vld [vmem:[%s4 + $0x28] sm:$0xff]
      %v359 = vld [vmem:[%s4 + $0x30] sm:$0xff]
      %v360 = vld [vmem:[%s4 + $0x38] sm:$0xff]
      %v361 = vld [vmem:[%s4 + $0x40] sm:$0xff]
      %v362 = vld [vmem:[%s4 + $0x48] sm:$0xff]
      %v363 = vld [vmem:[%s4 + $0x50] sm:$0xff]
      %v364 = vld [vmem:[%s4 + $0x58] sm:$0xff]
      %v365 = vld [vmem:[%s4 + $0x60] sm:$0xff]
      %v366 = vld [vmem:[%s4 + $0x68] sm:$0xff]
      %v367 = vld [vmem:[%s4 + $0x70] sm:$0xff]
      %v368 = vld [vmem:[%s4 + $0x78] sm:$0xff]
      %369 = vmatprep.subr.mxu0 0.0
      %370 = vmatpush1.msra.mxu0 %v353
      %371 = vmatprep.subr.mxu0 0.0
      %372 = vmatpush1.msra.mxu0 %v354
      %373 = vmatprep.subr.mxu0 0.0
      %374 = vmatpush1.msra.mxu0 %v355
      %375 = vmatprep.subr.mxu0 0.0
      %376 = vmatpush1.msra.mxu0 %v356
      %377 = vmatprep.subr.mxu0 0.0
      %378 = vmatpush1.msra.mxu0 %v357
      %379 = vmatprep.subr.mxu0 0.0
      %380 = vmatpush1.msra.mxu0 %v358
      %381 = vmatprep.subr.mxu0 0.0
      %382 = vmatpush1.msra.mxu0 %v359
      %383 = vmatprep.subr.mxu0 0.0
      %384 = vmatpush1.msra.mxu0 %v360
      %385 = vmatprep.subr.mxu0 0.0
      %386 = vmatpush1.msra.mxu0 %v361
      %387 = vmatprep.subr.mxu0 0.0
      %388 = vmatpush1.msra.mxu0 %v362
      %389 = vmatprep.subr.mxu0 0.0
      %390 = vmatpush1.msra.mxu0 %v363
      %391 = vmatprep.subr.mxu0 0.0
      %392 = vmatpush1.msra.mxu0 %v364
      %393 = vmatprep.subr.mxu0 0.0
      %394 = vmatpush1.msra.mxu0 %v365
      %395 = vmatprep.subr.mxu0 0.0
      %396 = vmatpush1.msra.mxu0 %v366
      %397 = vmatprep.subr.mxu0 0.0
      %398 = vmatpush1.msra.mxu0 %v367
      %399 = vmatprep.subr.mxu0 0.0
      %400 = vmatpush1.msra.mxu0 %v368
      %401 = vmatprep.subr.mxu0 0.0
      %402 = vmatpush1.msra.mxu0 0.0
      %403 = vmatprep.subr.mxu0 0.0
      %404 = vmatpush1.msra.mxu0 0.0
      %405 = vmatprep.subr.mxu0 0.0
      %406 = vmatpush1.msra.mxu0 0.0
      %407 = vmatprep.subr.mxu0 0.0
      %408 = vmatpush1.msra.mxu0 0.0
      %409 = vmatprep.subr.mxu0 0.0
      %410 = vmatpush1.msra.mxu0 0.0
      %411 = vmatprep.subr.mxu0 0.0
      %412 = vmatpush1.msra.mxu0 0.0
      %413 = vmatprep.subr.mxu0 0.0
      %414 = vmatpush1.msra.mxu0 0.0
      %415 = vmatprep.subr.mxu0 0.0
      %416 = vmatpush1.msra.mxu0 0.0
      %417 = vmatprep.subr.mxu0 0.0
      %418 = vmatpush1.msra.mxu0 0.0
      %419 = vmatprep.subr.mxu0 0.0
      %420 = vmatpush1.msra.mxu0 0.0
      %421 = vmatprep.subr.mxu0 0.0
      %422 = vmatpush1.msra.mxu0 0.0
      %423 = vmatprep.subr.mxu0 0.0
      %424 = vmatpush1.msra.mxu0 0.0
      %425 = vmatprep.subr.mxu0 0.0
      %426 = vmatpush1.msra.mxu0 0.0
      %427 = vmatprep.subr.mxu0 0.0
      %428 = vmatpush1.msra.mxu0 0.0
      %429 = vmatprep.subr.mxu0 0.0
      %430 = vmatpush1.msra.mxu0 0.0
      %431 = vmatprep.subr.mxu0 0.0
      %432 = vmatpush1.msra.mxu0 0.0
      %433 = vmatprep.mubr.f32.mxu0 0.0
      %434 = vmatmul.mubr.f32.gmra.mrb[0].mxu0 %v337
      %v435 = vpop.f32.mrb[0].mxu0
      %v436 = vadd.f32 0.0, %v435
      %v437 = vpop.f32.mrb[0].mxu0
      %438 = vmatprep.mubr.f32.mxu0 0.0
      %439 = vmatmul.mubr.f32.gmra.mrb[0].mxu0 %v338
      %v440 = vpop.f32.mrb[0].mxu0
      %v441 = vadd.f32 0.0, %v440
      %v442 = vpop.f32.mrb[0].mxu0
      %443 = vmatprep.mubr.f32.mxu0 0.0
      %444 = vmatmul.mubr.f32.gmra.mrb[0].mxu0 %v339
      %v445 = vpop.f32.mrb[0].mxu0
      %v446 = vadd.f32 0.0, %v445
      %v447 = vpop.f32.mrb[0].mxu0
      %448 = vmatprep.mubr.f32.mxu0 0.0
      %449 = vmatmul.mubr.f32.gmra.mrb[0].mxu0 %v340
      %v450 = vpop.f32.mrb[0].mxu0
      %v451 = vadd.f32 0.0, %v450
      %v452 = vpop.f32.mrb[0].mxu0
      %453 = vmatprep.mubr.f32.mxu0 0.0
      %454 = vmatmul.mubr.f32.gmra.mrb[0].mxu0 %v341
      %v455 = vpop.f32.mrb[0].mxu0
      %v456 = vadd.f32 0.0, %v455
      %v457 = vpop.f32.mrb[0].mxu0
      %458 = vmatprep.mubr.f32.mxu0 0.0
      %459 = vmatmul.mubr.f32.gmra.mrb[0].mxu0 %v342
      %v460 = vpop.f32.mrb[0].mxu0
      %v461 = vadd.f32 0.0, %v460
      %v462 = vpop.f32.mrb[0].mxu0
      %463 = vmatprep.mubr.f32.mxu0 0.0
      %464 = vmatmul.mubr.f32.gmra.mrb[0].mxu0 %v343
      %v465 = vpop.f32.mrb[0].mxu0
      %v466 = vadd.f32 0.0, %v465
      %v467 = vpop.f32.mrb[0].mxu0
      %468 = vmatprep.mubr.f32.mxu0 0.0
      %469 = vmatmul.mubr.f32.gmra.mrb[0].mxu0 %v344
      %v470 = vpop.f32.mrb[0].mxu0
      %v471 = vadd.f32 0.0, %v470
      %v472 = vpop.f32.mrb[0].mxu0
      %473 = vmatprep.mubr.f32.mxu0 0.0
      %474 = vmatmul.mubr.f32.gmra.mrb[0].mxu0 %v345
      %v475 = vpop.f32.mrb[0].mxu0
      %v476 = vadd.f32 0.0, %v475
      %v477 = vpop.f32.mrb[0].mxu0
      %478 = vmatprep.mubr.f32.mxu0 0.0
      %479 = vmatmul.mubr.f32.gmra.mrb[0].mxu0 %v346
      %v480 = vpop.f32.mrb[0].mxu0
      %v481 = vadd.f32 0.0, %v480
      %v482 = vpop.f32.mrb[0].mxu0
      %483 = vmatprep.mubr.f32.mxu0 0.0
      %484 = vmatmul.mubr.f32.gmra.mrb[0].mxu0 %v347
      %v485 = vpop.f32.mrb[0].mxu0
      %v486 = vadd.f32 0.0, %v485
      %v487 = vpop.f32.mrb[0].mxu0
      %488 = vmatprep.mubr.f32.mxu0 0.0
      %489 = vmatmul.mubr.f32.gmra.mrb[0].mxu0 %v348
      %v490 = vpop.f32.mrb[0].mxu0
      %v491 = vadd.f32 0.0, %v490
      %v492 = vpop.f32.mrb[0].mxu0
      %493 = vmatprep.mubr.f32.mxu0 0.0
      %494 = vmatmul.mubr.f32.gmra.mrb[0].mxu0 %v349
      %v495 = vpop.f32.mrb[0].mxu0
      %v496 = vadd.f32 0.0, %v495
      %v497 = vpop.f32.mrb[0].mxu0
      %498 = vmatprep.mubr.f32.mxu0 0.0
      %499 = vmatmul.mubr.f32.gmra.mrb[0].mxu0 %v350
      %v500 = vpop.f32.mrb[0].mxu0
      %v501 = vadd.f32 0.0, %v500
      %v502 = vpop.f32.mrb[0].mxu0
      %503 = vmatprep.mubr.f32.mxu0 0.0
      %504 = vmatmul.mubr.f32.gmra.mrb[0].mxu0 %v351
      %v505 = vpop.f32.mrb[0].mxu0
      %v506 = vadd.f32 0.0, %v505
      %v507 = vpop.f32.mrb[0].mxu0
      %508 = vmatprep.mubr.f32.mxu0 0.0
      %509 = vmatmul.mubr.f32.gmra.mrb[0].mxu0 %v352
      %v510 = vpop.f32.mrb[0].mxu0
      %v511 = vadd.f32 0.0, %v510
      %v512 = vpop.f32.mrb[0].mxu0
      %513 = vdwg.mxu0
      %514 = vst [vmem:[%s260] sm:$0xff] %v436
      %515 = vst [vmem:[%s260 + $0x8] sm:$0xff] %v441
      %516 = vst [vmem:[%s260 + $0x10] sm:$0xff] %v446
      %517 = vst [vmem:[%s260 + $0x18] sm:$0xff] %v451
      %518 = vst [vmem:[%s260 + $0x20] sm:$0xff] %v456
      %519 = vst [vmem:[%s260 + $0x28] sm:$0xff] %v461
      %520 = vst [vmem:[%s260 + $0x30] sm:$0xff] %v466
      %521 = vst [vmem:[%s260 + $0x38] sm:$0xff] %v471
      %522 = vst [vmem:[%s260 + $0x40] sm:$0xff] %v476
      %523 = vst [vmem:[%s260 + $0x48] sm:$0xff] %v481
      %524 = vst [vmem:[%s260 + $0x50] sm:$0xff] %v486
      %525 = vst [vmem:[%s260 + $0x58] sm:$0xff] %v491
      %526 = vst [vmem:[%s260 + $0x60] sm:$0xff] %v496
      %527 = vst [vmem:[%s260 + $0x68] sm:$0xff] %v501
      %528 = vst [vmem:[%s260 + $0x70] sm:$0xff] %v506
      %529 = vst [vmem:[%s260 + $0x78] sm:$0xff] %v511
      %v530 = vadd.f32 %v436, %v441
      %v531 = vadd.f32 %v530, %v446
      %v532 = vadd.f32 %v531, %v451
      %v533 = vadd.f32 %v532, %v456
      %v534 = vadd.f32 %v533, %v461
      %v535 = vadd.f32 %v534, %v466
      %v536 = vadd.f32 %v535, %v471
      %v537 = vadd.f32 %v536, %v476
      %v538 = vadd.f32 %v537, %v481
      %v539 = vadd.f32 %v538, %v486
      %v540 = vadd.f32 %v539, %v491
      %v541 = vadd.f32 %v540, %v496
      %v542 = vadd.f32 %v541, %v501
      %v543 = vadd.f32 %v542, %v506
      %v544 = vadd.f32 %v543, %v511
      %v545 = vrot.slane %v544, 4
      %v546 = vadd.f32 %v544, %v545
      %v547 = vrot.slane %v546, 2
      %v548 = vadd.f32 %v546, %v547
      %v549 = vrot.slane %v548, 1
      %v550 = vadd.f32 %v548, %v549
      %551 = vst [vmem:[%s265] sm:$0x1] %v550
      %v552 = vmul.f32 %v436, %v436
      %v553 = vmul.f32 %v441, %v441
      %v554 = vmul.f32 %v446, %v446
      %v555 = vmul.f32 %v451, %v451
      %v556 = vmul.f32 %v456, %v456
      %v557 = vmul.f32 %v461, %v461
      %v558 = vmul.f32 %v466, %v466
      %v559 = vmul.f32 %v471, %v471
      %v560 = vmul.f32 %v476, %v476
      %v561 = vmul.f32 %v481, %v481
      %v562 = vmul.f32 %v486, %v486
      %v563 = vmul.f32 %v491, %v491
      %v564 = vmul.f32 %v496, %v496
      %v565 = vmul.f32 %v501, %v501
      %v566 = vmul.f32 %v506, %v506
      %v567 = vmul.f32 %v511, %v511
      %v568 = vadd.f32 %v552, %v553
      %v569 = vadd.f32 %v568, %v554
      %v570 = vadd.f32 %v569, %v555
      %v571 = vadd.f32 %v570, %v556
      %v572 = vadd.f32 %v571, %v557
      %v573 = vadd.f32 %v572, %v558
      %v574 = vadd.f32 %v573, %v559
      %v575 = vadd.f32 %v574, %v560
      %v576 = vadd.f32 %v575, %v561
      %v577 = vadd.f32 %v576, %v562
      %v578 = vadd.f32 %v577, %v563
      %v579 = vadd.f32 %v578, %v564
      %v580 = vadd.f32 %v579, %v565
      %v581 = vadd.f32 %v580, %v566
      %v582 = vadd.f32 %v581, %v567
      %v583 = vrot.slane %v582, 4
      %v584 = vadd.f32 %v582, %v583
      %v585 = vrot.slane %v584, 2
      %v586 = vadd.f32 %v584, %v585
      %v587 = vrot.slane %v586, 1
      %v588 = vadd.f32 %v586, %v587
      %589 = vst [vmem:[%s265 + $0x1] sm:$0x1] %v588
      %s590 = smul.u32 16, %s18
      %p591 = scmp.lt.s32.totalorder %s590, 63
      %s592 = scalar_select %p591, %s590, 63
      %s593 = smul.addr %s592, 8
      %s594 = scalar_lea.vmem %s5, %s593
      %p595 = scmp.lt.s32.totalorder %s18, 3
      %s596 = scalar_select %p595, %s18, 3
      %s597 = smul.addr %s596, 8
      %s598 = scalar_lea.vmem %s6, %s597
      // Predicated region
      $region41: #{bottleneck_forward.6} parent=39 // pred_check
        %p599 = pneg %p146
      $region42: #{bottleneck_forward.6} parent=39 // pred_check_branch
        %601 = sbr.rel (%p599) target = $region44
      $region43: #{bottleneck_forward.6} parent=39 // pred_region
        %s602 = smul.u32 16, %s18
      $region44: #{bottleneck_forward.6} parent=39 // pred_fallthru
        _
      // Predicated region
      $region45: #{bottleneck_forward.6} parent=39 // pred_check
        %p603 = pneg %p172
      $region46: #{bottleneck_forward.6} parent=39 // pred_check_branch
        %605 = sbr.rel (%p603) target = $region48
      $region47: #{bottleneck_forward.6} parent=39 // pred_region
        _
      $region48: #{bottleneck_forward.6} parent=39 // pred_fallthru
        _
    $region40: #{bottleneck_forward.6} parent=5 // pred_fallthru
      _
    %p606 = scmp.le.s32.totalorder 2, %s13
    // Predicated region
    $region49: #{bottleneck_forward.6} parent=5 // pred_check
      %p607 = pneg %p606
    $region50: #{bottleneck_forward.6} parent=5 // pred_check_branch
      %609 = sbr.rel (%p607) target = $region52
    $region51: #{bottleneck_forward.6} parent=5 // pred_region
      %s610 = ssub.s32 %s13, 2
      // Predicated region
      $region53: #{bottleneck_forward.6} parent=51 // pred_check
        %p611 = pneg %p152
      $region54: #{bottleneck_forward.6} parent=51 // pred_check_branch
        %613 = sbr.rel (%p611) target = $region56
      $region55: #{bottleneck_forward.6} parent=51 // pred_region
        %s614 = smul.u32 16, %s19
        %p615 = scmp.lt.s32.totalorder %s614, 63
        %s616 = scalar_select %p615, %s614, 63
        %s617 = smul.addr %s616, 8
        %s618 = scalar_lea.vmem %s5, %s617
      $region56: #{bottleneck_forward.6} parent=51 // pred_fallthru
        _
      // Predicated region
      $region57: #{bottleneck_forward.6} parent=51 // pred_check
        %p619 = pneg %p178
      $region58: #{bottleneck_forward.6} parent=51 // pred_check_branch
        %621 = sbr.rel (%p619) target = $region60
      $region59: #{bottleneck_forward.6} parent=51 // pred_region
        %p622 = scmp.lt.s32.totalorder %s19, 3
        %s623 = scalar_select %p622, %s19, 3
        %s624 = smul.addr %s623, 8
        %s625 = scalar_lea.vmem %s6, %s624
      $region60: #{bottleneck_forward.6} parent=51 // pred_fallthru
        _
    $region52: #{bottleneck_forward.6} parent=5 // pred_fallthru
      _
  $region6: #{bottleneck_forward.6} parent=0 // loop_footer
    %s17 = sadd.s32 1, %s13
  $region7: #{bottleneck_forward.6} parent=0 // loop_footer_branch
    %12 = sbr.rel target = $region3
  $region8: #{bottleneck_forward.6} parent=0 // loop_exit
    _

// kernel: bottleneck_forward.5
$region0: #{bottleneck_forward.5}
  #allocation0 [shape = 'u32[]', space=smem, size = 0x4, offset = 0x4, fixed_abs, tag = 'smem constant byte address 0x4 - core index']
  #allocation1 [shape = 'u32[144,128]{1,0:T(1,128)}', space=vmem, size = 0x12000, scoped, tag = 'internal scratch']
  #allocation2 [shape = 'f32[18,18,128]{2,1,0:T(8,128)}', space=vmem, size = 0x36000, scoped, tag = 'scratch operand']
  #allocation3 [shape = 'f32[256,1152]{1,0:T(8,128)}', space=vmem, size = 0x120000, scoped, tag = 'scratch operand']
  %s0 = inlined_call_operand.vmem [shape: f32[2,16,16,128], index: 0, kind: input, shape index: {}]
  %s1 = inlined_call_operand.vmem [shape: f32[8,128], index: 1, kind: input, shape index: {}]
  %s2 = inlined_call_operand.vmem [shape: f32[1,128], index: 2, kind: input, shape index: {}]
  %s3 = inlined_call_operand.vmem [shape: f32[1,128], index: 3, kind: input, shape index: {}]
  %s4 = inlined_call_operand.vmem [shape: f32[1152,128], index: 4, kind: input, shape index: {}]
  %s5 = inlined_call_operand.vmem [shape: f32[512,128], index: 5, kind: output, shape index: {0}]
  %s6 = inlined_call_operand.vmem [shape: f32[16,128], index: 6, kind: output, shape index: {1}]
  %7 = xla_tuple %s5, %s6
  %s8 = sld [smem:[#allocation0]]
  $region61: #{bottleneck_forward.5} parent=0
    _
  %s10 = ssub.s32 1, %s8
  %s11 = scalar_select 0, %s10, %s8
  loop: start=0, step=1, limit=4
  $region2: #{bottleneck_forward.5} parent=0 // loop_pre_header
    _
  $region3: #{bottleneck_forward.5} parent=0 // loop_header
    %s13 = sphi 0, %s17
    %p14 = scmp.ge.s32.totalorder %s13, 4
    %s23 = sphi 0, %s25
    %s26 = sphi 0, %s23
    %s27 = sphi 0, %s26
    %s43 = sphi 0, %s27
    %s47 = sphi 0, %s47
    %s49 = sphi 0, %s47
    %s50 = sphi 0, %s49
    %s64 = sphi 0, %s50
    %s68 = sphi 0, %s68
    %s70 = sphi 0, %s68
    %s71 = sphi 0, %s70
    %s85 = sphi 0, %s71
    %s89 = sphi 0, %s89
    %s91 = sphi 0, %s89
    %s92 = sphi 0, %s91
    %s106 = sphi 0, %s92
    %s110 = sphi 0, %s110
    %s112 = sphi 0, %s110
    %s113 = sphi 0, %s112
    %s127 = sphi 0, %s113
    %s133 = sphi 0, %s135
    %s136 = sphi 0, %s133
    %s137 = sphi 0, %s136
    %s153 = sphi 0, %s137
    %s159 = sphi 0, %s161
    %s162 = sphi 0, %s159
    %s163 = sphi 0, %s162
    %s179 = sphi 0, %s163
  $region4: #{bottleneck_forward.5} parent=0 // loop_header_branch
    %16 = sbr.rel (%p14) target = $region8
  $region5: #{bottleneck_forward.5} parent=0 // loop_body
    %s18 = ssub.s32 %s13, 1
    %s19 = ssub.s32 %s13, 2
    %s20 = sadd.s32 %s13, 1
    %s21 = ssub.s32 %s13, %s20
    %p22 = scmp.eq.s32.totalorder %s21, 0
    %s24 = sadd.s32 %s23, 1
    %s25 = scalar_select %p22, %s23, %s24
    %p28 = pneg %p22
    %p29 = scmp.eq.s32.totalorder %s13, 1
    %p30 = por %p28, %p29
    %p31 = scmp.ne.s32.totalorder %s23, %s26
    %p32 = scmp.eq.s32.totalorder %s13, 0
    %p33 = por %p31, %p32
    %p34 = scmp.ne.s32.totalorder %s23, %s26
    %p35 = scmp.eq.s32.totalorder %s18, 1
    %p36 = por %p34, %p35
    %p37 = scmp.ne.s32.totalorder %s26, %s27
    %p38 = scmp.eq.s32.totalorder %s18, 0
    %p39 = por %p37, %p38
    %p40 = scmp.ne.s32.totalorder %s26, %s27
    %p41 = scmp.eq.s32.totalorder %s19, 1
    %p42 = por %p40, %p41
    %p44 = scmp.ne.s32.totalorder %s27, %s43
    %p45 = scmp.eq.s32.totalorder %s19, 0
    %p46 = por %p44, %p45
    %s48 = sadd.s32 %s47, 1
    %p51 = scmp.eq.s32.totalorder %s13, 1
    %p52 = scmp.ne.s32.totalorder %s47, %s49
    %p53 = scmp.eq.s32.totalorder %s13, 0
    %p54 = por %p52, %p53
    %p55 = scmp.ne.s32.totalorder %s47, %s49
    %p56 = scmp.eq.s32.totalorder %s18, 1
    %p57 = por %p55, %p56
    %p58 = scmp.ne.s32.totalorder %s49, %s50
    %p59 = scmp.eq.s32.totalorder %s18, 0
    %p60 = por %p58, %p59
    %p61 = scmp.ne.s32.totalorder %s49, %s50
    %p62 = scmp.eq.s32.totalorder %s19, 1
    %p63 = por %p61, %p62
    %p65 = scmp.ne.s32.totalorder %s50, %s64
    %p66 = scmp.eq.s32.totalorder %s19, 0
    %p67 = por %p65, %p66
    %s69 = sadd.s32 %s68, 1
    %p72 = scmp.eq.s32.totalorder %s13, 1
    %p73 = scmp.ne.s32.totalorder %s68, %s70
    %p74 = scmp.eq.s32.totalorder %s13, 0
    %p75 = por %p73, %p74
    %p76 = scmp.ne.s32.totalorder %s68, %s70
    %p77 = scmp.eq.s32.totalorder %s18, 1
    %p78 = por %p76, %p77
    %p79 = scmp.ne.s32.totalorder %s70, %s71
    %p80 = scmp.eq.s32.totalorder %s18, 0
    %p81 = por %p79, %p80
    %p82 = scmp.ne.s32.totalorder %s70, %s71
    %p83 = scmp.eq.s32.totalorder %s19, 1
    %p84 = por %p82, %p83
    %p86 = scmp.ne.s32.totalorder %s71, %s85
    %p87 = scmp.eq.s32.totalorder %s19, 0
    %p88 = por %p86, %p87
    %s90 = sadd.s32 %s89, 1
    %p93 = scmp.eq.s32.totalorder %s13, 1
    %p94 = scmp.ne.s32.totalorder %s89, %s91
    %p95 = scmp.eq.s32.totalorder %s13, 0
    %p96 = por %p94, %p95
    %p97 = scmp.ne.s32.totalorder %s89, %s91
    %p98 = scmp.eq.s32.totalorder %s18, 1
    %p99 = por %p97, %p98
    %p100 = scmp.ne.s32.totalorder %s91, %s92
    %p101 = scmp.eq.s32.totalorder %s18, 0
    %p102 = por %p100, %p101
    %p103 = scmp.ne.s32.totalorder %s91, %s92
    %p104 = scmp.eq.s32.totalorder %s19, 1
    %p105 = por %p103, %p104
    %p107 = scmp.ne.s32.totalorder %s92, %s106
    %p108 = scmp.eq.s32.totalorder %s19, 0
    %p109 = por %p107, %p108
    %s111 = sadd.s32 %s110, 1
    %p114 = scmp.eq.s32.totalorder %s13, 1
    %p115 = scmp.ne.s32.totalorder %s110, %s112
    %p116 = scmp.eq.s32.totalorder %s13, 0
    %p117 = por %p115, %p116
    %p118 = scmp.ne.s32.totalorder %s110, %s112
    %p119 = scmp.eq.s32.totalorder %s18, 1
    %p120 = por %p118, %p119
    %p121 = scmp.ne.s32.totalorder %s112, %s113
    %p122 = scmp.eq.s32.totalorder %s18, 0
    %p123 = por %p121, %p122
    %p124 = scmp.ne.s32.totalorder %s112, %s113
    %p125 = scmp.eq.s32.totalorder %s19, 1
    %p126 = por %p124, %p125
    %p128 = scmp.ne.s32.totalorder %s113, %s127
    %p129 = scmp.eq.s32.totalorder %s19, 0
    %p130 = por %p128, %p129
    %s131 = ssub.s32 %s13, %s20
    %p132 = scmp.eq.s32.totalorder %s131, 0
    %s134 = sadd.s32 %s133, 1
    %s135 = scalar_select %p132, %s133, %s134
    %p138 = pneg %p132
    %p139 = scmp.eq.s32.totalorder %s13, 1
    %p140 = por %p138, %p139
    %p141 = scmp.ne.s32.totalorder %s133, %s136
    %p142 = scmp.eq.s32.totalorder %s13, 0
    %p143 = por %p141, %p142
    %p144 = scmp.ne.s32.totalorder %s133, %s136
    %p145 = scmp.eq.s32.totalorder %s18, 1
    %p146 = por %p144, %p145
    %p147 = scmp.ne.s32.totalorder %s136, %s137
    %p148 = scmp.eq.s32.totalorder %s18, 0
    %p149 = por %p147, %p148
    %p150 = scmp.ne.s32.totalorder %s136, %s137
    %p151 = scmp.eq.s32.totalorder %s19, 1
    %p152 = por %p150, %p151
    %p154 = scmp.ne.s32.totalorder %s137, %s153
    %p155 = scmp.eq.s32.totalorder %s19, 0
    %p156 = por %p154, %p155
    %s157 = ssub.s32 %s13, %s20
    %p158 = scmp.eq.s32.totalorder %s157, 0
    %s160 = sadd.s32 %s159, 1
    %s161 = scalar_select %p158, %s159, %s160
    %p164 = pneg %p158
    %p165 = scmp.eq.s32.totalorder %s13, 1
    %p166 = por %p164, %p165
    %p167 = scmp.ne.s32.totalorder %s159, %s162
    %p168 = scmp.eq.s32.totalorder %s13, 0
    %p169 = por %p167, %p168
    %p170 = scmp.ne.s32.totalorder %s159, %s162
    %p171 = scmp.eq.s32.totalorder %s18, 1
    %p172 = por %p170, %p171
    %p173 = scmp.ne.s32.totalorder %s162, %s163
    %p174 = scmp.eq.s32.totalorder %s18, 0
    %p175 = por %p173, %p174
    %p176 = scmp.ne.s32.totalorder %s162, %s163
    %p177 = scmp.eq.s32.totalorder %s19, 1
    %p178 = por %p176, %p177
    %p180 = scmp.ne.s32.totalorder %s163, %s179
    %p181 = scmp.eq.s32.totalorder %s19, 0
    %p182 = por %p180, %p181
    %p183 = scmp.le.s32.totalorder 1, %s13
    %p184 = scmp.lt.s32.totalorder %s13, 3
    %p185 = pnand %p183, %p184
    %p186 = pneg %p185
    // Predicated region
    $region9: #{bottleneck_forward.5} parent=5 // pred_check
      _
    $region10: #{bottleneck_forward.5} parent=5 // pred_check_branch
      %188 = sbr.rel (%p185) target = $region12
    $region11: #{bottleneck_forward.5} parent=5 // pred_region
      %s189 = ssub.s32 %s13, 1
      // Predicated region
      $region13: #{bottleneck_forward.5} parent=11 // pred_check
        %p190 = pneg %p60
      $region14: #{bottleneck_forward.5} parent=11 // pred_check_branch
        %192 = sbr.rel (%p190) target = $region16
      $region15: #{bottleneck_forward.5} parent=11 // pred_region
        _
      $region16: #{bottleneck_forward.5} parent=11 // pred_fallthru
        _
      // Predicated region
      $region17: #{bottleneck_forward.5} parent=11 // pred_check
        %p193 = pneg %p81
      $region18: #{bottleneck_forward.5} parent=11 // pred_check_branch
        %195 = sbr.rel (%p193) target = $region20
      $region19: #{bottleneck_forward.5} parent=11 // pred_region
        _
      $region20: #{bottleneck_forward.5} parent=11 // pred_fallthru
        _
      // Predicated region
      $region21: #{bottleneck_forward.5} parent=11 // pred_check
        %p196 = pneg %p102
      $region22: #{bottleneck_forward.5} parent=11 // pred_check_branch
        %198 = sbr.rel (%p196) target = $region24
      $region23: #{bottleneck_forward.5} parent=11 // pred_region
        _
      $region24: #{bottleneck_forward.5} parent=11 // pred_fallthru
        _
      // Predicated region
      $region25: #{bottleneck_forward.5} parent=11 // pred_check
        %p199 = pneg %p123
      $region26: #{bottleneck_forward.5} parent=11 // pred_check_branch
        %201 = sbr.rel (%p199) target = $region28
      $region27: #{bottleneck_forward.5} parent=11 // pred_region
        _
      $region28: #{bottleneck_forward.5} parent=11 // pred_fallthru
        _
    $region12: #{bottleneck_forward.5} parent=5 // pred_fallthru
      _
    %p202 = scmp.lt.s32.totalorder %s13, 2
    // Predicated region
    $region29: #{bottleneck_forward.5} parent=5 // pred_check
      %p203 = pneg %p202
    $region30: #{bottleneck_forward.5} parent=5 // pred_check_branch
      %205 = sbr.rel (%p203) target = $region32
    $region31: #{bottleneck_forward.5} parent=5 // pred_region
      // Predicated region
      $region33: #{bottleneck_forward.5} parent=31 // pred_check
        %p206 = pneg %p33
      $region34: #{bottleneck_forward.5} parent=31 // pred_check_branch
        %208 = sbr.rel (%p206) target = $region36
      $region35: #{bottleneck_forward.5} parent=31 // pred_region
        %p209 = scmp.lt.s32.totalorder %s13, 1
        %s210 = scalar_select %p209, %s13, 1
        %s211 = smul.addr %s210, 32
        %s212 = smul.addr %s211, 8
        %s213 = scalar_lea.vmem %s0, %s212
      $region36: #{bottleneck_forward.5} parent=31 // pred_fallthru
        _
    $region32: #{bottleneck_forward.5} parent=5 // pred_fallthru
      _
    %p214 = scmp.le.s32.totalorder 1, %s13
    %p215 = scmp.lt.s32.totalorder %s13, 3
    %p216 = pnand %p214, %p215
    %p217 = pneg %p216
    // Predicated region
    $region37: #{bottleneck_forward.5} parent=5 // pred_check
      _
    $region38: #{bottleneck_forward.5} parent=5 // pred_check_branch
      %219 = sbr.rel (%p216) target = $region40
    $region39: #{bottleneck_forward.5} parent=5 // pred_region
      %s220 = ssub.s32 %s13, 1
      %p221 = scmp.lt.s32.totalorder %s18, 1
      %s222 = scalar_select %p221, %s18, 1
      %s223 = smul.addr %s222, 32
      %s224 = smul.addr %s223, 8
      %s225 = scalar_lea.vmem %s0, %s224
      %p226 = pneg %p39
      %p227 = pneg %p36
      %p228 = pneg %p60
      %p229 = pneg %p57
      %p230 = pneg %p81
      %p231 = pneg %p78
      %p232 = pneg %p102
      %p233 = pneg %p99
      %p234 = pneg %p123
      %p235 = pneg %p120
      %p236 = pneg %p149
      %p237 = pneg %p146
      %s238 = smul.u32 32, %s18
      %p239 = scmp.lt.s32.totalorder %s238, 63
      %s240 = scalar_select %p239, %s238, 63
      %s241 = smul.addr %s240, 8
      %s242 = scalar_lea.vmem %s5, %s241
      %p243 = pneg %p175
      %p244 = pneg %p172
      %p245 = scmp.lt.s32.totalorder %s18, 1
      %s246 = scalar_select %p245, %s18, 1
      %s247 = smul.addr %s246, 8
      %s248 = scalar_lea.vmem %s6, %s247
      %p249 = scmp.lt.s32.totalorder %s18, 1
      %s250 = scalar_select %p249, %s18, 1
      %s251 = smul.addr %s250, 32
      %s252 = smul.addr %s251, 8
      %s253 = scalar_lea.vmem %s0, %s252
      %s254 = smul.u32 32, %s18
      %p255 = scmp.lt.s32.totalorder %s254, 63
      %s256 = scalar_select %p255, %s254, 63
      %s257 = smul.addr %s256, 8
      %s258 = scalar_lea.vmem %s5, %s257
      %s259 = smul.u32 32, %s18
      %p260 = scmp.lt.s32.totalorder %s18, 1
      %s261 = scalar_select %p260, %s18, 1
      %s262 = smul.addr %s261, 8
      %s263 = scalar_lea.vmem %s6, %s262
      %264 = vst [vmem:[#allocation2] sm:$0xff] 0.0
      %265 = vst [vmem:[#allocation2 + $0x8] sm:$0xff] 0.0
      %266 = vst [vmem:[#allocation2 + $0x10] sm:$0x3] 0.0
      %267 = vst [vmem:[#allocation2 + $0x18] sm:$0xff] 0.0
      %268 = vst [vmem:[#allocation2 + $0x20] sm:$0xff] 0.0
      %269 = vst [vmem:[#allocation2 + $0x28] sm:$0x3] 0.0
      %270 = vst [vmem:[#allocation2 + $0x30] sm:$0xff] 0.0
      %271 = vst [vmem:[#allocation2 + $0x38] sm:$0xff] 0.0
      %272 = vst [vmem:[#allocation2 + $0x40] sm:$0x3] 0.0
      %273 = vst [vmem:[#allocation2 + $0x48] sm:$0xff] 0.0
      %274 = vst [vmem:[#allocation2 + $0x50] sm:$0xff] 0.0
      %275 = vst [vmem:[#allocation2 + $0x58] sm:$0x3] 0.0
      %276 = vst [vmem:[#allocation2 + $0x60] sm:$0xff] 0.0
      %277 = vst [vmem:[#allocation2 + $0x68] sm:$0xff] 0.0
      %278 = vst [vmem:[#allocation2 + $0x70] sm:$0x3] 0.0
      %279 = vst [vmem:[#allocation2 + $0x78] sm:$0xff] 0.0
      %280 = vst [vmem:[#allocation2 + $0x80] sm:$0xff] 0.0
      %281 = vst [vmem:[#allocation2 + $0x88] sm:$0x3] 0.0
      %282 = vst [vmem:[#allocation2 + $0x90] sm:$0xff] 0.0
      %283 = vst [vmem:[#allocation2 + $0x98] sm:$0xff] 0.0
      %284 = vst [vmem:[#allocation2 + $0xa0] sm:$0x3] 0.0
      %285 = vst [vmem:[#allocation2 + $0xa8] sm:$0xff] 0.0
      %286 = vst [vmem:[#allocation2 + $0xb0] sm:$0xff] 0.0
      %287 = vst [vmem:[#allocation2 + $0xb8] sm:$0x3] 0.0
      %288 = vst [vmem:[#allocation2 + $0xc0] sm:$0xff] 0.0
      %289 = vst [vmem:[#allocation2 + $0xc8] sm:$0xff] 0.0
      %290 = vst [vmem:[#allocation2 + $0xd0] sm:$0x3] 0.0
      %291 = vst [vmem:[#allocation2 + $0xd8] sm:$0xff] 0.0
      %292 = vst [vmem:[#allocation2 + $0xe0] sm:$0xff] 0.0
      %293 = vst [vmem:[#allocation2 + $0xe8] sm:$0x3] 0.0
      %294 = vst [vmem:[#allocation2 + $0xf0] sm:$0xff] 0.0
      %295 = vst [vmem:[#allocation2 + $0xf8] sm:$0xff] 0.0
      %296 = vst [vmem:[#allocation2 + $0x100] sm:$0x3] 0.0
      %297 = vst [vmem:[#allocation2 + $0x108] sm:$0xff] 0.0
      %298 = vst [vmem:[#allocation2 + $0x110] sm:$0xff] 0.0
      %299 = vst [vmem:[#allocation2 + $0x118] sm:$0x3] 0.0
      %300 = vst [vmem:[#allocation2 + $0x120] sm:$0xff] 0.0
      %301 = vst [vmem:[#allocation2 + $0x128] sm:$0xff] 0.0
      %302 = vst [vmem:[#allocation2 + $0x130] sm:$0x3] 0.0
      %303 = vst [vmem:[#allocation2 + $0x138] sm:$0xff] 0.0
      %304 = vst [vmem:[#allocation2 + $0x140] sm:$0xff] 0.0
      %305 = vst [vmem:[#allocation2 + $0x148] sm:$0x3] 0.0
      %306 = vst [vmem:[#allocation2 + $0x150] sm:$0xff] 0.0
      %307 = vst [vmem:[#allocation2 + $0x158] sm:$0xff] 0.0
      %308 = vst [vmem:[#allocation2 + $0x160] sm:$0x3] 0.0
      %309 = vst [vmem:[#allocation2 + $0x168] sm:$0xff] 0.0
      %310 = vst [vmem:[#allocation2 + $0x170] sm:$0xff] 0.0
      %311 = vst [vmem:[#allocation2 + $0x178] sm:$0x3] 0.0
      %312 = vst [vmem:[#allocation2 + $0x180] sm:$0xff] 0.0
      %313 = vst [vmem:[#allocation2 + $0x188] sm:$0xff] 0.0
      %314 = vst [vmem:[#allocation2 + $0x190] sm:$0x3] 0.0
      %315 = vst [vmem:[#allocation2 + $0x198] sm:$0xff] 0.0
      %316 = vst [vmem:[#allocation2 + $0x1a0] sm:$0xff] 0.0
      %317 = vst [vmem:[#allocation2 + $0x1a8] sm:$0x3] 0.0
      %v318 = vld [vmem:[%s1] sm:$0x1]
      %v319 = vmul.f32 %v318, 0.001953125
      %v320 = vld [vmem:[%s1 + $0x1] sm:$0x1]
      %v321 = vmul.f32 %v320, 0.001953125
      %v322 = vmul.f32 %v319, %v319
      %v323 = vsub.f32 %v321, %v322
      %v324 = vadd.f32 %v323, 1e-05
      %v325 = vrsqrt.pop %v324
      %v326 = vld [vmem:[%s2] sm:$0x1]
      %v327 = vmul.f32 %v325, %v326
      %v328 = vld [vmem:[%s3] sm:$0x1]
      %v329 = vmul.f32 %v319, %v327
      %v330 = vsub.f32 %v328, %v329
      %v331 = vld [vmem:[%s253] sm:$0xff]
      %v332 = vld [vmem:[%s253 + $0x8] sm:$0xff]
      %v333 = vld [vmem:[%s253 + $0x10] sm:$0xff]
      %v334 = vld [vmem:[%s253 + $0x18] sm:$0xff]
      %v335 = vld [vmem:[%s253 + $0x20] sm:$0xff]
      %v336 = vld [vmem:[%s253 + $0x28] sm:$0xff]
      %v337 = vld [vmem:[%s253 + $0x30] sm:$0xff]
      %v338 = vld [vmem:[%s253 + $0x38] sm:$0xff]
      %v339 = vld [vmem:[%s253 + $0x40] sm:$0xff]
      %v340 = vld [vmem:[%s253 + $0x48] sm:$0xff]
      %v341 = vld [vmem:[%s253 + $0x50] sm:$0xff]
      %v342 = vld [vmem:[%s253 + $0x58] sm:$0xff]
      %v343 = vld [vmem:[%s253 + $0x60] sm:$0xff]
      %v344 = vld [vmem:[%s253 + $0x68] sm:$0xff]
      %v345 = vld [vmem:[%s253 + $0x70] sm:$0xff]
      %v346 = vld [vmem:[%s253 + $0x78] sm:$0xff]
      %v347 = vld [vmem:[%s253 + $0x80] sm:$0xff]
      %v348 = vld [vmem:[%s253 + $0x88] sm:$0xff]
      %v349 = vld [vmem:[%s253 + $0x90] sm:$0xff]
      %v350 = vld [vmem:[%s253 + $0x98] sm:$0xff]
      %v351 = vld [vmem:[%s253 + $0xa0] sm:$0xff]
      %v352 = vld [vmem:[%s253 + $0xa8] sm:$0xff]
      %v353 = vld [vmem:[%s253 + $0xb0] sm:$0xff]
      %v354 = vld [vmem:[%s253 + $0xb8] sm:$0xff]
      %v355 = vld [vmem:[%s253 + $0xc0] sm:$0xff]
      %v356 = vld [vmem:[%s253 + $0xc8] sm:$0xff]
      %v357 = vld [vmem:[%s253 + $0xd0] sm:$0xff]
      %v358 = vld [vmem:[%s253 + $0xd8] sm:$0xff]
      %v359 = vld [vmem:[%s253 + $0xe0] sm:$0xff]
      %v360 = vld [vmem:[%s253 + $0xe8] sm:$0xff]
      %v361 = vld [vmem:[%s253 + $0xf0] sm:$0xff]
      %v362 = vld [vmem:[%s253 + $0xf8] sm:$0xff]
      %v363 = vlaneseq
      %v364 = vshrl.u32 %v363, 7
      %v365 = vsub.s32 0, %v364
      %v366 = vrot.slane %v327, %v365
      %v367 = vmul.f32 %v331, %v366
      %v368 = vmul.f32 %v332, %v366
      %v369 = vmul.f32 %v333, %v366
      %v370 = vmul.f32 %v334, %v366
      %v371 = vmul.f32 %v335, %v366
      %v372 = vmul.f32 %v336, %v366
      %v373 = vmul.f32 %v337, %v366
      %v374 = vmul.f32 %v338, %v366
      %v375 = vmul.f32 %v339, %v366
      %v376 = vmul.f32 %v340, %v366
      %v377 = vmul.f32 %v341, %v366
      %v378 = vmul.f32 %v342, %v366
      %v379 = vmul.f32 %v343, %v366
      %v380 = vmul.f32 %v344, %v366
      %v381 = vmul.f32 %v345, %v366
      %v382 = vmul.f32 %v346, %v366
      %v383 = vmul.f32 %v347, %v366
      %v384 = vmul.f32 %v348, %v366
      %v385 = vmul.f32 %v349, %v366
      %v386 = vmul.f32 %v350, %v366
      %v387 = vmul.f32 %v351, %v366
      %v388 = vmul.f32 %v352, %v366
      %v389 = vmul.f32 %v353, %v366
      %v390 = vmul.f32 %v354, %v366
      %v391 = vmul.f32 %v355, %v366
      %v392 = vmul.f32 %v356, %v366
      %v393 = vmul.f32 %v357, %v366
      %v394 = vmul.f32 %v358, %v366
      %v395 = vmul.f32 %v359, %v366
      %v396 = vmul.f32 %v360, %v366
      %v397 = vmul.f32 %v361, %v366
      %v398 = vmul.f32 %v362, %v366
      %v400 = vlaneseq
      %v401 = vshrl.u32 %v400, 7
      %v402 = vsub.s32 0, %v401
      %v403 = vrot.slane %v330, %v402
      %v405 = vadd.f32 %v367, %v403
      %v406 = vadd.f32 %v368, %v403
      %v407 = vadd.f32 %v369, %v403
      %v408 = vadd.f32 %v370, %v403
      %v409 = vadd.f32 %v371, %v403
      %v410 = vadd.f32 %v372, %v403
      %v411 = vadd.f32 %v373, %v403
      %v412 = vadd.f32 %v374, %v403
      %v413 = vadd.f32 %v375, %v403
      %v414 = vadd.f32 %v376, %v403
      %v415 = vadd.f32 %v377, %v403
      %v416 = vadd.f32 %v378, %v403
      %v417 = vadd.f32 %v379, %v403
      %v418 = vadd.f32 %v380, %v403
      %v419 = vadd.f32 %v381, %v403
      %v420 = vadd.f32 %v382, %v403
      %v421 = vadd.f32 %v383, %v403
      %v422 = vadd.f32 %v384, %v403
      %v423 = vadd.f32 %v385, %v403
      %v424 = vadd.f32 %v386, %v403
      %v425 = vadd.f32 %v387, %v403
      %v426 = vadd.f32 %v388, %v403
      %v427 = vadd.f32 %v389, %v403
      %v428 = vadd.f32 %v390, %v403
      %v429 = vadd.f32 %v391, %v403
      %v430 = vadd.f32 %v392, %v403
      %v431 = vadd.f32 %v393, %v403
      %v432 = vadd.f32 %v394, %v403
      %v433 = vadd.f32 %v395, %v403
      %v434 = vadd.f32 %v396, %v403
      %v435 = vadd.f32 %v397, %v403
      %v436 = vadd.f32 %v398, %v403
      %v437 = vmax.f32 %v405, 0.0
      %v438 = vmax.f32 %v406, 0.0
      %v439 = vmax.f32 %v407, 0.0
      %v440 = vmax.f32 %v408, 0.0
      %v441 = vmax.f32 %v409, 0.0
      %v442 = vmax.f32 %v410, 0.0
      %v443 = vmax.f32 %v411, 0.0
      %v444 = vmax.f32 %v412, 0.0
      %v445 = vmax.f32 %v413, 0.0
      %v446 = vmax.f32 %v414, 0.0
      %v447 = vmax.f32 %v415, 0.0
      %v448 = vmax.f32 %v416, 0.0
      %v449 = vmax.f32 %v417, 0.0
      %v450 = vmax.f32 %v418, 0.0
      %v451 = vmax.f32 %v419, 0.0
      %v452 = vmax.f32 %v420, 0.0
      %v453 = vmax.f32 %v421, 0.0
      %v454 = vmax.f32 %v422, 0.0
      %v455 = vmax.f32 %v423, 0.0
      %v456 = vmax.f32 %v424, 0.0
      %v457 = vmax.f32 %v425, 0.0
      %v458 = vmax.f32 %v426, 0.0
      %v459 = vmax.f32 %v427, 0.0
      %v460 = vmax.f32 %v428, 0.0
      %v461 = vmax.f32 %v429, 0.0
      %v462 = vmax.f32 %v430, 0.0
      %v463 = vmax.f32 %v431, 0.0
      %v464 = vmax.f32 %v432, 0.0
      %v465 = vmax.f32 %v433, 0.0
      %v466 = vmax.f32 %v434, 0.0
      %v467 = vmax.f32 %v435, 0.0
      %v468 = vmax.f32 %v436, 0.0
      %s469 = scalar_lea.vmem [#allocation2], 24
      %470 = vst [vmem:[%s469 + $0x1] sm:$0xff] %v437
      %471 = vst [vmem:[%s469 + $0x9] sm:$0xff] %v438
      %472 = vst [vmem:[%s469 + $0x19] sm:$0xff] %v439
      %473 = vst [vmem:[%s469 + $0x21] sm:$0xff] %v440
      %474 = vst [vmem:[%s469 + $0x31] sm:$0xff] %v441
      %475 = vst [vmem:[%s469 + $0x39] sm:$0xff] %v442
      %476 = vst [vmem:[%s469 + $0x49] sm:$0xff] %v443
      %477 = vst [vmem:[%s469 + $0x51] sm:$0xff] %v444
      %478 = vst [vmem:[%s469 + $0x61] sm:$0xff] %v445
      %479 = vst [vmem:[%s469 + $0x69] sm:$0xff] %v446
      %480 = vst [vmem:[%s469 + $0x79] sm:$0xff] %v447
      %481 = vst [vmem:[%s469 + $0x81] sm:$0xff] %v448
      %482 = vst [vmem:[%s469 + $0x91] sm:$0xff] %v449
      %483 = vst [vmem:[%s469 + $0x99] sm:$0xff] %v450
      %484 = vst [vmem:[%s469 + $0xa9] sm:$0xff] %v451
      %485 = vst [vmem:[%s469 + $0xb1] sm:$0xff] %v452
      %486 = vst [vmem:[%s469 + $0xc1] sm:$0xff] %v453
      %487 = vst [vmem:[%s469 + $0xc9] sm:$0xff] %v454
      %488 = vst [vmem:[%s469 + $0xd9] sm:$0xff] %v455
      %489 = vst [vmem:[%s469 + $0xe1] sm:$0xff] %v456
      %490 = vst [vmem:[%s469 + $0xf1] sm:$0xff] %v457
      %491 = vst [vmem:[%s469 + $0xf9] sm:$0xff] %v458
      %492 = vst [vmem:[%s469 + $0x109] sm:$0xff] %v459
      %493 = vst [vmem:[%s469 + $0x111] sm:$0xff] %v460
      %494 = vst [vmem:[%s469 + $0x121] sm:$0xff] %v461
      %495 = vst [vmem:[%s469 + $0x129] sm:$0xff] %v462
      %496 = vst [vmem:[%s469 + $0x139] sm:$0xff] %v463
      %497 = vst [vmem:[%s469 + $0x141] sm:$0xff] %v464
      %498 = vst [vmem:[%s469 + $0x151] sm:$0xff] %v465
      %499 = vst [vmem:[%s469 + $0x159] sm:$0xff] %v466
      %500 = vst [vmem:[%s469 + $0x169] sm:$0xff] %v467
      %501 = vst [vmem:[%s469 + $0x171] sm:$0xff] %v468
      %v502 = vld [vmem:[#allocation2] sm:$0xff]
      %v503 = vld [vmem:[#allocation2 + $0x8] sm:$0xff]
      %v504 = vld [vmem:[#allocation2 + $0x18] sm:$0xff]
      %v505 = vld [vmem:[#allocation2 + $0x20] sm:$0xff]
      %v506 = vld [vmem:[#allocation2 + $0x30] sm:$0xff]
      %v507 = vld [vmem:[#allocation2 + $0x38] sm:$0xff]
      %v508 = vld [vmem:[#allocation2 + $0x48] sm:$0xff]
      %v509 = vld [vmem:[#allocation2 + $0x50] sm:$0xff]
      %v510 = vld [vmem:[#allocation2 + $0x60] sm:$0xff]
      %v511 = vld [vmem:[#allocation2 + $0x68] sm:$0xff]
      %v512 = vld [vmem:[#allocation2 + $0x78] sm:$0xff]
      %v513 = vld [vmem:[#allocation2 + $0x80] sm:$0xff]
      %v514 = vld [vmem:[#allocation2 + $0x90] sm:$0xff]
      %v515 = vld [vmem:[#allocation2 + $0x98] sm:$0xff]
      %v516 = vld [vmem:[#allocation2 + $0xa8] sm:$0xff]
      %v517 = vld [vmem:[#allocation2 + $0xb0] sm:$0xff]
      %v518 = vld [vmem:[#allocation2 + $0xc0] sm:$0xff]
      %v519 = vld [vmem:[#allocation2 + $0xc8] sm:$0xff]
      %v520 = vld [vmem:[#allocation2 + $0xd8] sm:$0xff]
      %v521 = vld [vmem:[#allocation2 + $0xe0] sm:$0xff]
      %v522 = vld [vmem:[#allocation2 + $0xf0] sm:$0xff]
      %v523 = vld [vmem:[#allocation2 + $0xf8] sm:$0xff]
      %v524 = vld [vmem:[#allocation2 + $0x108] sm:$0xff]
      %v525 = vld [vmem:[#allocation2 + $0x110] sm:$0xff]
      %v526 = vld [vmem:[#allocation2 + $0x120] sm:$0xff]
      %v527 = vld [vmem:[#allocation2 + $0x128] sm:$0xff]
      %v528 = vld [vmem:[#allocation2 + $0x138] sm:$0xff]
      %v529 = vld [vmem:[#allocation2 + $0x140] sm:$0xff]
      %v530 = vld [vmem:[#allocation2 + $0x150] sm:$0xff]
      %v531 = vld [vmem:[#allocation2 + $0x158] sm:$0xff]
      %v532 = vld [vmem:[#allocation2 + $0x168] sm:$0xff]
      %v533 = vld [vmem:[#allocation2 + $0x170] sm:$0xff]
      %534 = vst [vmem:[#allocation3] sm:$0xff] %v502
      %535 = vst [vmem:[#allocation3 + $0x48] sm:$0xff] %v503
      %536 = vst [vmem:[#allocation3 + $0x90] sm:$0xff] %v504
      %537 = vst [vmem:[#allocation3 + $0xd8] sm:$0xff] %v505
      %538 = vst [vmem:[#allocation3 + $0x120] sm:$0xff] %v506
      %539 = vst [vmem:[#allocation3 + $0x168] sm:$0xff] %v507
      %540 = vst [vmem:[#allocation3 + $0x1b0] sm:$0xff] %v508
      %541 = vst [vmem:[#allocation3 + $0x1f8] sm:$0xff] %v509
      %542 = vst [vmem:[#allocation3 + $0x240] sm:$0xff] %v510
      %543 = vst [vmem:[#allocation3 + $0x288] sm:$0xff] %v511
      %544 = vst [vmem:[#allocation3 + $0x2d0] sm:$0xff] %v512
      %545 = vst [vmem:[#allocation3 + $0x318] sm:$0xff] %v513
      %546 = vst [vmem:[#allocation3 + $0x360] sm:$0xff] %v514
      %547 = vst [vmem:[#allocation3 + $0x3a8] sm:$0xff] %v515
      %548 = vst [vmem:[#allocation3 + $0x3f0] sm:$0xff] %v516
      %549 = vst [vmem:[#allocation3 + $0x438] sm:$0xff] %v517
      %550 = vst [vmem:[#allocation3 + $0x480] sm:$0xff] %v518
      %551 = vst [vmem:[#allocation3 + $0x4c8] sm:$0xff] %v519
      %552 = vst [vmem:[#allocation3 + $0x510] sm:$0xff] %v520
      %553 = vst [vmem:[#allocation3 + $0x558] sm:$0xff] %v521
      %554 = vst [vmem:[#allocation3 + $0x5a0] sm:$0xff] %v522
      %555 = vst [vmem:[#allocation3 + $0x5e8] sm:$0xff] %v523
      %556 = vst [vmem:[#allocation3 + $0x630] sm:$0xff] %v524
      %557 = vst [vmem:[#allocation3 + $0x678] sm:$0xff] %v525
      %558 = vst [vmem:[#allocation3 + $0x6c0] sm:$0xff] %v526
      %559 = vst [vmem:[#allocation3 + $0x708] sm:$0xff] %v527
      %560 = vst [vmem:[#allocation3 + $0x750] sm:$0xff] %v528
      %561 = vst [vmem:[#allocation3 + $0x798] sm:$0xff] %v529
      %562 = vst [vmem:[#allocation3 + $0x7e0] sm:$0xff] %v530
      %563 = vst [vmem:[#allocation3 + $0x828] sm:$0xff] %v531
      %564 = vst [vmem:[#allocation3 + $0x870] sm:$0xff] %v532
      %565 = vst [vmem:[#allocation3 + $0x8b8] sm:$0xff] %v533
      %v566 = vld [vmem:[#allocation2 + $0x1] sm:$0xff]
      %v567 = vld [vmem:[#allocation2 + $0x9] sm:$0xff]
      %v568 = vld [vmem:[#allocation2 + $0x19] sm:$0xff]
      %v569 = vld [vmem:[#allocation2 + $0x21] sm:$0xff]
      %v570 = vld [vmem:[#allocation2 + $0x31] sm:$0xff]
      %v571 = vld [vmem:[#allocation2 + $0x39] sm:$0xff]
      %v572 = vld [vmem:[#allocation2 + $0x49] sm:$0xff]
      %v573 = vld [vmem:[#allocation2 + $0x51] sm:$0xff]
      %v574 = vld [vmem:[#allocation2 + $0x61] sm:$0xff]
      %v575 = vld [vmem:[#allocation2 + $0x69] sm:$0xff]
      %v576 = vld [vmem:[#allocation2 + $0x79] sm:$0xff]
      %v577 = vld [vmem:[#allocation2 + $0x81] sm:$0xff]
      %v578 = vld [vmem:[#allocation2 + $0x91] sm:$0xff]
      %v579 = vld [vmem:[#allocation2 + $0x99] sm:$0xff]
      %v580 = vld [vmem:[#allocation2 + $0xa9] sm:$0xff]
      %v581 = vld [vmem:[#allocation2 + $0xb1] sm:$0xff]
      %v582 = vld [vmem:[#allocation2 + $0xc1] sm:$0xff]
      %v583 = vld [vmem:[#allocation2 + $0xc9] sm:$0xff]
      %v584 = vld [vmem:[#allocation2 + $0xd9] sm:$0xff]
      %v585 = vld [vmem:[#allocation2 + $0xe1] sm:$0xff]
      %v586 = vld [vmem:[#allocation2 + $0xf1] sm:$0xff]
      %v587 = vld [vmem:[#allocation2 + $0xf9] sm:$0xff]
      %v588 = vld [vmem:[#allocation2 + $0x109] sm:$0xff]
      %v589 = vld [vmem:[#allocation2 + $0x111] sm:$0xff]
      %v590 = vld [vmem:[#allocation2 + $0x121] sm:$0xff]
      %v591 = vld [vmem:[#allocation2 + $0x129] sm:$0xff]
      %v592 = vld [vmem:[#allocation2 + $0x139] sm:$0xff]
      %v593 = vld [vmem:[#allocation2 + $0x141] sm:$0xff]
      %v594 = vld [vmem:[#allocation2 + $0x151] sm:$0xff]
      %v595 = vld [vmem:[#allocation2 + $0x159] sm:$0xff]
      %v596 = vld [vmem:[#allocation2 + $0x169] sm:$0xff]
      %v597 = vld [vmem:[#allocation2 + $0x171] sm:$0xff]
      %598 = vst [vmem:[#allocation3 + $0x8] sm:$0xff] %v566
      %599 = vst [vmem:[#allocation3 + $0x50] sm:$0xff] %v567
      %600 = vst [vmem:[#allocation3 + $0x98] sm:$0xff] %v568
      %601 = vst [vmem:[#allocation3 + $0xe0] sm:$0xff] %v569
      %602 = vst [vmem:[#allocation3 + $0x128] sm:$0xff] %v570
      %603 = vst [vmem:[#allocation3 + $0x170] sm:$0xff] %v571
      %604 = vst [vmem:[#allocation3 + $0x1b8] sm:$0xff] %v572
      %605 = vst [vmem:[#allocation3 + $0x200] sm:$0xff] %v573
      %606 = vst [vmem:[#allocation3 + $0x248] sm:$0xff] %v574
      %607 = vst [vmem:[#allocation3 + $0x290] sm:$0xff] %v575
      %608 = vst [vmem:[#allocation3 + $0x2d8] sm:$0xff] %v576
      %609 = vst [vmem:[#allocation3 + $0x320] sm:$0xff] %v577
      %610 = vst [vmem:[#allocation3 + $0x368] sm:$0xff] %v578
      %611 = vst [vmem:[#allocation3 + $0x3b0] sm:$0xff] %v579
      %612 = vst [vmem:[#allocation3 + $0x3f8] sm:$0xff] %v580
      %613 = vst [vmem:[#allocation3 + $0x440] sm:$0xff] %v581
      %614 = vst [vmem:[#allocation3 + $0x488] sm:$0xff] %v582
      %615 = vst [vmem:[#allocation3 + $0x4d0] sm:$0xff] %v583
      %616 = vst [vmem:[#allocation3 + $0x518] sm:$0xff] %v584
      %617 = vst [vmem:[#allocation3 + $0x560] sm:$0xff] %v585
      %618 = vst [vmem:[#allocation3 + $0x5a8] sm:$0xff] %v586
      %619 = vst [vmem:[#allocation3 + $0x5f0] sm:$0xff] %v587
      %620 = vst [vmem:[#allocation3 + $0x638] sm:$0xff] %v588
      %621 = vst [vmem:[#allocation3 + $0x680] sm:$0xff] %v589
      %622 = vst [vmem:[#allocation3 + $0x6c8] sm:$0xff] %v590
      %623 = vst [vmem:[#allocation3 + $0x710] sm:$0xff] %v591
      %624 = vst [vmem:[#allocation3 + $0x758] sm:$0xff] %v592
      %625 = vst [vmem:[#allocation3 + $0x7a0] sm:$0xff] %v593
      %626 = vst [vmem:[#allocation3 + $0x7e8] sm:$0xff] %v594
      %627 = vst [vmem:[#allocation3 + $0x830] sm:$0xff] %v595
      %628 = vst [vmem:[#allocation3 + $0x878] sm:$0xff] %v596
      %629 = vst [vmem:[#allocation3 + $0x8c0] sm:$0xff] %v597
      %v630 = vld [vmem:[#allocation2 + $0x2] sm:$0xff]
      %v631 = vld [vmem:[#allocation2 + $0xa] sm:$0xff]
      %v632 = vld [vmem:[#allocation2 + $0x1a] sm:$0xff]
      %v633 = vld [vmem:[#allocation2 + $0x22] sm:$0xff]
      %v634 = vld [vmem:[#allocation2 + $0x32] sm:$0xff]
      %v635 = vld [vmem:[#allocation2 + $0x3a] sm:$0xff]
      %v636 = vld [vmem:[#allocation2 + $0x4a] sm:$0xff]
      %v637 = vld [vmem:[#allocation2 + $0x52] sm:$0xff]
      %v638 = vld [vmem:[#allocation2 + $0x62] sm:$0xff]
      %v639 = vld [vmem:[#allocation2 + $0x6a] sm:$0xff]
      %v640 = vld [vmem:[#allocation2 + $0x7a] sm:$0xff]
      %v641 = vld [vmem:[#allocation2 + $0x82] sm:$0xff]
      %v642 = vld [vmem:[#allocation2 + $0x92] sm:$0xff]
      %v643 = vld [vmem:[#allocation2 + $0x9a] sm:$0xff]
      %v644 = vld [vmem:[#allocation2 + $0xaa] sm:$0xff]
      %v645 = vld [vmem:[#allocation2 + $0xb2] sm:$0xff]
      %v646 = vld [vmem:[#allocation2 + $0xc2] sm:$0xff]
      %v647 = vld [vmem:[#allocation2 + $0xca] sm:$0xff]
      %v648 = vld [vmem:[#allocation2 + $0xda] sm:$0xff]
      %v649 = vld [vmem:[#allocation2 + $0xe2] sm:$0xff]
      %v650 = vld [vmem:[#allocation2 + $0xf2] sm:$0xff]
      %v651 = vld [vmem:[#allocation2 + $0xfa] sm:$0xff]
      %v652 = vld [vmem:[#allocation2 + $0x10a] sm:$0xff]
      %v653 = vld [vmem:[#allocation2 + $0x112] sm:$0xff]
      %v654 = vld [vmem:[#allocation2 + $0x122] sm:$0xff]
      %v655 = vld [vmem:[#allocation2 + $0x12a] sm:$0xff]
      %v656 = vld [vmem:[#allocation2 + $0x13a] sm:$0xff]
      %v657 = vld [vmem:[#allocation2 + $0x142] sm:$0xff]
      %v658 = vld [vmem:[#allocation2 + $0x152] sm:$0xff]
      %v659 = vld [vmem:[#allocation2 + $0x15a] sm:$0xff]
      %v660 = vld [vmem:[#allocation2 + $0x16a] sm:$0xff]
      %v661 = vld [vmem:[#allocation2 + $0x172] sm:$0xff]
      %662 = vst [vmem:[#allocation3 + $0x10] sm:$0xff] %v630
      %663 = vst [vmem:[#allocation3 + $0x58] sm:$0xff] %v631
      %664 = vst [vmem:[#allocation3 + $0xa0] sm:$0xff] %v632
      %665 = vst [vmem:[#allocation3 + $0xe8] sm:$0xff] %v633
      %666 = vst [vmem:[#allocation3 + $0x130] sm:$0xff] %v634
      %667 = vst [vmem:[#allocation3 + $0x178] sm:$0xff] %v635
      %668 = vst [vmem:[#allocation3 + $0x1c0] sm:$0xff] %v636
      %669 = vst [vmem:[#allocation3 + $0x208] sm:$0xff] %v637
      %670 = vst [vmem:[#allocation3 + $0x250] sm:$0xff] %v638
      %671 = vst [vmem:[#allocation3 + $0x298] sm:$0xff] %v639
      %672 = vst [vmem:[#allocation3 + $0x2e0] sm:$0xff] %v640
      %673 = vst [vmem:[#allocation3 + $0x328] sm:$0xff] %v641
      %674 = vst [vmem:[#allocation3 + $0x370] sm:$0xff] %v642
      %675 = vst [vmem:[#allocation3 + $0x3b8] sm:$0xff] %v643
      %676 = vst [vmem:[#allocation3 + $0x400] sm:$0xff] %v644
      %677 = vst [vmem:[#allocation3 + $0x448] sm:$0xff] %v645
      %678 = vst [vmem:[#allocation3 + $0x490] sm:$0xff] %v646
      %679 = vst [vmem:[#allocation3 + $0x4d8] sm:$0xff] %v647
      %680 = vst [vmem:[#allocation3 + $0x520] sm:$0xff] %v648
      %681 = vst [vmem:[#allocation3 + $0x568] sm:$0xff] %v649
      %682 = vst [vmem:[#allocation3 + $0x5b0] sm:$0xff] %v650
      %683 = vst [vmem:[#allocation3 + $0x5f8] sm:$0xff] %v651
      %684 = vst [vmem:[#allocation3 + $0x640] sm:$0xff] %v652
      %685 = vst [vmem:[#allocation3 + $0x688] sm:$0xff] %v653
      %686 = vst [vmem:[#allocation3 + $0x6d0] sm:$0xff] %v654
      %687 = vst [vmem:[#allocation3 + $0x718] sm:$0xff] %v655
      %688 = vst [vmem:[#allocation3 + $0x760] sm:$0xff] %v656
      %689 = vst [vmem:[#allocation3 + $0x7a8] sm:$0xff] %v657
      %690 = vst [vmem:[#allocation3 + $0x7f0] sm:$0xff] %v658
      %691 = vst [vmem:[#allocation3 + $0x838] sm:$0xff] %v659
      %692 = vst [vmem:[#allocation3 + $0x880] sm:$0xff] %v660
      %693 = vst [vmem:[#allocation3 + $0x8c8] sm:$0xff] %v661
      %v694 = vld [vmem:[%s469] sm:$0xff]
      %v695 = vld [vmem:[%s469 + $0x8] sm:$0xff]
      %v696 = vld [vmem:[%s469 + $0x18] sm:$0xff]
      %v697 = vld [vmem:[%s469 + $0x20] sm:$0xff]
      %v698 = vld [vmem:[%s469 + $0x30] sm:$0xff]
      %v699 = vld [vmem:[%s469 + $0x38] sm:$0xff]
      %v700 = vld [vmem:[%s469 + $0x48] sm:$0xff]
      %v701 = vld [vmem:[%s469 + $0x50] sm:$0xff]
      %v702 = vld [vmem:[%s469 + $0x60] sm:$0xff]
      %v703 = vld [vmem:[%s469 + $0x68] sm:$0xff]
      %v704 = vld [vmem:[%s469 + $0x78] sm:$0xff]
      %v705 = vld [vmem:[%s469 + $0x80] sm:$0xff]
      %v706 = vld [vmem:[%s469 + $0x90] sm:$0xff]
      %v707 = vld [vmem:[%s469 + $0x98] sm:$0xff]
      %v708 = vld [vmem:[%s469 + $0xa8] sm:$0xff]
      %v709 = vld [vmem:[%s469 + $0xb0] sm:$0xff]
      %v710 = vld [vmem:[%s469 + $0xc0] sm:$0xff]
      %v711 = vld [vmem:[%s469 + $0xc8] sm:$0xff]
      %v712 = vld [vmem:[%s469 + $0xd8] sm:$0xff]
      %v713 = vld [vmem:[%s469 + $0xe0] sm:$0xff]
      %v714 = vld [vmem:[%s469 + $0xf0] sm:$0xff]
      %v715 = vld [vmem:[%s469 + $0xf8] sm:$0xff]
      %v716 = vld [vmem:[%s469 + $0x108] sm:$0xff]
      %v717 = vld [vmem:[%s469 + $0x110] sm:$0xff]
      %v718 = vld [vmem:[%s469 + $0x120] sm:$0xff]
      %v719 = vld [vmem:[%s469 + $0x128] sm:$0xff]
      %v720 = vld [vmem:[%s469 + $0x138] sm:$0xff]
      %v721 = vld [vmem:[%s469 + $0x140] sm:$0xff]
      %v722 = vld [vmem:[%s469 + $0x150] sm:$0xff]
      %v723 = vld [vmem:[%s469 + $0x158] sm:$0xff]
      %v724 = vld [vmem:[%s469 + $0x168] sm:$0xff]
      %v725 = vld [vmem:[%s469 + $0x170] sm:$0xff]
      %726 = vst [vmem:[#allocation3 + $0x18] sm:$0xff] %v694
      %727 = vst [vmem:[#allocation3 + $0x60] sm:$0xff] %v695
      %728 = vst [vmem:[#allocation3 + $0xa8] sm:$0xff] %v696
      %729 = vst [vmem:[#allocation3 + $0xf0] sm:$0xff] %v697
      %730 = vst [vmem:[#allocation3 + $0x138] sm:$0xff] %v698
      %731 = vst [vmem:[#allocation3 + $0x180] sm:$0xff] %v699
      %732 = vst [vmem:[#allocation3 + $0x1c8] sm:$0xff] %v700
      %733 = vst [vmem:[#allocation3 + $0x210] sm:$0xff] %v701
      %734 = vst [vmem:[#allocation3 + $0x258] sm:$0xff] %v702
      %735 = vst [vmem:[#allocation3 + $0x2a0] sm:$0xff] %v703
      %736 = vst [vmem:[#allocation3 + $0x2e8] sm:$0xff] %v704
      %737 = vst [vmem:[#allocation3 + $0x330] sm:$0xff] %v705
      %738 = vst [vmem:[#allocation3 + $0x378] sm:$0xff] %v706
      %739 = vst [vmem:[#allocation3 + $0x3c0] sm:$0xff] %v707
      %740 = vst [vmem:[#allocation3 + $0x408] sm:$0xff] %v708
      %741 = vst [vmem:[#allocation3 + $0x450] sm:$0xff] %v709
      %742 = vst [vmem:[#allocation3 + $0x498] sm:$0xff] %v710
      %743 = vst [vmem:[#allocation3 + $0x4e0] sm:$0xff] %v711
      %744 = vst [vmem:[#allocation3 + $0x528] sm:$0xff] %v712
      %745 = vst [vmem:[#allocation3 + $0x570] sm:$0xff] %v713
      %746 = vst [vmem:[#allocation3 + $0x5b8] sm:$0xff] %v714
      %747 = vst [vmem:[#allocation3 + $0x600] sm:$0xff] %v715
      %748 = vst [vmem:[#allocation3 + $0x648] sm:$0xff] %v716
      %749 = vst [vmem:[#allocation3 + $0x690] sm:$0xff] %v717
      %750 = vst [vmem:[#allocation3 + $0x6d8] sm:$0xff] %v718
      %751 = vst [vmem:[#allocation3 + $0x720] sm:$0xff] %v719
      %752 = vst [vmem:[#allocation3 + $0x768] sm:$0xff] %v720
      %753 = vst [vmem:[#allocation3 + $0x7b0] sm:$0xff] %v721
      %754 = vst [vmem:[#allocation3 + $0x7f8] sm:$0xff] %v722
      %755 = vst [vmem:[#allocation3 + $0x840] sm:$0xff] %v723
      %756 = vst [vmem:[#allocation3 + $0x888] sm:$0xff] %v724
      %757 = vst [vmem:[#allocation3 + $0x8d0] sm:$0xff] %v725
      %v758 = vld [vmem:[%s469 + $0x1] sm:$0xff]
      %v759 = vld [vmem:[%s469 + $0x9] sm:$0xff]
      %v760 = vld [vmem:[%s469 + $0x19] sm:$0xff]
      %v761 = vld [vmem:[%s469 + $0x21] sm:$0xff]
      %v762 = vld [vmem:[%s469 + $0x31] sm:$0xff]
      %v763 = vld [vmem:[%s469 + $0x39] sm:$0xff]
      %v764 = vld [vmem:[%s469 + $0x49] sm:$0xff]
      %v765 = vld [vmem:[%s469 + $0x51] sm:$0xff]
      %v766 = vld [vmem:[%s469 + $0x61] sm:$0xff]
      %v767 = vld [vmem:[%s469 + $0x69] sm:$0xff]
      %v768 = vld [vmem:[%s469 + $0x79] sm:$0xff]
      %v769 = vld [vmem:[%s469 + $0x81] sm:$0xff]
      %v770 = vld [vmem:[%s469 + $0x91] sm:$0xff]
      %v771 = vld [vmem:[%s469 + $0x99] sm:$0xff]
      %v772 = vld [vmem:[%s469 + $0xa9] sm:$0xff]
      %v773 = vld [vmem:[%s469 + $0xb1] sm:$0xff]
      %v774 = vld [vmem:[%s469 + $0xc1] sm:$0xff]
      %v775 = vld [vmem:[%s469 + $0xc9] sm:$0xff]
      %v776 = vld [vmem:[%s469 + $0xd9] sm:$0xff]
      %v777 = vld [vmem:[%s469 + $0xe1] sm:$0xff]
      %v778 = vld [vmem:[%s469 + $0xf1] sm:$0xff]
      %v779 = vld [vmem:[%s469 + $0xf9] sm:$0xff]
      %v780 = vld [vmem:[%s469 + $0x109] sm:$0xff]
      %v781 = vld [vmem:[%s469 + $0x111] sm:$0xff]
      %v782 = vld [vmem:[%s469 + $0x121] sm:$0xff]
      %v783 = vld [vmem:[%s469 + $0x129] sm:$0xff]
      %v784 = vld [vmem:[%s469 + $0x139] sm:$0xff]
      %v785 = vld [vmem:[%s469 + $0x141] sm:$0xff]
      %v786 = vld [vmem:[%s469 + $0x151] sm:$0xff]
      %v787 = vld [vmem:[%s469 + $0x159] sm:$0xff]
      %v788 = vld [vmem:[%s469 + $0x169] sm:$0xff]
      %v789 = vld [vmem:[%s469 + $0x171] sm:$0xff]
      %790 = vst [vmem:[#allocation3 + $0x20] sm:$0xff] %v758
      %791 = vst [vmem:[#allocation3 + $0x68] sm:$0xff] %v759
      %792 = vst [vmem:[#allocation3 + $0xb0] sm:$0xff] %v760
      %793 = vst [vmem:[#allocation3 + $0xf8] sm:$0xff] %v761
      %794 = vst [vmem:[#allocation3 + $0x140] sm:$0xff] %v762
      %795 = vst [vmem:[#allocation3 + $0x188] sm:$0xff] %v763
      %796 = vst [vmem:[#allocation3 + $0x1d0] sm:$0xff] %v764
      %797 = vst [vmem:[#allocation3 + $0x218] sm:$0xff] %v765
      %798 = vst [vmem:[#allocation3 + $0x260] sm:$0xff] %v766
      %799 = vst [vmem:[#allocation3 + $0x2a8] sm:$0xff] %v767
      %800 = vst [vmem:[#allocation3 + $0x2f0] sm:$0xff] %v768
      %801 = vst [vmem:[#allocation3 + $0x338] sm:$0xff] %v769
      %802 = vst [vmem:[#allocation3 + $0x380] sm:$0xff] %v770
      %803 = vst [vmem:[#allocation3 + $0x3c8] sm:$0xff] %v771
      %804 = vst [vmem:[#allocation3 + $0x410] sm:$0xff] %v772
      %805 = vst [vmem:[#allocation3 + $0x458] sm:$0xff] %v773
      %806 = vst [vmem:[#allocation3 + $0x4a0] sm:$0xff] %v774
      %807 = vst [vmem:[#allocation3 + $0x4e8] sm:$0xff] %v775
      %808 = vst [vmem:[#allocation3 + $0x530] sm:$0xff] %v776
      %809 = vst [vmem:[#allocation3 + $0x578] sm:$0xff] %v777
      %810 = vst [vmem:[#allocation3 + $0x5c0] sm:$0xff] %v778
      %811 = vst [vmem:[#allocation3 + $0x608] sm:$0xff] %v779
      %812 = vst [vmem:[#allocation3 + $0x650] sm:$0xff] %v780
      %813 = vst [vmem:[#allocation3 + $0x698] sm:$0xff] %v781
      %814 = vst [vmem:[#allocation3 + $0x6e0] sm:$0xff] %v782
      %815 = vst [vmem:[#allocation3 + $0x728] sm:$0xff] %v783
      %816 = vst [vmem:[#allocation3 + $0x770] sm:$0xff] %v784
      %817 = vst [vmem:[#allocation3 + $0x7b8] sm:$0xff] %v785
      %818 = vst [vmem:[#allocation3 + $0x800] sm:$0xff] %v786
      %819 = vst [vmem:[#allocation3 + $0x848] sm:$0xff] %v787
      %820 = vst [vmem:[#allocation3 + $0x890] sm:$0xff] %v788
      %821 = vst [vmem:[#allocation3 + $0x8d8] sm:$0xff] %v789
      %v822 = vld [vmem:[%s469 + $0x2] sm:$0xff]
      %v823 = vld [vmem:[%s469 + $0xa] sm:$0xff]
      %v824 = vld [vmem:[%s469 + $0x1a] sm:$0xff]
      %v825 = vld [vmem:[%s469 + $0x22] sm:$0xff]
      %v826 = vld [vmem:[%s469 + $0x32] sm:$0xff]
      %v827 = vld [vmem:[%s469 + $0x3a] sm:$0xff]
      %v828 = vld [vmem:[%s469 + $0x4a] sm:$0xff]
      %v829 = vld [vmem:[%s469 + $0x52] sm:$0xff]
      %v830 = vld [vmem:[%s469 + $0x62] sm:$0xff]
      %v831 = vld [vmem:[%s469 + $0x6a] sm:$0xff]
      %v832 = vld [vmem:[%s469 + $0x7a] sm:$0xff]
      %v833 = vld [vmem:[%s469 + $0x82] sm:$0xff]
      %v834 = vld [vmem:[%s469 + $0x92] sm:$0xff]
      %v835 = vld [vmem:[%s469 + $0x9a] sm:$0xff]
      %v836 = vld [vmem:[%s469 + $0xaa] sm:$0xff]
      %v837 = vld [vmem:[%s469 + $0xb2] sm:$0xff]
      %v838 = vld [vmem:[%s469 + $0xc2] sm:$0xff]
      %v839 = vld [vmem:[%s469 + $0xca] sm:$0xff]
      %v840 = vld [vmem:[%s469 + $0xda] sm:$0xff]
      %v841 = vld [vmem:[%s469 + $0xe2] sm:$0xff]
      %v842 = vld [vmem:[%s469 + $0xf2] sm:$0xff]
      %v843 = vld [vmem:[%s469 + $0xfa] sm:$0xff]
      %v844 = vld [vmem:[%s469 + $0x10a] sm:$0xff]
      %v845 = vld [vmem:[%s469 + $0x112] sm:$0xff]
      %v846 = vld [vmem:[%s469 + $0x122] sm:$0xff]
      %v847 = vld [vmem:[%s469 + $0x12a] sm:$0xff]
      %v848 = vld [vmem:[%s469 + $0x13a] sm:$0xff]
      %v849 = vld [vmem:[%s469 + $0x142] sm:$0xff]
      %v850 = vld [vmem:[%s469 + $0x152] sm:$0xff]
      %v851 = vld [vmem:[%s469 + $0x15a] sm:$0xff]
      %v852 = vld [vmem:[%s469 + $0x16a] sm:$0xff]
      %v853 = vld [vmem:[%s469 + $0x172] sm:$0xff]
      %854 = vst [vmem:[#allocation3 + $0x28] sm:$0xff] %v822
      %855 = vst [vmem:[#allocation3 + $0x70] sm:$0xff] %v823
      %856 = vst [vmem:[#allocation3 + $0xb8] sm:$0xff] %v824
      %857 = vst [vmem:[#allocation3 + $0x100] sm:$0xff] %v825
      %858 = vst [vmem:[#allocation3 + $0x148] sm:$0xff] %v826
      %859 = vst [vmem:[#allocation3 + $0x190] sm:$0xff] %v827
      %860 = vst [vmem:[#allocation3 + $0x1d8] sm:$0xff] %v828
      %861 = vst [vmem:[#allocation3 + $0x220] sm:$0xff] %v829
      %862 = vst [vmem:[#allocation3 + $0x268] sm:$0xff] %v830
      %863 = vst [vmem:[#allocation3 + $0x2b0] sm:$0xff] %v831
      %864 = vst [vmem:[#allocation3 + $0x2f8] sm:$0xff] %v832
      %865 = vst [vmem:[#allocation3 + $0x340] sm:$0xff] %v833
      %866 = vst [vmem:[#allocation3 + $0x388] sm:$0xff] %v834
      %867 = vst [vmem:[#allocation3 + $0x3d0] sm:$0xff] %v835
      %868 = vst [vmem:[#allocation3 + $0x418] sm:$0xff] %v836
      %869 = vst [vmem:[#allocation3 + $0x460] sm:$0xff] %v837
      %870 = vst [vmem:[#allocation3 + $0x4a8] sm:$0xff] %v838
      %871 = vst [vmem:[#allocation3 + $0x4f0] sm:$0xff] %v839
      %872 = vst [vmem:[#allocation3 + $0x538] sm:$0xff] %v840
      %873 = vst [vmem:[#allocation3 + $0x580] sm:$0xff] %v841
      %874 = vst [vmem:[#allocation3 + $0x5c8] sm:$0xff] %v842
      %875 = vst [vmem:[#allocation3 + $0x610] sm:$0xff] %v843
      %876 = vst [vmem:[#allocation3 + $0x658] sm:$0xff] %v844
      %877 = vst [vmem:[#allocation3 + $0x6a0] sm:$0xff] %v845
      %878 = vst [vmem:[#allocation3 + $0x6e8] sm:$0xff] %v846
      %879 = vst [vmem:[#allocation3 + $0x730] sm:$0xff] %v847
      %880 = vst [vmem:[#allocation3 + $0x778] sm:$0xff] %v848
      %881 = vst [vmem:[#allocation3 + $0x7c0] sm:$0xff] %v849
      %882 = vst [vmem:[#allocation3 + $0x808] sm:$0xff] %v850
      %883 = vst [vmem:[#allocation3 + $0x850] sm:$0xff] %v851
      %884 = vst [vmem:[#allocation3 + $0x898] sm:$0xff] %v852
      %885 = vst [vmem:[#allocation3 + $0x8e0] sm:$0xff] %v853
      %s886 = scalar_lea.vmem [#allocation2], 48
      %v887 = vld [vmem:[%s886] sm:$0xff]
      %v888 = vld [vmem:[%s886 + $0x8] sm:$0xff]
      %v889 = vld [vmem:[%s886 + $0x18] sm:$0xff]
      %v890 = vld [vmem:[%s886 + $0x20] sm:$0xff]
      %v891 = vld [vmem:[%s886 + $0x30] sm:$0xff]
      %v892 = vld [vmem:[%s886 + $0x38] sm:$0xff]
      %v893 = vld [vmem:[%s886 + $0x48] sm:$0xff]
      %v894 = vld [vmem:[%s886 + $0x50] sm:$0xff]
      %v895 = vld [vmem:[%s886 + $0x60] sm:$0xff]
      %v896 = vld [vmem:[%s886 + $0x68] sm:$0xff]
      %v897 = vld [vmem:[%s886 + $0x78] sm:$0xff]
      %v898 = vld [vmem:[%s886 + $0x80] sm:$0xff]
      %v899 = vld [vmem:[%s886 + $0x90] sm:$0xff]
      %v900 = vld [vmem:[%s886 + $0x98] sm:$0xff]
      %v901 = vld [vmem:[%s886 + $0xa8] sm:$0xff]
      %v902 = vld [vmem:[%s886 + $0xb0] sm:$0xff]
      %v903 = vld [vmem:[%s886 + $0xc0] sm:$0xff]
      %v904 = vld [vmem:[%s886 + $0xc8] sm:$0xff]
      %v905 = vld [vmem:[%s886 + $0xd8] sm:$0xff]
      %v906 = vld [vmem:[%s886 + $0xe0] sm:$0xff]
      %v907 = vld [vmem:[%s886 + $0xf0] sm:$0xff]
      %v908 = vld [vmem:[%s886 + $0xf8] sm:$0xff]
      %v909 = vld [vmem:[%s886 + $0x108] sm:$0xff]
      %v910 = vld [vmem:[%s886 + $0x110] sm:$0xff]
      %v911 = vld [vmem:[%s886 + $0x120] sm:$0xff]
      %v912 = vld [vmem:[%s886 + $0x128] sm:$0xff]
      %v913 = vld [vmem:[%s886 + $0x138] sm:$0xff]
      %v914 = vld [vmem:[%s886 + $0x140] sm:$0xff]
      %v915 = vld [vmem:[%s886 + $0x150] sm:$0xff]
      %v916 = vld [vmem:[%s886 + $0x158] sm:$0xff]
      %v917 = vld [vmem:[%s886 + $0x168] sm:$0xff]
      %v918 = vld [vmem:[%s886 + $0x170] sm:$0xff]
      %919 = vst [vmem:[#allocation3 + $0x30] sm:$0xff] %v887
      %920 = vst [vmem:[#allocation3 + $0x78] sm:$0xff] %v888
      %921 = vst [vmem:[#allocation3 + $0xc0] sm:$0xff] %v889
      %922 = vst [vmem:[#allocation3 + $0x108] sm:$0xff] %v890
      %923 = vst [vmem:[#allocation3 + $0x150] sm:$0xff] %v891
      %924 = vst [vmem:[#allocation3 + $0x198] sm:$0xff] %v892
      %925 = vst [vmem:[#allocation3 + $0x1e0] sm:$0xff] %v893
      %926 = vst [vmem:[#allocation3 + $0x228] sm:$0xff] %v894
      %927 = vst [vmem:[#allocation3 + $0x270] sm:$0xff] %v895
      %928 = vst [vmem:[#allocation3 + $0x2b8] sm:$0xff] %v896
      %929 = vst [vmem:[#allocation3 + $0x300] sm:$0xff] %v897
      %930 = vst [vmem:[#allocation3 + $0x348] sm:$0xff] %v898
      %931 = vst [vmem:[#allocation3 + $0x390] sm:$0xff] %v899
      %932 = vst [vmem:[#allocation3 + $0x3d8] sm:$0xff] %v900
      %933 = vst [vmem:[#allocation3 + $0x420] sm:$0xff] %v901
      %934 = vst [vmem:[#allocation3 + $0x468] sm:$0xff] %v902
      %935 = vst [vmem:[#allocation3 + $0x4b0] sm:$0xff] %v903
      %936 = vst [vmem:[#allocation3 + $0x4f8] sm:$0xff] %v904
      %937 = vst [vmem:[#allocation3 + $0x540] sm:$0xff] %v905
      %938 = vst [vmem:[#allocation3 + $0x588] sm:$0xff] %v906
      %939 = vst [vmem:[#allocation3 + $0x5d0] sm:$0xff] %v907
      %940 = vst [vmem:[#allocation3 + $0x618] sm:$0xff] %v908
      %941 = vst [vmem:[#allocation3 + $0x660] sm:$0xff] %v909
      %942 = vst [vmem:[#allocation3 + $0x6a8] sm:$0xff] %v910
      %943 = vst [vmem:[#allocation3 + $0x6f0] sm:$0xff] %v911
      %944 = vst [vmem:[#allocation3 + $0x738] sm:$0xff] %v912
      %945 = vst [vmem:[#allocation3 + $0x780] sm:$0xff] %v913
      %946 = vst [vmem:[#allocation3 + $0x7c8] sm:$0xff] %v914
      %947 = vst [vmem:[#allocation3 + $0x810] sm:$0xff] %v915
      %948 = vst [vmem:[#allocation3 + $0x858] sm:$0xff] %v916
      %949 = vst [vmem:[#allocation3 + $0x8a0] sm:$0xff] %v917
      %950 = vst [vmem:[#allocation3 + $0x8e8] sm:$0xff] %v918
      %v951 = vld [vmem:[%s886 + $0x1] sm:$0xff]
      %v952 = vld [vmem:[%s886 + $0x9] sm:$0xff]
      %v953 = vld [vmem:[%s886 + $0x19] sm:$0xff]
      %v954 = vld [vmem:[%s886 + $0x21] sm:$0xff]
      %v955 = vld [vmem:[%s886 + $0x31] sm:$0xff]
      %v956 = vld [vmem:[%s886 + $0x39] sm:$0xff]
      %v957 = vld [vmem:[%s886 + $0x49] sm:$0xff]
      %v958 = vld [vmem:[%s886 + $0x51] sm:$0xff]
      %v959 = vld [vmem:[%s886 + $0x61] sm:$0xff]
      %v960 = vld [vmem:[%s886 + $0x69] sm:$0xff]
      %v961 = vld [vmem:[%s886 + $0x79] sm:$0xff]
      %v962 = vld [vmem:[%s886 + $0x81] sm:$0xff]
      %v963 = vld [vmem:[%s886 + $0x91] sm:$0xff]
      %v964 = vld [vmem:[%s886 + $0x99] sm:$0xff]
      %v965 = vld [vmem:[%s886 + $0xa9] sm:$0xff]
      %v966 = vld [vmem:[%s886 + $0xb1] sm:$0xff]
      %v967 = vld [vmem:[%s886 + $0xc1] sm:$0xff]
      %v968 = vld [vmem:[%s886 + $0xc9] sm:$0xff]
      %v969 = vld [vmem:[%s886 + $0xd9] sm:$0xff]
      %v970 = vld [vmem:[%s886 + $0xe1] sm:$0xff]
      %v971 = vld [vmem:[%s886 + $0xf1] sm:$0xff]
      %v972 = vld [vmem:[%s886 + $0xf9] sm:$0xff]
      %v973 = vld [vmem:[%s886 + $0x109] sm:$0xff]
      %v974 = vld [vmem:[%s886 + $0x111] sm:$0xff]
      %v975 = vld [vmem:[%s886 + $0x121] sm:$0xff]
      %v976 = vld [vmem:[%s886 + $0x129] sm:$0xff]
      %v977 = vld [vmem:[%s886 + $0x139] sm:$0xff]
      %v978 = vld [vmem:[%s886 + $0x141] sm:$0xff]
      %v979 = vld [vmem:[%s886 + $0x151] sm:$0xff]
      %v980 = vld [vmem:[%s886 + $0x159] sm:$0xff]
      %v981 = vld [vmem:[%s886 + $0x169] sm:$0xff]
      %v982 = vld [vmem:[%s886 + $0x171] sm:$0xff]
      %983 = vst [vmem:[#allocation3 + $0x38] sm:$0xff] %v951
      %984 = vst [vmem:[#allocation3 + $0x80] sm:$0xff] %v952
      %985 = vst [vmem:[#allocation3 + $0xc8] sm:$0xff] %v953
      %986 = vst [vmem:[#allocation3 + $0x110] sm:$0xff] %v954
      %987 = vst [vmem:[#allocation3 + $0x158] sm:$0xff] %v955
      %988 = vst [vmem:[#allocation3 + $0x1a0] sm:$0xff] %v956
      %989 = vst [vmem:[#allocation3 + $0x1e8] sm:$0xff] %v957
      %990 = vst [vmem:[#allocation3 + $0x230] sm:$0xff] %v958
      %991 = vst [vmem:[#allocation3 + $0x278] sm:$0xff] %v959
      %992 = vst [vmem:[#allocation3 + $0x2c0] sm:$0xff] %v960
      %993 = vst [vmem:[#allocation3 + $0x308] sm:$0xff] %v961
      %994 = vst [vmem:[#allocation3 + $0x350] sm:$0xff] %v962
      %995 = vst [vmem:[#allocation3 + $0x398] sm:$0xff] %v963
      %996 = vst [vmem:[#allocation3 + $0x3e0] sm:$0xff] %v964
      %997 = vst [vmem:[#allocation3 + $0x428] sm:$0xff] %v965
      %998 = vst [vmem:[#allocation3 + $0x470] sm:$0xff] %v966
      %999 = vst [vmem:[#allocation3 + $0x4b8] sm:$0xff] %v967
      %1000 = vst [vmem:[#allocation3 + $0x500] sm:$0xff] %v968
      %1001 = vst [vmem:[#allocation3 + $0x548] sm:$0xff] %v969
      %1002 = vst [vmem:[#allocation3 + $0x590] sm:$0xff] %v970
      %1003 = vst [vmem:[#allocation3 + $0x5d8] sm:$0xff] %v971
      %1004 = vst [vmem:[#allocation3 + $0x620] sm:$0xff] %v972
      %1005 = vst [vmem:[#allocation3 + $0x668] sm:$0xff] %v973
      %1006 = vst [vmem:[#allocation3 + $0x6b0] sm:$0xff] %v974
      %1007 = vst [vmem:[#allocation3 + $0x6f8] sm:$0xff] %v975
      %1008 = vst [vmem:[#allocation3 + $0x740] sm:$0xff] %v976
      %1009 = vst [vmem:[#allocation3 + $0x788] sm:$0xff] %v977
      %1010 = vst [vmem:[#allocation3 + $0x7d0] sm:$0xff] %v978
      %1011 = vst [vmem:[#allocation3 + $0x818] sm:$0xff] %v979
      %1012 = vst [vmem:[#allocation3 + $0x860] sm:$0xff] %v980
      %1013 = vst [vmem:[#allocation3 + $0x8a8] sm:$0xff] %v981
      %1014 = vst [vmem:[#allocation3 + $0x8f0] sm:$0xff] %v982
      %v1015 = vld [vmem:[%s886 + $0x2] sm:$0xff]
      %v1016 = vld [vmem:[%s886 + $0xa] sm:$0xff]
      %v1017 = vld [vmem:[%s886 + $0x1a] sm:$0xff]
      %v1018 = vld [vmem:[%s886 + $0x22] sm:$0xff]
      %v1019 = vld [vmem:[%s886 + $0x32] sm:$0xff]
      %v1020 = vld [vmem:[%s886 + $0x3a] sm:$0xff]
      %v1021 = vld [vmem:[%s886 + $0x4a] sm:$0xff]
      %v1022 = vld [vmem:[%s886 + $0x52] sm:$0xff]
      %v1023 = vld [vmem:[%s886 + $0x62] sm:$0xff]
      %v1024 = vld [vmem:[%s886 + $0x6a] sm:$0xff]
      %v1025 = vld [vmem:[%s886 + $0x7a] sm:$0xff]
      %v1026 = vld [vmem:[%s886 + $0x82] sm:$0xff]
      %v1027 = vld [vmem:[%s886 + $0x92] sm:$0xff]
      %v1028 = vld [vmem:[%s886 + $0x9a] sm:$0xff]
      %v1029 = vld [vmem:[%s886 + $0xaa] sm:$0xff]
      %v1030 = vld [vmem:[%s886 + $0xb2] sm:$0xff]
      %v1031 = vld [vmem:[%s886 + $0xc2] sm:$0xff]
      %v1032 = vld [vmem:[%s886 + $0xca] sm:$0xff]
      %v1033 = vld [vmem:[%s886 + $0xda] sm:$0xff]
      %v1034 = vld [vmem:[%s886 + $0xe2] sm:$0xff]
      %v1035 = vld [vmem:[%s886 + $0xf2] sm:$0xff]
      %v1036 = vld [vmem:[%s886 + $0xfa] sm:$0xff]
      %v1037 = vld [vmem:[%s886 + $0x10a] sm:$0xff]
      %v1038 = vld [vmem:[%s886 + $0x112] sm:$0xff]
      %v1039 = vld [vmem:[%s886 + $0x122] sm:$0xff]
      %v1040 = vld [vmem:[%s886 + $0x12a] sm:$0xff]
      %v1041 = vld [vmem:[%s886 + $0x13a] sm:$0xff]
      %v1042 = vld [vmem:[%s886 + $0x142] sm:$0xff]
      %v1043 = vld [vmem:[%s886 + $0x152] sm:$0xff]
      %v1044 = vld [vmem:[%s886 + $0x15a] sm:$0xff]
      %v1045 = vld [vmem:[%s886 + $0x16a] sm:$0xff]
      %v1046 = vld [vmem:[%s886 + $0x172] sm:$0xff]
      %1047 = vst [vmem:[#allocation3 + $0x40] sm:$0xff] %v1015
      %1048 = vst [vmem:[#allocation3 + $0x88] sm:$0xff] %v1016
      %1049 = vst [vmem:[#allocation3 + $0xd0] sm:$0xff] %v1017
      %1050 = vst [vmem:[#allocation3 + $0x118] sm:$0xff] %v1018
      %1051 = vst [vmem:[#allocation3 + $0x160] sm:$0xff] %v1019
      %1052 = vst [vmem:[#allocation3 + $0x1a8] sm:$0xff] %v1020
      %1053 = vst [vmem:[#allocation3 + $0x1f0] sm:$0xff] %v1021
      %1054 = vst [vmem:[#allocation3 + $0x238] sm:$0xff] %v1022
      %1055 = vst [vmem:[#allocation3 + $0x280] sm:$0xff] %v1023
      %1056 = vst [vmem:[#allocation3 + $0x2c8] sm:$0xff] %v1024
      %1057 = vst [vmem:[#allocation3 + $0x310] sm:$0xff] %v1025
      %1058 = vst [vmem:[#allocation3 + $0x358] sm:$0xff] %v1026
      %1059 = vst [vmem:[#allocation3 + $0x3a0] sm:$0xff] %v1027
      %1060 = vst [vmem:[#allocation3 + $0x3e8] sm:$0xff] %v1028
      %1061 = vst [vmem:[#allocation3 + $0x430] sm:$0xff] %v1029
      %1062 = vst [vmem:[#allocation3 + $0x478] sm:$0xff] %v1030
      %1063 = vst [vmem:[#allocation3 + $0x4c0] sm:$0xff] %v1031
      %1064 = vst [vmem:[#allocation3 + $0x508] sm:$0xff] %v1032
      %1065 = vst [vmem:[#allocation3 + $0x550] sm:$0xff] %v1033
      %1066 = vst [vmem:[#allocation3 + $0x598] sm:$0xff] %v1034
      %1067 = vst [vmem:[#allocation3 + $0x5e0] sm:$0xff] %v1035
      %1068 = vst [vmem:[#allocation3 + $0x628] sm:$0xff] %v1036
      %1069 = vst [vmem:[#allocation3 + $0x670] sm:$0xff] %v1037
      %1070 = vst [vmem:[#allocation3 + $0x6b8] sm:$0xff] %v1038
      %1071 = vst [vmem:[#allocation3 + $0x700] sm:$0xff] %v1039
      %1072 = vst [vmem:[#allocation3 + $0x748] sm:$0xff] %v1040
      %1073 = vst [vmem:[#allocation3 + $0x790] sm:$0xff] %v1041
      %1074 = vst [vmem:[#allocation3 + $0x7d8] sm:$0xff] %v1042
      %1075 = vst [vmem:[#allocation3 + $0x820] sm:$0xff] %v1043
      %1076 = vst [vmem:[#allocation3 + $0x868] sm:$0xff] %v1044
      %1077 = vst [vmem:[#allocation3 + $0x8b0] sm:$0xff] %v1045
      %1078 = vst [vmem:[#allocation3 + $0x8f8] sm:$0xff] %v1046
      %v1079 = vld [vmem:[#allocation3] sm:$0xff]
      %v1080 = vld [vmem:[#allocation3 + $0x8] sm:$0xff]
      %v1081 = vld [vmem:[#allocation3 + $0x10] sm:$0xff]
      %v1082 = vld [vmem:[#allocation3 + $0x18] sm:$0xff]
      %v1083 = vld [vmem:[#allocation3 + $0x20] sm:$0xff]
      %v1084 = vld [vmem:[#allocation3 + $0x28] sm:$0xff]
      %v1085 = vld [vmem:[#allocation3 + $0x30] sm:$0xff]
      %v1086 = vld [vmem:[#allocation3 + $0x38] sm:$0xff]
      %v1087 = vld [vmem:[#allocation3 + $0x40] sm:$0xff]
      %v1088 = vld [vmem:[#allocation3 + $0x48] sm:$0xff]
      %v1089 = vld [vmem:[#allocation3 + $0x50] sm:$0xff]
      %v1090 = vld [vmem:[#allocation3 + $0x58] sm:$0xff]
      %v1091 = vld [vmem:[#allocation3 + $0x60] sm:$0xff]
      %v1092 = vld [vmem:[#allocation3 + $0x68] sm:$0xff]
      %v1093 = vld [vmem:[#allocation3 + $0x70] sm:$0xff]
      %v1094 = vld [vmem:[#allocation3 + $0x78] sm:$0xff]
      %v1095 = vld [vmem:[#allocation3 + $0x80] sm:$0xff]
      %v1096 = vld [vmem:[#allocation3 + $0x88] sm:$0xff]
      %v1097 = vld [vmem:[#allocation3 + $0x90] sm:$0xff]
      %v1098 = vld [vmem:[#allocation3 + $0x98] sm:$0xff]
      %v1099 = vld [vmem:[#allocation3 + $0xa0] sm:$0xff]
      %v1100 = vld [vmem:[#allocation3 + $0xa8] sm:$0xff]
      %v1101 = vld [vmem:[#allocation3 + $0xb0] sm:$0xff]
      %v1102 = vld [vmem:[#allocation3 + $0xb8] sm:$0xff]
      %v1103 = vld [vmem:[#allocation3 + $0xc0] sm:$0xff]
      %v1104 = vld [vmem:[#allocation3 + $0xc8] sm:$0xff]
      %v1105 = vld [vmem:[#allocation3 + $0xd0] sm:$0xff]
      %v1106 = vld [vmem:[#allocation3 + $0xd8] sm:$0xff]
      %v1107 = vld [vmem:[#allocation3 + $0xe0] sm:$0xff]
      %v1108 = vld [vmem:[#allocation3 + $0xe8] sm:$0xff]
      %v1109 = vld [vmem:[#allocation3 + $0xf0] sm:$0xff]
      %v1110 = vld [vmem:[#allocation3 + $0xf8] sm:$0xff]
      %v1111 = vld [vmem:[#allocation3 + $0x100] sm:$0xff]
      %v1112 = vld [vmem:[#allocation3 + $0x108] sm:$0xff]
      %v1113 = vld [vmem:[#allocation3 + $0x110] sm:$0xff]
      %v1114 = vld [vmem:[#allocation3 + $0x118] sm:$0xff]
      %v1115 = vld [vmem:[#allocation3 + $0x120] sm:$0xff]
      %v1116 = vld [vmem:[#allocation3 + $0x128] sm:$0xff]
      %v1117 = vld [vmem:[#allocation3 + $0x130] sm:$0xff]
      %v1118 = vld [vmem:[#allocation3 + $0x138] sm:$0xff]
      %v1119 = vld [vmem:[#allocation3 + $0x140] sm:$0xff]
      %v1120 = vld [vmem:[#allocation3 + $0x148] sm:$0xff]
      %v1121 = vld [vmem:[#allocation3 + $0x150] sm:$0xff]
      %v1122 = vld [vmem:[#allocation3 + $0x158] sm:$0xff]
      %v1123 = vld [vmem:[#allocation3 + $0x160] sm:$0xff]
      %v1124 = vld [vmem:[#allocation3 + $0x168] sm:$0xff]
      %v1125 = vld [vmem:[#allocation3 + $0x170] sm:$0xff]
      %v1126 = vld [vmem:[#allocation3 + $0x178] sm:$0xff]
      %v1127 = vld [vmem:[#allocation3 + $0x180] sm:$0xff]
      %v1128 = vld [vmem:[#allocation3 + $0x188] sm:$0xff]
      %v1129 = vld [vmem:[#allocation3 + $0x190] sm:$0xff]
      %v1130 = vld [vmem:[#allocation3 + $0x198] sm:$0xff]
      %v1131 = vld [vmem:[#allocation3 + $0x1a0] sm:$0xff]
      %v1132 = vld [vmem:[#allocation3 + $0x1a8] sm:$0xff]
      %v1133 = vld [vmem:[#allocation3 + $0x1b0] sm:$0xff]
      %v1134 = vld [vmem:[#allocation3 + $0x1b8] sm:$0xff]
      %v1135 = vld [vmem:[#allocation3 + $0x1c0] sm:$0xff]
      %v1136 = vld [vmem:[#allocation3 + $0x1c8] sm:$0xff]
      %v1137 = vld [vmem:[#allocation3 + $0x1d0] sm:$0xff]
      %v1138 = vld [vmem:[#allocation3 + $0x1d8] sm:$0xff]
      %v1139 = vld [vmem:[#allocation3 + $0x1e0] sm:$0xff]
      %v1140 = vld [vmem:[#allocation3 + $0x1e8] sm:$0xff]
      %v1141 = vld [vmem:[#allocation3 + $0x1f0] sm:$0xff]
      %v1142 = vld [vmem:[#allocation3 + $0x1f8] sm:$0xff]
      %v1143 = vld [vmem:[#allocation3 + $0x200] sm:$0xff]
      %v1144 = vld [vmem:[#allocation3 + $0x208] sm:$0xff]
      %v1145 = vld [vmem:[#allocation3 + $0x210] sm:$0xff]
      %v1146 = vld [vmem:[#allocation3 + $0x218] sm:$0xff]
      %v1147 = vld [vmem:[#allocation3 + $0x220] sm:$0xff]
      %v1148 = vld [vmem:[#allocation3 + $0x228] sm:$0xff]
      %v1149 = vld [vmem:[#allocation3 + $0x230] sm:$0xff]
      %v1150 = vld [vmem:[#allocation3 + $0x238] sm:$0xff]
      %v1151 = vld [vmem:[#allocation3 + $0x240] sm:$0xff]
      %v1152 = vld [vmem:[#allocation3 + $0x248] sm:$0xff]
      %v1153 = vld [vmem:[#allocation3 + $0x250] sm:$0xff]
      %v1154 = vld [vmem:[#allocation3 + $0x258] sm:$0xff]
      %v1155 = vld [vmem:[#allocation3 + $0x260] sm:$0xff]
      %v1156 = vld [vmem:[#allocation3 + $0x268] sm:$0xff]
      %v1157 = vld [vmem:[#allocation3 + $0x270] sm:$0xff]
      %v1158 = vld [vmem:[#allocation3 + $0x278] sm:$0xff]
      %v1159 = vld [vmem:[#allocation3 + $0x280] sm:$0xff]
      %v1160 = vld [vmem:[#allocation3 + $0x288] sm:$0xff]
      %v1161 = vld [vmem:[#allocation3 + $0x290] sm:$0xff]
      %v1162 = vld [vmem:[#allocation3 + $0x298] sm:$0xff]
      %v1163 = vld [vmem:[#allocation3 + $0x2a0] sm:$0xff]
      %v1164 = vld [vmem:[#allocation3 + $0x2a8] sm:$0xff]
      %v1165 = vld [vmem:[#allocation3 + $0x2b0] sm:$0xff]
      %v1166 = vld [vmem:[#allocation3 + $0x2b8] sm:$0xff]
      %v1167 = vld [vmem:[#allocation3 + $0x2c0] sm:$0xff]
      %v1168 = vld [vmem:[#allocation3 + $0x2c8] sm:$0xff]
      %v1169 = vld [vmem:[#allocation3 + $0x2d0] sm:$0xff]
      %v1170 = vld [vmem:[#allocation3 + $0x2d8] sm:$0xff]
      %v1171 = vld [vmem:[#allocation3 + $0x2e0] sm:$0xff]
      %v1172 = vld [vmem:[#allocation3 + $0x2e8] sm:$0xff]
      %v1173 = vld [vmem:[#allocation3 + $0x2f0] sm:$0xff]
      %v1174 = vld [vmem:[#allocation3 + $0x2f8] sm:$0xff]
      %v1175 = vld [vmem:[#allocation3 + $0x300] sm:$0xff]
      %v1176 = vld [vmem:[#allocation3 + $0x308] sm:$0xff]
      %v1177 = vld [vmem:[#allocation3 + $0x310] sm:$0xff]
      %v1178 = vld [vmem:[#allocation3 + $0x318] sm:$0xff]
      %v1179 = vld [vmem:[#allocation3 + $0x320] sm:$0xff]
      %v1180 = vld [vmem:[#allocation3 + $0x328] sm:$0xff]
      %v1181 = vld [vmem:[#allocation3 + $0x330] sm:$0xff]
      %v1182 = vld [vmem:[#allocation3 + $0x338] sm:$0xff]
      %v1183 = vld [vmem:[#allocation3 + $0x340] sm:$0xff]
      %v1184 = vld [vmem:[#allocation3 + $0x348] sm:$0xff]
      %v1185 = vld [vmem:[#allocation3 + $0x350] sm:$0xff]
      %v1186 = vld [vmem:[#allocation3 + $0x358] sm:$0xff]
      %v1187 = vld [vmem:[#allocation3 + $0x360] sm:$0xff]
      %v1188 = vld [vmem:[#allocation3 + $0x368] sm:$0xff]
      %v1189 = vld [vmem:[#allocation3 + $0x370] sm:$0xff]
      %v1190 = vld [vmem:[#allocation3 + $0x378] sm:$0xff]
      %v1191 = vld [vmem:[#allocation3 + $0x380] sm:$0xff]
      %v1192 = vld [vmem:[#allocation3 + $0x388] sm:$0xff]
      %v1193 = vld [vmem:[#allocation3 + $0x390] sm:$0xff]
      %v1194 = vld [vmem:[#allocation3 + $0x398] sm:$0xff]
      %v1195 = vld [vmem:[#allocation3 + $0x3a0] sm:$0xff]
      %v1196 = vld [vmem:[#allocation3 + $0x3a8] sm:$0xff]
      %v1197 = vld [vmem:[#allocation3 + $0x3b0] sm:$0xff]
      %v1198 = vld [vmem:[#allocation3 + $0x3b8] sm:$0xff]
      %v1199 = vld [vmem:[#allocation3 + $0x3c0] sm:$0xff]
      %v1200 = vld [vmem:[#allocation3 + $0x3c8] sm:$0xff]
      %v1201 = vld [vmem:[#allocation3 + $0x3d0] sm:$0xff]
      %v1202 = vld [vmem:[#allocation3 + $0x3d8] sm:$0xff]
      %v1203 = vld [vmem:[#allocation3 + $0x3e0] sm:$0xff]
      %v1204 = vld [vmem:[#allocation3 + $0x3e8] sm:$0xff]
      %v1205 = vld [vmem:[#allocation3 + $0x3f0] sm:$0xff]
      %v1206 = vld [vmem:[#allocation3 + $0x3f8] sm:$0xff]
      %v1207 = vld [vmem:[#allocation3 + $0x400] sm:$0xff]
      %v1208 = vld [vmem:[#allocation3 + $0x408] sm:$0xff]
      %v1209 = vld [vmem:[#allocation3 + $0x410] sm:$0xff]
      %v1210 = vld [vmem:[#allocation3 + $0x418] sm:$0xff]
      %v1211 = vld [vmem:[#allocation3 + $0x420] sm:$0xff]
      %v1212 = vld [vmem:[#allocation3 + $0x428] sm:$0xff]
      %v1213 = vld [vmem:[#allocation3 + $0x430] sm:$0xff]
      %v1214 = vld [vmem:[#allocation3 + $0x438] sm:$0xff]
      %v1215 = vld [vmem:[#allocation3 + $0x440] sm:$0xff]
      %v1216 = vld [vmem:[#allocation3 + $0x448] sm:$0xff]
      %v1217 = vld [vmem:[#allocation3 + $0x450] sm:$0xff]
      %v1218 = vld [vmem:[#allocation3 + $0x458] sm:$0xff]
      %v1219 = vld [vmem:[#allocation3 + $0x460] sm:$0xff]
      %v1220 = vld [vmem:[#allocation3 + $0x468] sm:$0xff]
      %v1221 = vld [vmem:[#allocation3 + $0x470] sm:$0xff]
      %v1222 = vld [vmem:[#allocation3 + $0x478] sm:$0xff]
      %v1223 = vld [vmem:[#allocation3 + $0x480] sm:$0xff]
      %v1224 = vld [vmem:[#allocation3 + $0x488] sm:$0xff]
      %v1225 = vld [vmem:[#allocation3 + $0x490] sm:$0xff]
      %v1226 = vld [vmem:[#allocation3 + $0x498] sm:$0xff]
      %v1227 = vld [vmem:[#allocation3 + $0x4a0] sm:$0xff]
      %v1228 = vld [vmem:[#allocation3 + $0x4a8] sm:$0xff]
      %v1229 = vld [vmem:[#allocation3 + $0x4b0] sm:$0xff]
      %v1230 = vld [vmem:[#allocation3 + $0x4b8] sm:$0xff]
      %v1231 = vld [vmem:[#allocation3 + $0x4c0] sm:$0xff]
      %v1232 = vld [vmem:[#allocation3 + $0x4c8] sm:$0xff]
      %v1233 = vld [vmem:[#allocation3 + $0x4d0] sm:$0xff]
      %v1234 = vld [vmem:[#allocation3 + $0x4d8] sm:$0xff]
      %v1235 = vld [vmem:[#allocation3 + $0x4e0] sm:$0xff]
      %v1236 = vld [vmem:[#allocation3 + $0x4e8] sm:$0xff]
      %v1237 = vld [vmem:[#allocation3 + $0x4f0] sm:$0xff]
      %v1238 = vld [vmem:[#allocation3 + $0x4f8] sm:$0xff]
      %v1239 = vld [vmem:[#allocation3 + $0x500] sm:$0xff]
      %v1240 = vld [vmem:[#allocation3 + $0x508] sm:$0xff]
      %v1241 = vld [vmem:[#allocation3 + $0x510] sm:$0xff]
      %v1242 = vld [vmem:[#allocation3 + $0x518] sm:$0xff]
      %v1243 = vld [vmem:[#allocation3 + $0x520] sm:$0xff]
      %v1244 = vld [vmem:[#allocation3 + $0x528] sm:$0xff]
      %v1245 = vld [vmem:[#allocation3 + $0x530] sm:$0xff]
      %v1246 = vld [vmem:[#allocation3 + $0x538] sm:$0xff]
      %v1247 = vld [vmem:[#allocation3 + $0x540] sm:$0xff]
      %v1248 = vld [vmem:[#allocation3 + $0x548] sm:$0xff]
      %v1249 = vld [vmem:[#allocation3 + $0x550] sm:$0xff]
      %v1250 = vld [vmem:[#allocation3 + $0x558] sm:$0xff]
      %v1251 = vld [vmem:[#allocation3 + $0x560] sm:$0xff]
      %v1252 = vld [vmem:[#allocation3 + $0x568] sm:$0xff]
      %v1253 = vld [vmem:[#allocation3 + $0x570] sm:$0xff]
      %v1254 = vld [vmem:[#allocation3 + $0x578] sm:$0xff]
      %v1255 = vld [vmem:[#allocation3 + $0x580] sm:$0xff]
      %v1256 = vld [vmem:[#allocation3 + $0x588] sm:$0xff]
      %v1257 = vld [vmem:[#allocation3 + $0x590] sm:$0xff]
      %v1258 = vld [vmem:[#allocation3 + $0x598] sm:$0xff]
      %v1259 = vld [vmem:[#allocation3 + $0x5a0] sm:$0xff]
      %v1260 = vld [vmem:[#allocation3 + $0x5a8] sm:$0xff]
      %v1261 = vld [vmem:[#allocation3 + $0x5b0] sm:$0xff]
      %v1262 = vld [vmem:[#allocation3 + $0x5b8] sm:$0xff]
      %v1263 = vld [vmem:[#allocation3 + $0x5c0] sm:$0xff]
      %v1264 = vld [vmem:[#allocation3 + $0x5c8] sm:$0xff]
      %v1265 = vld [vmem:[#allocation3 + $0x5d0] sm:$0xff]
      %v1266 = vld [vmem:[#allocation3 + $0x5d8] sm:$0xff]
      %v1267 = vld [vmem:[#allocation3 + $0x5e0] sm:$0xff]
      %v1268 = vld [vmem:[#allocation3 + $0x5e8] sm:$0xff]
      %v1269 = vld [vmem:[#allocation3 + $0x5f0] sm:$0xff]
      %v1270 = vld [vmem:[#allocation3 + $0x5f8] sm:$0xff]
      %v1271 = vld [vmem:[#allocation3 + $0x600] sm:$0xff]
      %v1272 = vld [vmem:[#allocation3 + $0x608] sm:$0xff]
      %v1273 = vld [vmem:[#allocation3 + $0x610] sm:$0xff]
      %v1274 = vld [vmem:[#allocation3 + $0x618] sm:$0xff]
      %v1275 = vld [vmem:[#allocation3 + $0x620] sm:$0xff]
      %v1276 = vld [vmem:[#allocation3 + $0x628] sm:$0xff]
      %v1277 = vld [vmem:[#allocation3 + $0x630] sm:$0xff]
      %v1278 = vld [vmem:[#allocation3 + $0x638] sm:$0xff]
      %v1279 = vld [vmem:[#allocation3 + $0x640] sm:$0xff]
      %v1280 = vld [vmem:[#allocation3 + $0x648] sm:$0xff]
      %v1281 = vld [vmem:[#allocation3 + $0x650] sm:$0xff]
      %v1282 = vld [vmem:[#allocation3 + $0x658] sm:$0xff]
      %v1283 = vld [vmem:[#allocation3 + $0x660] sm:$0xff]
      %v1284 = vld [vmem:[#allocation3 + $0x668] sm:$0xff]
      %v1285 = vld [vmem:[#allocation3 + $0x670] sm:$0xff]
      %v1286 = vld [vmem:[#allocation3 + $0x678] sm:$0xff]
      %v1287 = vld [vmem:[#allocation3 + $0x680] sm:$0xff]
      %v1288 = vld [vmem:[#allocation3 + $0x688] sm:$0xff]
      %v1289 = vld [vmem:[#allocation3 + $0x690] sm:$0xff]
      %v1290 = vld [vmem:[#allocation3 + $0x698] sm:$0xff]
      %v1291 = vld [vmem:[#allocation3 + $0x6a0] sm:$0xff]
      %v1292 = vld [vmem:[#allocation3 + $0x6a8] sm:$0xff]
      %v1293 = vld [vmem:[#allocation3 + $0x6b0] sm:$0xff]
      %v1294 = vld [vmem:[#allocation3 + $0x6b8] sm:$0xff]
      %v1295 = vld [vmem:[#allocation3 + $0x6c0] sm:$0xff]
      %v1296 = vld [vmem:[#allocation3 + $0x6c8] sm:$0xff]
      %v1297 = vld [vmem:[#allocation3 + $0x6d0] sm:$0xff]
      %v1298 = vld [vmem:[#allocation3 + $0x6d8] sm:$0xff]
      %v1299 = vld [vmem:[#allocation3 + $0x6e0] sm:$0xff]
      %v1300 = vld [vmem:[#allocation3 + $0x6e8] sm:$0xff]
      %v1301 = vld [vmem:[#allocation3 + $0x6f0] sm:$0xff]
      %v1302 = vld [vmem:[#allocation3 + $0x6f8] sm:$0xff]
      %v1303 = vld [vmem:[#allocation3 + $0x700] sm:$0xff]
      %v1304 = vld [vmem:[#allocation3 + $0x708] sm:$0xff]
      %v1305 = vld [vmem:[#allocation3 + $0x710] sm:$0xff]
      %v1306 = vld [vmem:[#allocation3 + $0x718] sm:$0xff]
      %v1307 = vld [vmem:[#allocation3 + $0x720] sm:$0xff]
      %v1308 = vld [vmem:[#allocation3 + $0x728] sm:$0xff]
      %v1309 = vld [vmem:[#allocation3 + $0x730] sm:$0xff]
      %v1310 = vld [vmem:[#allocation3 + $0x738] sm:$0xff]
      %v1311 = vld [vmem:[#allocation3 + $0x740] sm:$0xff]
      %v1312 = vld [vmem:[#allocation3 + $0x748] sm:$0xff]
      %v1313 = vld [vmem:[#allocation3 + $0x750] sm:$0xff]
      %v1314 = vld [vmem:[#allocation3 + $0x758] sm:$0xff]
      %v1315 = vld [vmem:[#allocation3 + $0x760] sm:$0xff]
      %v1316 = vld [vmem:[#allocation3 + $0x768] sm:$0xff]
      %v1317 = vld [vmem:[#allocation3 + $0x770] sm:$0xff]
      %v1318 = vld [vmem:[#allocation3 + $0x778] sm:$0xff]
      %v1319 = vld [vmem:[#allocation3 + $0x780] sm:$0xff]
      %v1320 = vld [vmem:[#allocation3 + $0x788] sm:$0xff]
      %v1321 = vld [vmem:[#allocation3 + $0x790] sm:$0xff]
      %v1322 = vld [vmem:[#allocation3 + $0x798] sm:$0xff]
      %v1323 = vld [vmem:[#allocation3 + $0x7a0] sm:$0xff]
      %v1324 = vld [vmem:[#allocation3 + $0x7a8] sm:$0xff]
      %v1325 = vld [vmem:[#allocation3 + $0x7b0] sm:$0xff]
      %v1326 = vld [vmem:[#allocation3 + $0x7b8] sm:$0xff]
      %v1327 = vld [vmem:[#allocation3 + $0x7c0] sm:$0xff]
      %v1328 = vld [vmem:[#allocation3 + $0x7c8] sm:$0xff]
      %v1329 = vld [vmem:[#allocation3 + $0x7d0] sm:$0xff]
      %v1330 = vld [vmem:[#allocation3 + $0x7d8] sm:$0xff]
      %v1331 = vld [vmem:[#allocation3 + $0x7e0] sm:$0xff]
      %v1332 = vld [vmem:[#allocation3 + $0x7e8] sm:$0xff]
      %v1333 = vld [vmem:[#allocation3 + $0x7f0] sm:$0xff]
      %v1334 = vld [vmem:[#allocation3 + $0x7f8] sm:$0xff]
      %v1335 = vld [vmem:[#allocation3 + $0x800] sm:$0xff]
      %v1336 = vld [vmem:[#allocation3 + $0x808] sm:$0xff]
      %v1337 = vld [vmem:[#allocation3 + $0x810] sm:$0xff]
      %v1338 = vld [vmem:[#allocation3 + $0x818] sm:$0xff]
      %v1339 = vld [vmem:[#allocation3 + $0x820] sm:$0xff]
      %v1340 = vld [vmem:[#allocation3 + $0x828] sm:$0xff]
      %v1341 = vld [vmem:[#allocation3 + $0x830] sm:$0xff]
      %v1342 = vld [vmem:[#allocation3 + $0x838] sm:$0xff]
      %v1343 = vld [vmem:[#allocation3 + $0x840] sm:$0xff]
      %v1344 = vld [vmem:[#allocation3 + $0x848] sm:$0xff]
      %v1345 = vld [vmem:[#allocation3 + $0x850] sm:$0xff]
      %v1346 = vld [vmem:[#allocation3 + $0x858] sm:$0xff]
      %v1347 = vld [vmem:[#allocation3 + $0x860] sm:$0xff]
      %v1348 = vld [vmem:[#allocation3 + $0x868] sm:$0xff]
      %v1349 = vld [vmem:[#allocation3 + $0x870] sm:$0xff]
      %v1350 = vld [vmem:[#allocation3 + $0x878] sm:$0xff]
      %v1351 = vld [vmem:[#allocation3 + $0x880] sm:$0xff]
      %v1352 = vld [vmem:[#allocation3 + $0x888] sm:$0xff]
      %v1353 = vld [vmem:[#allocation3 + $0x890] sm:$0xff]
      %v1354 = vld [vmem:[#allocation3 + $0x898] sm:$0xff]
      %v1355 = vld [vmem:[#allocation3 + $0x8a0] sm:$0xff]
      %v1356 = vld [vmem:[#allocation3 + $0x8a8] sm:$0xff]
      %v1357 = vld [vmem:[#allocation3 + $0x8b0] sm:$0xff]
      %v1358 = vld [vmem:[#allocation3 + $0x8b8] sm:$0xff]
      %v1359 = vld [vmem:[#allocation3 + $0x8c0] sm:$0xff]
      %v1360 = vld [vmem:[#allocation3 + $0x8c8] sm:$0xff]
      %v1361 = vld [vmem:[#allocation3 + $0x8d0] sm:$0xff]
      %v1362 = vld [vmem:[#allocation3 + $0x8d8] sm:$0xff]
      %v1363 = vld [vmem:[#allocation3 + $0x8e0] sm:$0xff]
      %v1364 = vld [vmem:[#allocation3 + $0x8e8] sm:$0xff]
      %v1365 = vld [vmem:[#allocation3 + $0x8f0] sm:$0xff]
      %v1366 = vld [vmem:[#allocation3 + $0x8f8] sm:$0xff]
      %v1367 = vld [vmem:[%s4] sm:$0xff]
      %v1368 = vld [vmem:[%s4 + $0x8] sm:$0xff]
      %v1369 = vld [vmem:[%s4 + $0x10] sm:$0xff]
      %v1370 = vld [vmem:[%s4 + $0x18] sm:$0xff]
      %v1371 = vld [vmem:[%s4 + $0x20] sm:$0xff]
      %v1372 = vld [vmem:[%s4 + $0x28] sm:$0xff]
      %v1373 = vld [vmem:[%s4 + $0x30] sm:$0xff]
      %v1374 = vld [vmem:[%s4 + $0x38] sm:$0xff]
      %v1375 = vld [vmem:[%s4 + $0x40] sm:$0xff]
      %v1376 = vld [vmem:[%s4 + $0x48] sm:$0xff]
      %v1377 = vld [vmem:[%s4 + $0x50] sm:$0xff]
      %v1378 = vld [vmem:[%s4 + $0x58] sm:$0xff]
      %v1379 = vld [vmem:[%s4 + $0x60] sm:$0xff]
      %v1380 = vld [vmem:[%s4 + $0x68] sm:$0xff]
      %v1381 = vld [vmem:[%s4 + $0x70] sm:$0xff]
      %v1382 = vld [vmem:[%s4 + $0x78] sm:$0xff]
      %v1383 = vld [vmem:[%s4 + $0x80] sm:$0xff]
      %v1384 = vld [vmem:[%s4 + $0x88] sm:$0xff]
      %v1385 = vld [vmem:[%s4 + $0x90] sm:$0xff]
      %v1386 = vld [vmem:[%s4 + $0x98] sm:$0xff]
      %v1387 = vld [vmem:[%s4 + $0xa0] sm:$0xff]
      %v1388 = vld [vmem:[%s4 + $0xa8] sm:$0xff]
      %v1389 = vld [vmem:[%s4 + $0xb0] sm:$0xff]
      %v1390 = vld [vmem:[%s4 + $0xb8] sm:$0xff]
      %v1391 = vld [vmem:[%s4 + $0xc0] sm:$0xff]
      %v1392 = vld [vmem:[%s4 + $0xc8] sm:$0xff]
      %v1393 = vld [vmem:[%s4 + $0xd0] sm:$0xff]
      %v1394 = vld [vmem:[%s4 + $0xd8] sm:$0xff]
      %v1395 = vld [vmem:[%s4 + $0xe0] sm:$0xff]
      %v1396 = vld [vmem:[%s4 + $0xe8] sm:$0xff]
      %v1397 = vld [vmem:[%s4 + $0xf0] sm:$0xff]
      %v1398 = vld [vmem:[%s4 + $0xf8] sm:$0xff]
      %v1399 = vld [vmem:[%s4 + $0x100] sm:$0xff]
      %v1400 = vld [vmem:[%s4 + $0x108] sm:$0xff]
      %v1401 = vld [vmem:[%s4 + $0x110] sm:$0xff]
      %v1402 = vld [vmem:[%s4 + $0x118] sm:$0xff]
      %v1403 = vld [vmem:[%s4 + $0x120] sm:$0xff]
      %v1404 = vld [vmem:[%s4 + $0x128] sm:$0xff]
      %v1405 = vld [vmem:[%s4 + $0x130] sm:$0xff]
      %v1406 = vld [vmem:[%s4 + $0x138] sm:$0xff]
      %v1407 = vld [vmem:[%s4 + $0x140] sm:$0xff]
      %v1408 = vld [vmem:[%s4 + $0x148] sm:$0xff]
      %v1409 = vld [vmem:[%s4 + $0x150] sm:$0xff]
      %v1410 = vld [vmem:[%s4 + $0x158] sm:$0xff]
      %v1411 = vld [vmem:[%s4 + $0x160] sm:$0xff]
      %v1412 = vld [vmem:[%s4 + $0x168] sm:$0xff]
      %v1413 = vld [vmem:[%s4 + $0x170] sm:$0xff]
      %v1414 = vld [vmem:[%s4 + $0x178] sm:$0xff]
      %v1415 = vld [vmem:[%s4 + $0x180] sm:$0xff]
      %v1416 = vld [vmem:[%s4 + $0x188] sm:$0xff]
      %v1417 = vld [vmem:[%s4 + $0x190] sm:$0xff]
      %v1418 = vld [vmem:[%s4 + $0x198] sm:$0xff]
      %v1419 = vld [vmem:[%s4 + $0x1a0] sm:$0xff]
      %v1420 = vld [vmem:[%s4 + $0x1a8] sm:$0xff]
      %v1421 = vld [vmem:[%s4 + $0x1b0] sm:$0xff]
      %v1422 = vld [vmem:[%s4 + $0x1b8] sm:$0xff]
      %v1423 = vld [vmem:[%s4 + $0x1c0] sm:$0xff]
      %v1424 = vld [vmem:[%s4 + $0x1c8] sm:$0xff]
      %v1425 = vld [vmem:[%s4 + $0x1d0] sm:$0xff]
      %v1426 = vld [vmem:[%s4 + $0x1d8] sm:$0xff]
      %v1427 = vld [vmem:[%s4 + $0x1e0] sm:$0xff]
      %v1428 = vld [vmem:[%s4 + $0x1e8] sm:$0xff]
      %v1429 = vld [vmem:[%s4 + $0x1f0] sm:$0xff]
      %v1430 = vld [vmem:[%s4 + $0x1f8] sm:$0xff]
      %v1431 = vld [vmem:[%s4 + $0x200] sm:$0xff]
      %v1432 = vld [vmem:[%s4 + $0x208] sm:$0xff]
      %v1433 = vld [vmem:[%s4 + $0x210] sm:$0xff]
      %v1434 = vld [vmem:[%s4 + $0x218] sm:$0xff]
      %v1435 = vld [vmem:[%s4 + $0x220] sm:$0xff]
      %v1436 = vld [vmem:[%s4 + $0x228] sm:$0xff]
      %v1437 = vld [vmem:[%s4 + $0x230] sm:$0xff]
      %v1438 = vld [vmem:[%s4 + $0x238] sm:$0xff]
      %v1439 = vld [vmem:[%s4 + $0x240] sm:$0xff]
      %v1440 = vld [vmem:[%s4 + $0x248] sm:$0xff]
      %v1441 = vld [vmem:[%s4 + $0x250] sm:$0xff]
      %v1442 = vld [vmem:[%s4 + $0x258] sm:$0xff]
      %v1443 = vld [vmem:[%s4 + $0x260] sm:$0xff]
      %v1444 = vld [vmem:[%s4 + $0x268] sm:$0xff]
      %v1445 = vld [vmem:[%s4 + $0x270] sm:$0xff]
      %v1446 = vld [vmem:[%s4 + $0x278] sm:$0xff]
      %v1447 = vld [vmem:[%s4 + $0x280] sm:$0xff]
      %v1448 = vld [vmem:[%s4 + $0x288] sm:$0xff]
      %v1449 = vld [vmem:[%s4 + $0x290] sm:$0xff]
      %v1450 = vld [vmem:[%s4 + $0x298] sm:$0xff]
      %v1451 = vld [vmem:[%s4 + $0x2a0] sm:$0xff]
      %v1452 = vld [vmem:[%s4 + $0x2a8] sm:$0xff]
      %v1453 = vld [vmem:[%s4 + $0x2b0] sm:$0xff]
      %v1454 = vld [vmem:[%s4 + $0x2b8] sm:$0xff]
      %v1455 = vld [vmem:[%s4 + $0x2c0] sm:$0xff]
      %v1456 = vld [vmem:[%s4 + $0x2c8] sm:$0xff]
      %v1457 = vld [vmem:[%s4 + $0x2d0] sm:$0xff]
      %v1458 = vld [vmem:[%s4 + $0x2d8] sm:$0xff]
      %v1459 = vld [vmem:[%s4 + $0x2e0] sm:$0xff]
      %v1460 = vld [vmem:[%s4 + $0x2e8] sm:$0xff]
      %v1461 = vld [vmem:[%s4 + $0x2f0] sm:$0xff]
      %v1462 = vld [vmem:[%s4 + $0x2f8] sm:$0xff]
      %v1463 = vld [vmem:[%s4 + $0x300] sm:$0xff]
      %v1464 = vld [vmem:[%s4 + $0x308] sm:$0xff]
      %v1465 = vld [vmem:[%s4 + $0x310] sm:$0xff]
      %v1466 = vld [vmem:[%s4 + $0x318] sm:$0xff]
      %v1467 = vld [vmem:[%s4 + $0x320] sm:$0xff]
      %v1468 = vld [vmem:[%s4 + $0x328] sm:$0xff]
      %v1469 = vld [vmem:[%s4 + $0x330] sm:$0xff]
      %v1470 = vld [vmem:[%s4 + $0x338] sm:$0xff]
      %v1471 = vld [vmem:[%s4 + $0x340] sm:$0xff]
      %v1472 = vld [vmem:[%s4 + $0x348] sm:$0xff]
      %v1473 = vld [vmem:[%s4 + $0x350] sm:$0xff]
      %v1474 = vld [vmem:[%s4 + $0x358] sm:$0xff]
      %v1475 = vld [vmem:[%s4 + $0x360] sm:$0xff]
      %v1476 = vld [vmem:[%s4 + $0x368] sm:$0xff]
      %v1477 = vld [vmem:[%s4 + $0x370] sm:$0xff]
      %v1478 = vld [vmem:[%s4 + $0x378] sm:$0xff]
      %v1479 = vld [vmem:[%s4 + $0x380] sm:$0xff]
      %v1480 = vld [vmem:[%s4 + $0x388] sm:$0xff]
      %v1481 = vld [vmem:[%s4 + $0x390] sm:$0xff]
      %v1482 = vld [vmem:[%s4 + $0x398] sm:$0xff]
      %v1483 = vld [vmem:[%s4 + $0x3a0] sm:$0xff]
      %v1484 = vld [vmem:[%s4 + $0x3a8] sm:$0xff]
      %v1485 = vld [vmem:[%s4 + $0x3b0] sm:$0xff]
      %v1486 = vld [vmem:[%s4 + $0x3b8] sm:$0xff]
      %v1487 = vld [vmem:[%s4 + $0x3c0] sm:$0xff]
      %v1488 = vld [vmem:[%s4 + $0x3c8] sm:$0xff]
      %v1489 = vld [vmem:[%s4 + $0x3d0] sm:$0xff]
      %v1490 = vld [vmem:[%s4 + $0x3d8] sm:$0xff]
      %v1491 = vld [vmem:[%s4 + $0x3e0] sm:$0xff]
      %v1492 = vld [vmem:[%s4 + $0x3e8] sm:$0xff]
      %v1493 = vld [vmem:[%s4 + $0x3f0] sm:$0xff]
      %v1494 = vld [vmem:[%s4 + $0x3f8] sm:$0xff]
      %v1495 = vld [vmem:[%s4 + $0x400] sm:$0xff]
      %v1496 = vld [vmem:[%s4 + $0x408] sm:$0xff]
      %v1497 = vld [vmem:[%s4 + $0x410] sm:$0xff]
      %v1498 = vld [vmem:[%s4 + $0x418] sm:$0xff]
      %v1499 = vld [vmem:[%s4 + $0x420] sm:$0xff]
      %v1500 = vld [vmem:[%s4 + $0x428] sm:$0xff]
      %v1501 = vld [vmem:[%s4 + $0x430] sm:$0xff]
      %v1502 = vld [vmem:[%s4 + $0x438] sm:$0xff]
      %v1503 = vld [vmem:[%s4 + $0x440] sm:$0xff]
      %v1504 = vld [vmem:[%s4 + $0x448] sm:$0xff]
      %v1505 = vld [vmem:[%s4 + $0x450] sm:$0xff]
      %v1506 = vld [vmem:[%s4 + $0x458] sm:$0xff]
      %v1507 = vld [vmem:[%s4 + $0x460] sm:$0xff]
      %v1508 = vld [vmem:[%s4 + $0x468] sm:$0xff]
      %v1509 = vld [vmem:[%s4 + $0x470] sm:$0xff]
      %v1510 = vld [vmem:[%s4 + $0x478] sm:$0xff]
      %1511 = vmatprep.subr.mxu0 0.0
      %1512 = vmatpush1.msra.mxu0 %v1367
      %1513 = vmatprep.subr.mxu0 0.0
      %1514 = vmatpush1.msra.mxu0 %v1368
      %1515 = vmatprep.subr.mxu0 0.0
      %1516 = vmatpush1.msra.mxu0 %v1369
      %1517 = vmatprep.subr.mxu0 0.0
      %1518 = vmatpush1.msra.mxu0 %v1370
      %1519 = vmatprep.subr.mxu0 0.0
      %1520 = vmatpush1.msra.mxu0 %v1371
      %1521 = vmatprep.subr.mxu0 0.0
      %1522 = vmatpush1.msra.mxu0 %v1372
      %1523 = vmatprep.subr.mxu0 0.0
      %1524 = vmatpush1.msra.mxu0 %v1373
      %1525 = vmatprep.subr.mxu0 0.0
      %1526 = vmatpush1.msra.mxu0 %v1374
      %1527 = vmatprep.subr.mxu0 0.0
      %1528 = vmatpush1.msra.mxu0 %v1375
      %1529 = vmatprep.subr.mxu0 0.0
      %1530 = vmatpush1.msra.mxu0 %v1376
      %1531 = vmatprep.subr.mxu0 0.0
      %1532 = vmatpush1.msra.mxu0 %v1377
      %1533 = vmatprep.subr.mxu0 0.0
      %1534 = vmatpush1.msra.mxu0 %v1378
      %1535 = vmatprep.subr.mxu0 0.0
      %1536 = vmatpush1.msra.mxu0 %v1379
      %1537 = vmatprep.subr.mxu0 0.0
      %1538 = vmatpush1.msra.mxu0 %v1380
      %1539 = vmatprep.subr.mxu0 0.0
      %1540 = vmatpush1.msra.mxu0 %v1381
      %1541 = vmatprep.subr.mxu0 0.0
      %1542 = vmatpush1.msra.mxu0 %v1382
      %1543 = vmatprep.subr.mxu0 0.0
      %1544 = vmatpush1.msra.mxu0 %v1383
      %1545 = vmatprep.subr.mxu0 0.0
      %1546 = vmatpush1.msra.mxu0 %v1384
      %1547 = vmatprep.subr.mxu0 0.0
      %1548 = vmatpush1.msra.mxu0 %v1385
      %1549 = vmatprep.subr.mxu0 0.0
      %1550 = vmatpush1.msra.mxu0 %v1386
      %1551 = vmatprep.subr.mxu0 0.0
      %1552 = vmatpush1.msra.mxu0 %v1387
      %1553 = vmatprep.subr.mxu0 0.0
      %1554 = vmatpush1.msra.mxu0 %v1388
      %1555 = vmatprep.subr.mxu0 0.0
      %1556 = vmatpush1.msra.mxu0 %v1389
      %1557 = vmatprep.subr.mxu0 0.0
      %1558 = vmatpush1.msra.mxu0 %v1390
      %1559 = vmatprep.subr.mxu0 0.0
      %1560 = vmatpush1.msra.mxu0 %v1391
      %1561 = vmatprep.subr.mxu0 0.0
      %1562 = vmatpush1.msra.mxu0 %v1392
      %1563 = vmatprep.subr.mxu0 0.0
      %1564 = vmatpush1.msra.mxu0 %v1393
      %1565 = vmatprep.subr.mxu0 0.0
      %1566 = vmatpush1.msra.mxu0 %v1394
      %1567 = vmatprep.subr.mxu0 0.0
      %1568 = vmatpush1.msra.mxu0 %v1395
      %1569 = vmatprep.subr.mxu0 0.0
      %1570 = vmatpush1.msra.mxu0 %v1396
      %1571 = vmatprep.subr.mxu0 0.0
      %1572 = vmatpush1.msra.mxu0 %v1397
      %1573 = vmatprep.subr.mxu0 0.0
      %1574 = vmatpush1.msra.mxu0 %v1398
      %1575 = vmatprep.mubr.f32.mxu0 %v1080
      %1576 = vmatmul.mubr.f32.gmra.mrb[0].mxu0 %v1079
      %v1577 = vpop.f32.mrb[0].mxu0
      %v1578 = vadd.f32 0.0, %v1577
      %v1579 = vpop.f32.mrb[0].mxu0
      %1580 = vmatprep.mubr.f32.mxu0 %v1089
      %1581 = vmatmul.mubr.f32.gmra.mrb[0].mxu0 %v1088
      %v1582 = vpop.f32.mrb[0].mxu0
      %v1583 = vadd.f32 0.0, %v1582
      %v1584 = vpop.f32.mrb[0].mxu0
      %1585 = vmatprep.mubr.f32.mxu0 %v1098
      %1586 = vmatmul.mubr.f32.gmra.mrb[0].mxu0 %v1097
      %v1587 = vpop.f32.mrb[0].mxu0
      %v1588 = vadd.f32 0.0, %v1587
      %v1589 = vpop.f32.mrb[0].mxu0
      %1590 = vmatprep.mubr.f32.mxu0 %v1107
      %1591 = vmatmul.mubr.f32.gmra.mrb[0].mxu0 %v1106
      %v1592 = vpop.f32.mrb[0].mxu0
      %v1593 = vadd.f32 0.0, %v1592
      %v1594 = vpop.f32.mrb[0].mxu0
      %1595 = vmatprep.mubr.f32.mxu0 %v1116
      %1596 = vmatmul.mubr.f32.gmra.mrb[0].mxu0 %v1115
      %v1597 = vpop.f32.mrb[0].mxu0
      %v1598 = vadd.f32 0.0, %v1597
      %v1599 = vpop.f32.mrb[0].mxu0
      %1600 = vmatprep.mubr.f32.mxu0 %v1125
      %1601 = vmatmul.mubr.f32.gmra.mrb[0].mxu0 %v1124
      %v1602 = vpop.f32.mrb[0].mxu0
      %v1603 = vadd.f32 0.0, %v1602
      %v1604 = vpop.f32.mrb[0].mxu0
      %1605 = vmatprep.mubr.f32.mxu0 %v1134
      %1606 = vmatmul.mubr.f32.gmra.mrb[0].mxu0 %v1133
      %v1607 = vpop.f32.mrb[0].mxu0
      %v1608 = vadd.f32 0.0, %v1607
      %v1609 = vpop.f32.mrb[0].mxu0
      %1610 = vmatprep.mubr.f32.mxu0 %v1143
      %1611 = vmatmul.mubr.f32.gmra.mrb[0].mxu0 %v1142
      %v1612 = vpop.f32.mrb[0].mxu0
      %v1613 = vadd.f32 0.0, %v1612
      %v1614 = vpop.f32.mrb[0].mxu0
      %1615 = vmatprep.mubr.f32.mxu0 %v1152
      %1616 = vmatmul.mubr.f32.gmra.mrb[0].mxu0 %v1151
      %v1617 = vpop.f32.mrb[0].mxu0
      %v1618 = vadd.f32 0.0, %v1617
      %v1619 = vpop.f32.mrb[0].mxu0
      %1620 = vmatprep.mubr.f32.mxu0 %v1161
      %1621 = vmatmul.mubr.f32.gmra.mrb[0].mxu0 %v1160
      %v1622 = vpop.f32.mrb[0].mxu0
      %v1623 = vadd.f32 0.0, %v1622
      %v1624 = vpop.f32.mrb[0].mxu0
      %1625 = vmatprep.mubr.f32.mxu0 %v1170
      %1626 = vmatmul.mubr.f32.gmra.mrb[0].mxu0 %v1169
      %v1627 = vpop.f32.mrb[0].mxu0
      %v1628 = vadd.f32 0.0, %v1627
      %v1629 = vpop.f32.mrb[0].mxu0
      %1630 = vmatprep.mubr.f32.mxu0 %v1179
      %1631 = vmatmul.mubr.f32.gmra.mrb[0].mxu0 %v1178
      %v1632 = vpop.f32.mrb[0].mxu0
      %v1633 = vadd.f32 0.0, %v1632
      %v1634 = vpop.f32.mrb[0].mxu0
      %1635 = vmatprep.mubr.f32.mxu0 %v1188
      %1636 = vmatmul.mubr.f32.gmra.mrb[0].mxu0 %v1187
      %v1637 = vpop.f32.mrb[0].mxu0
      %v1638 = vadd.f32 0.0, %v1637
      %v1639 = vpop.f32.mrb[0].mxu0
      %1640 = vmatprep.mubr.f32.mxu0 %v1197
      %1641 = vmatmul.mubr.f32.gmra.mrb[0].mxu0 %v1196
      %v1642 = vpop.f32.mrb[0].mxu0
      %v1643 = vadd.f32 0.0, %v1642
      %v1644 = vpop.f32.mrb[0].mxu0
      %1645 = vmatprep.mubr.f32.mxu0 %v1206
      %1646 = vmatmul.mubr.f32.gmra.mrb[0].mxu0 %v1205
      %v1647 = vpop.f32.mrb[0].mxu0
      %v1648 = vadd.f32 0.0, %v1647
      %v1649 = vpop.f32.mrb[0].mxu0
      %1650 = vmatprep.mubr.f32.mxu0 %v1215
      %1651 = vmatmul.mubr.f32.gmra.mrb[0].mxu0 %v1214
      %v1652 = vpop.f32.mrb[0].mxu0
      %v1653 = vadd.f32 0.0, %v1652
      %v1654 = vpop.f32.mrb[0].mxu0
      %1655 = vmatprep.mubr.f32.mxu0 %v1224
      %1656 = vmatmul.mubr.f32.gmra.mrb[0].mxu0 %v1223
      %v1657 = vpop.f32.mrb[0].mxu0
      %v1658 = vadd.f32 0.0, %v1657
      %v1659 = vpop.f32.mrb[0].mxu0
      %1660 = vmatprep.mubr.f32.mxu0 %v1233
      %1661 = vmatmul.mubr.f32.gmra.mrb[0].mxu0 %v1232
      %v1662 = vpop.f32.mrb[0].mxu0
      %v1663 = vadd.f32 0.0, %v1662
      %v1664 = vpop.f32.mrb[0].mxu0
      %1665 = vmatprep.mubr.f32.mxu0 %v1242
      %1666 = vmatmul.mubr.f32.gmra.mrb[0].mxu0 %v1241
      %v1667 = vpop.f32.mrb[0].mxu0
      %v1668 = vadd.f32 0.0, %v1667
      %v1669 = vpop.f32.mrb[0].mxu0
      %1670 = vmatprep.mubr.f32.mxu0 %v1251
      %1671 = vmatmul.mubr.f32.gmra.mrb[0].mxu0 %v1250
      %v1672 = vpop.f32.mrb[0].mxu0
      %v1673 = vadd.f32 0.0, %v1672
      %v1674 = vpop.f32.mrb[0].mxu0
      %1675 = vmatprep.mubr.f32.mxu0 %v1260
      %1676 = vmatmul.mubr.f32.gmra.mrb[0].mxu0 %v1259
      %v1677 = vpop.f32.mrb[0].mxu0
      %v1678 = vadd.f32 0.0, %v1677
      %v1679 = vpop.f32.mrb[0].mxu0
      %1680 = vmatprep.mubr.f32.mxu0 %v1269
      %1681 = vmatmul.mubr.f32.gmra.mrb[0].mxu0 %v1268
      %v1682 = vpop.f32.mrb[0].mxu0
      %v1683 = vadd.f32 0.0, %v1682
      %v1684 = vpop.f32.mrb[0].mxu0
      %1685 = vmatprep.mubr.f32.mxu0 %v1278
      %1686 = vmatmul.mubr.f32.gmra.mrb[0].mxu0 %v1277
      %v1687 = vpop.f32.mrb[0].mxu0
      %v1688 = vadd.f32 0.0, %v1687
      %v1689 = vpop.f32.mrb[0].mxu0
      %1690 = vmatprep.mubr.f32.mxu0 %v1287
      %1691 = vmatmul.mubr.f32.gmra.mrb[0].mxu0 %v1286
      %v1692 = vpop.f32.mrb[0].mxu0
      %v1693 = vadd.f32 0.0, %v1692
      %v1694 = vpop.f32.mrb[0].mxu0
      %1695 = vmatprep.mubr.f32.mxu0 %v1296
      %1696 = vmatmul.mubr.f32.gmra.mrb[0].mxu0 %v1295
      %v1697 = vpop.f32.mrb[0].mxu0
      %v1698 = vadd.f32 0.0, %v1697
      %v1699 = vpop.f32.mrb[0].mxu0
      %1700 = vmatprep.mubr.f32.mxu0 %v1305
      %1701 = vmatmul.mubr.f32.gmra.mrb[0].mxu0 %v1304
      %v1702 = vpop.f32.mrb[0].mxu0
      %v1703 = vadd.f32 0.0, %v1702
      %v1704 = vpop.f32.mrb[0].mxu0
      %1705 = vmatprep.mubr.f32.mxu0 %v1314
      %1706 = vmatmul.mubr.f32.gmra.mrb[0].mxu0 %v1313
      %v1707 = vpop.f32.mrb[0].mxu0
      %v1708 = vadd.f32 0.0, %v1707
      %v1709 = vpop.f32.mrb[0].mxu0
      %1710 = vmatprep.mubr.f32.mxu0 %v1323
      %1711 = vmatmul.mubr.f32.gmra.mrb[0].mxu0 %v1322
      %v1712 = vpop.f32.mrb[0].mxu0
      %v1713 = vadd.f32 0.0, %v1712
      %v1714 = vpop.f32.mrb[0].mxu0
      %1715 = vmatprep.mubr.f32.mxu0 %v1332
      %1716 = vmatmul.mubr.f32.gmra.mrb[0].mxu0 %v1331
      %v1717 = vpop.f32.mrb[0].mxu0
      %v1718 = vadd.f32 0.0, %v1717
      %v1719 = vpop.f32.mrb[0].mxu0
      %1720 = vmatprep.mubr.f32.mxu0 %v1341
      %1721 = vmatmul.mubr.f32.gmra.mrb[0].mxu0 %v1340
      %v1722 = vpop.f32.mrb[0].mxu0
      %v1723 = vadd.f32 0.0, %v1722
      %v1724 = vpop.f32.mrb[0].mxu0
      %1725 = vmatprep.mubr.f32.mxu0 %v1350
      %1726 = vmatmul.mubr.f32.gmra.mrb[0].mxu0 %v1349
      %v1727 = vpop.f32.mrb[0].mxu0
      %v1728 = vadd.f32 0.0, %v1727
      %v1729 = vpop.f32.mrb[0].mxu0
      %1730 = vmatprep.mubr.f32.mxu0 %v1359
      %1731 = vmatmul.mubr.f32.gmra.mrb[0].mxu0 %v1358
      %v1732 = vpop.f32.mrb[0].mxu0
      %v1733 = vadd.f32 0.0, %v1732
      %v1734 = vpop.f32.mrb[0].mxu0
      %1735 = vdwg.mxu0
      %1736 = vmatprep.subr.mxu0 0.0
      %1737 = vmatpush1.msra.mxu0 %v1399
      %1738 = vmatprep.subr.mxu0 0.0
      %1739 = vmatpush1.msra.mxu0 %v1400
      %1740 = vmatprep.subr.mxu0 0.0
      %1741 = vmatpush1.msra.mxu0 %v1401
      %1742 = vmatprep.subr.mxu0 0.0
      %1743 = vmatpush1.msra.mxu0 %v1402
      %1744 = vmatprep.subr.mxu0 0.0
      %1745 = vmatpush1.msra.mxu0 %v1403
      %1746 = vmatprep.subr.mxu0 0.0
      %1747 = vmatpush1.msra.mxu0 %v1404
      %1748 = vmatprep.subr.mxu0 0.0
      %1749 = vmatpush1.msra.mxu0 %v1405
      %1750 = vmatprep.subr.mxu0 0.0
      %1751 = vmatpush1.msra.mxu0 %v1406
      %1752 = vmatprep.subr.mxu0 0.0
      %1753 = vmatpush1.msra.mxu0 %v1407
      %1754 = vmatprep.subr.mxu0 0.0
      %1755 = vmatpush1.msra.mxu0 %v1408
      %1756 = vmatprep.subr.mxu0 0.0
      %1757 = vmatpush1.msra.mxu0 %v1409
      %1758 = vmatprep.subr.mxu0 0.0
      %1759 = vmatpush1.msra.mxu0 %v1410
      %1760 = vmatprep.subr.mxu0 0.0
      %1761 = vmatpush1.msra.mxu0 %v1411
      %1762 = vmatprep.subr.mxu0 0.0
      %1763 = vmatpush1.msra.mxu0 %v1412
      %1764 = vmatprep.subr.mxu0 0.0
      %1765 = vmatpush1.msra.mxu0 %v1413
      %1766 = vmatprep.subr.mxu0 0.0
      %1767 = vmatpush1.msra.mxu0 %v1414
      %1768 = vmatprep.subr.mxu0 0.0
      %1769 = vmatpush1.msra.mxu0 %v1415
      %1770 = vmatprep.subr.mxu0 0.0
      %1771 = vmatpush1.msra.mxu0 %v1416
      %1772 = vmatprep.subr.mxu0 0.0
      %1773 = vmatpush1.msra.mxu0 %v1417
      %1774 = vmatprep.subr.mxu0 0.0
      %1775 = vmatpush1.msra.mxu0 %v1418
      %1776 = vmatprep.subr.mxu0 0.0
      %1777 = vmatpush1.msra.mxu0 %v1419
      %1778 = vmatprep.subr.mxu0 0.0
      %1779 = vmatpush1.msra.mxu0 %v1420
      %1780 = vmatprep.subr.mxu0 0.0
      %1781 = vmatpush1.msra.mxu0 %v1421
      %1782 = vmatprep.subr.mxu0 0.0
      %1783 = vmatpush1.msra.mxu0 %v1422
      %1784 = vmatprep.subr.mxu0 0.0
      %1785 = vmatpush1.msra.mxu0 %v1423
      %1786 = vmatprep.subr.mxu0 0.0
      %1787 = vmatpush1.msra.mxu0 %v1424
      %1788 = vmatprep.subr.mxu0 0.0
      %1789 = vmatpush1.msra.mxu0 %v1425
      %1790 = vmatprep.subr.mxu0 0.0
      %1791 = vmatpush1.msra.mxu0 %v1426
      %1792 = vmatprep.subr.mxu0 0.0
      %1793 = vmatpush1.msra.mxu0 %v1427
      %1794 = vmatprep.subr.mxu0 0.0
      %1795 = vmatpush1.msra.mxu0 %v1428
      %1796 = vmatprep.subr.mxu0 0.0
      %1797 = vmatpush1.msra.mxu0 %v1429
      %1798 = vmatprep.subr.mxu0 0.0
      %1799 = vmatpush1.msra.mxu0 %v1430
      %1800 = vmatprep.mubr.f32.mxu0 %v1082
      %1801 = vmatmul.mubr.f32.gmra.mrb[0].mxu0 %v1081
      %v1802 = vpop.f32.mrb[0].mxu0
      %v1803 = vadd.f32 %v1578, %v1802
      %v1804 = vpop.f32.mrb[0].mxu0
      %1805 = vmatprep.mubr.f32.mxu0 %v1091
      %1806 = vmatmul.mubr.f32.gmra.mrb[0].mxu0 %v1090
      %v1807 = vpop.f32.mrb[0].mxu0
      %v1808 = vadd.f32 %v1583, %v1807
      %v1809 = vpop.f32.mrb[0].mxu0
      %1810 = vmatprep.mubr.f32.mxu0 %v1100
      %1811 = vmatmul.mubr.f32.gmra.mrb[0].mxu0 %v1099
      %v1812 = vpop.f32.mrb[0].mxu0
      %v1813 = vadd.f32 %v1588, %v1812
      %v1814 = vpop.f32.mrb[0].mxu0
      %1815 = vmatprep.mubr.f32.mxu0 %v1109
      %1816 = vmatmul.mubr.f32.gmra.mrb[0].mxu0 %v1108
      %v1817 = vpop.f32.mrb[0].mxu0
      %v1818 = vadd.f32 %v1593, %v1817
      %v1819 = vpop.f32.mrb[0].mxu0
      %1820 = vmatprep.mubr.f32.mxu0 %v1118
      %1821 = vmatmul.mubr.f32.gmra.mrb[0].mxu0 %v1117
      %v1822 = vpop.f32.mrb[0].mxu0
      %v1823 = vadd.f32 %v1598, %v1822
      %v1824 = vpop.f32.mrb[0].mxu0
      %1825 = vmatprep.mubr.f32.mxu0 %v1127
      %1826 = vmatmul.mubr.f32.gmra.mrb[0].mxu0 %v1126
      %v1827 = vpop.f32.mrb[0].mxu0
      %v1828 = vadd.f32 %v1603, %v1827
      %v1829 = vpop.f32.mrb[0].mxu0
      %1830 = vmatprep.mubr.f32.mxu0 %v1136
      %1831 = vmatmul.mubr.f32.gmra.mrb[0].mxu0 %v1135
      %v1832 = vpop.f32.mrb[0].mxu0
      %v1833 = vadd.f32 %v1608, %v1832
      %v1834 = vpop.f32.mrb[0].mxu0
      %1835 = vmatprep.mubr.f32.mxu0 %v1145
      %1836 = vmatmul.mubr.f32.gmra.mrb[0].mxu0 %v1144
      %v1837 = vpop.f32.mrb[0].mxu0
      %v1838 = vadd.f32 %v1613, %v1837
      %v1839 = vpop.f32.mrb[0].mxu0
      %1840 = vmatprep.mubr.f32.mxu0 %v1154
      %1841 = vmatmul.mubr.f32.gmra.mrb[0].mxu0 %v1153
      %v1842 = vpop.f32.mrb[0].mxu0
      %v1843 = vadd.f32 %v1618, %v1842
      %v1844 = vpop.f32.mrb[0].mxu0
      %1845 = vmatprep.mubr.f32.mxu0 %v1163
      %1846 = vmatmul.mubr.f32.gmra.mrb[0].mxu0 %v1162
      %v1847 = vpop.f32.mrb[0].mxu0
      %v1848 = vadd.f32 %v1623, %v1847
      %v1849 = vpop.f32.mrb[0].mxu0
      %1850 = vmatprep.mubr.f32.mxu0 %v1172
      %1851 = vmatmul.mubr.f32.gmra.mrb[0].mxu0 %v1171
      %v1852 = vpop.f32.mrb[0].mxu0
      %v1853 = vadd.f32 %v1628, %v1852
      %v1854 = vpop.f32.mrb[0].mxu0
      %1855 = vmatprep.mubr.f32.mxu0 %v1181
      %1856 = vmatmul.mubr.f32.gmra.mrb[0].mxu0 %v1180
      %v1857 = vpop.f32.mrb[0].mxu0
      %v1858 = vadd.f32 %v1633, %v1857
      %v1859 = vpop.f32.mrb[0].mxu0
      %1860 = vmatprep.mubr.f32.mxu0 %v1190
      %1861 = vmatmul.mubr.f32.gmra.mrb[0].mxu0 %v1189
      %v1862 = vpop.f32.mrb[0].mxu0
      %v1863 = vadd.f32 %v1638, %v1862
      %v1864 = vpop.f32.mrb[0].mxu0
      %1865 = vmatprep.mubr.f32.mxu0 %v1199
      %1866 = vmatmul.mubr.f32.gmra.mrb[0].mxu0 %v1198
      %v1867 = vpop.f32.mrb[0].mxu0
      %v1868 = vadd.f32 %v1643, %v1867
      %v1869 = vpop.f32.mrb[0].mxu0
      %1870 = vmatprep.mubr.f32.mxu0 %v1208
      %1871 = vmatmul.mubr.f32.gmra.mrb[0].mxu0 %v1207
      %v1872 = vpop.f32.mrb[0].mxu0
      %v1873 = vadd.f32 %v1648, %v1872
      %v1874 = vpop.f32.mrb[0].mxu0
      %1875 = vmatprep.mubr.f32.mxu0 %v1217
      %1876 = vmatmul.mubr.f32.gmra.mrb[0].mxu0 %v1216
      %v1877 = vpop.f32.mrb[0].mxu0
      %v1878 = vadd.f32 %v1653, %v1877
      %v1879 = vpop.f32.mrb[0].mxu0
      %1880 = vmatprep.mubr.f32.mxu0 %v1226
      %1881 = vmatmul.mubr.f32.gmra.mrb[0].mxu0 %v1225
      %v1882 = vpop.f32.mrb[0].mxu0
      %v1883 = vadd.f32 %v1658, %v1882
      %v1884 = vpop.f32.mrb[0].mxu0
      %1885 = vmatprep.mubr.f32.mxu0 %v1235
      %1886 = vmatmul.mubr.f32.gmra.mrb[0].mxu0 %v1234
      %v1887 = vpop.f32.mrb[0].mxu0
      %v1888 = vadd.f32 %v1663, %v1887
      %v1889 = vpop.f32.mrb[0].mxu0
      %1890 = vmatprep.mubr.f32.mxu0 %v1244
      %1891 = vmatmul.mubr.f32.gmra.mrb[0].mxu0 %v1243
      %v1892 = vpop.f32.mrb[0].mxu0
      %v1893 = vadd.f32 %v1668, %v1892
      %v1894 = vpop.f32.mrb[0].mxu0
      %1895 = vmatprep.mubr.f32.mxu0 %v1253
      %1896 = vmatmul.mubr.f32.gmra.mrb[0].mxu0 %v1252
      %v1897 = vpop.f32.mrb[0].mxu0
      %v1898 = vadd.f32 %v1673, %v1897
      %v1899 = vpop.f32.mrb[0].mxu0
      %1900 = vmatprep.mubr.f32.mxu0 %v1262
      %1901 = vmatmul.mubr.f32.gmra.mrb[0].mxu0 %v1261
      %v1902 = vpop.f32.mrb[0].mxu0
      %v1903 = vadd.f32 %v1678, %v1902
      %v1904 = vpop.f32.mrb[0].mxu0
      %1905 = vmatprep.mubr.f32.mxu0 %v1271
      %1906 = vmatmul.mubr.f32.gmra.mrb[0].mxu0 %v1270
      %v1907 = vpop.f32.mrb[0].mxu0
      %v1908 = vadd.f32 %v1683, %v1907
      %v1909 = vpop.f32.mrb[0].mxu0
      %1910 = vmatprep.mubr.f32.mxu0 %v1280
      %1911 = vmatmul.mubr.f32.gmra.mrb[0].mxu0 %v1279
      %v1912 = vpop.f32.mrb[0].mxu0
      %v1913 = vadd.f32 %v1688, %v1912
      %v1914 = vpop.f32.mrb[0].mxu0
      %1915 = vmatprep.mubr.f32.mxu0 %v1289
      %1916 = vmatmul.mubr.f32.gmra.mrb[0].mxu0 %v1288
      %v1917 = vpop.f32.mrb[0].mxu0
      %v1918 = vadd.f32 %v1693, %v1917
      %v1919 = vpop.f32.mrb[0].mxu0
      %1920 = vmatprep.mubr.f32.mxu0 %v1298
      %1921 = vmatmul.mubr.f32.gmra.mrb[0].mxu0 %v1297
      %v1922 = vpop.f32.mrb[0].mxu0
      %v1923 = vadd.f32 %v1698, %v1922
      %v1924 = vpop.f32.mrb[0].mxu0
      %1925 = vmatprep.mubr.f32.mxu0 %v1307
      %1926 = vmatmul.mubr.f32.gmra.mrb[0].mxu0 %v1306
      %v1927 = vpop.f32.mrb[0].mxu0
      %v1928 = vadd.f32 %v1703, %v1927
      %v1929 = vpop.f32.mrb[0].mxu0
      %1930 = vmatprep.mubr.f32.mxu0 %v1316
      %1931 = vmatmul.mubr.f32.gmra.mrb[0].mxu0 %v1315
      %v1932 = vpop.f32.mrb[0].mxu0
      %v1933 = vadd.f32 %v1708, %v1932
      %v1934 = vpop.f32.mrb[0].mxu0
      %1935 = vmatprep.mubr.f32.mxu0 %v1325
      %1936 = vmatmul.mubr.f32.gmra.mrb[0].mxu0 %v1324
      %v1937 = vpop.f32.mrb[0].mxu0
      %v1938 = vadd.f32 %v1713, %v1937
      %v1939 = vpop.f32.mrb[0].mxu0
      %1940 = vmatprep.mubr.f32.mxu0 %v1334
      %1941 = vmatmul.mubr.f32.gmra.mrb[0].mxu0 %v1333
      %v1942 = vpop.f32.mrb[0].mxu0
      %v1943 = vadd.f32 %v1718, %v1942
      %v1944 = vpop.f32.mrb[0].mxu0
      %1945 = vmatprep.mubr.f32.mxu0 %v1343
      %1946 = vmatmul.mubr.f32.gmra.mrb[0].mxu0 %v1342
      %v1947 = vpop.f32.mrb[0].mxu0
      %v1948 = vadd.f32 %v1723, %v1947
      %v1949 = vpop.f32.mrb[0].mxu0
      %1950 = vmatprep.mubr.f32.mxu0 %v1352
      %1951 = vmatmul.mubr.f32.gmra.mrb[0].mxu0 %v1351
      %v1952 = vpop.f32.mrb[0].mxu0
      %v1953 = vadd.f32 %v1728, %v1952
      %v1954 = vpop.f32.mrb[0].mxu0
      %1955 = vmatprep.mubr.f32.mxu0 %v1361
      %1956 = vmatmul.mubr.f32.gmra.mrb[0].mxu0 %v1360
      %v1957 = vpop.f32.mrb[0].mxu0
      %v1958 = vadd.f32 %v1733, %v1957
      %v1959 = vpop.f32.mrb[0].mxu0
      %1960 = vdwg.mxu0
      %1961 = vmatprep.subr.mxu0 0.0
      %1962 = vmatpush1.msra.mxu0 %v1431
      %1963 = vmatprep.subr.mxu0 0.0
      %1964 = vmatpush1.msra.mxu0 %v1432
      %1965 = vmatprep.subr.mxu0 0.0
      %1966 = vmatpush1.msra.mxu0 %v1433
      %1967 = vmatprep.subr.mxu0 0.0
      %1968 = vmatpush1.msra.mxu0 %v1434
      %1969 = vmatprep.subr.mxu0 0.0
      %1970 = vmatpush1.msra.mxu0 %v1435
      %1971 = vmatprep.subr.mxu0 0.0
      %1972 = vmatpush1.msra.mxu0 %v1436
      %1973 = vmatprep.subr.mxu0 0.0
      %1974 = vmatpush1.msra.mxu0 %v1437
      %1975 = vmatprep.subr.mxu0 0.0
      %1976 = vmatpush1.msra.mxu0 %v1438
      %1977 = vmatprep.subr.mxu0 0.0
      %1978 = vmatpush1.msra.mxu0 %v1439
      %1979 = vmatprep.subr.mxu0 0.0
      %1980 = vmatpush1.msra.mxu0 %v1440
      %1981 = vmatprep.subr.mxu0 0.0
      %1982 = vmatpush1.msra.mxu0 %v1441
      %1983 = vmatprep.subr.mxu0 0.0
      %1984 = vmatpush1.msra.mxu0 %v1442
      %1985 = vmatprep.subr.mxu0 0.0
      %1986 = vmatpush1.msra.mxu0 %v1443
      %1987 = vmatprep.subr.mxu0 0.0
      %1988 = vmatpush1.msra.mxu0 %v1444
      %1989 = vmatprep.subr.mxu0 0.0
      %1990 = vmatpush1.msra.mxu0 %v1445
      %1991 = vmatprep.subr.mxu0 0.0
      %1992 = vmatpush1.msra.mxu0 %v1446
      %1993 = vmatprep.subr.mxu0 0.0
      %1994 = vmatpush1.msra.mxu0 %v1447
      %1995 = vmatprep.subr.mxu0 0.0
      %1996 = vmatpush1.msra.mxu0 %v1448
      %1997 = vmatprep.subr.mxu0 0.0
      %1998 = vmatpush1.msra.mxu0 %v1449
      %1999 = vmatprep.subr.mxu0 0.0
      %2000 = vmatpush1.msra.mxu0 %v1450
      %2001 = vmatprep.subr.mxu0 0.0
      %2002 = vmatpush1.msra.mxu0 %v1451
      %2003 = vmatprep.subr.mxu0 0.0
      %2004 = vmatpush1.msra.mxu0 %v1452
      %2005 = vmatprep.subr.mxu0 0.0
      %2006 = vmatpush1.msra.mxu0 %v1453
      %2007 = vmatprep.subr.mxu0 0.0
      %2008 = vmatpush1.msra.mxu0 %v1454
      %2009 = vmatprep.subr.mxu0 0.0
      %2010 = vmatpush1.msra.mxu0 %v1455
      %2011 = vmatprep.subr.mxu0 0.0
      %2012 = vmatpush1.msra.mxu0 %v1456
      %2013 = vmatprep.subr.mxu0 0.0
      %2014 = vmatpush1.msra.mxu0 %v1457
      %2015 = vmatprep.subr.mxu0 0.0
      %2016 = vmatpush1.msra.mxu0 %v1458
      %2017 = vmatprep.subr.mxu0 0.0
      %2018 = vmatpush1.msra.mxu0 %v1459
      %2019 = vmatprep.subr.mxu0 0.0
      %2020 = vmatpush1.msra.mxu0 %v1460
      %2021 = vmatprep.subr.mxu0 0.0
      %2022 = vmatpush1.msra.mxu0 %v1461
      %2023 = vmatprep.subr.mxu0 0.0
      %2024 = vmatpush1.msra.mxu0 %v1462
      %2025 = vmatprep.mubr.f32.mxu0 %v1084
      %2026 = vmatmul.mubr.f32.gmra.mrb[0].mxu0 %v1083
      %v2027 = vpop.f32.mrb[0].mxu0
      %v2028 = vadd.f32 %v1803, %v2027
      %v2029 = vpop.f32.mrb[0].mxu0
      %2030 = vmatprep.mubr.f32.mxu0 %v1093
      %2031 = vmatmul.mubr.f32.gmra.mrb[0].mxu0 %v1092
      %v2032 = vpop.f32.mrb[0].mxu0
      %v2033 = vadd.f32 %v1808, %v2032
      %v2034 = vpop.f32.mrb[0].mxu0
      %2035 = vmatprep.mubr.f32.mxu0 %v1102
      %2036 = vmatmul.mubr.f32.gmra.mrb[0].mxu0 %v1101
      %v2037 = vpop.f32.mrb[0].mxu0
      %v2038 = vadd.f32 %v1813, %v2037
      %v2039 = vpop.f32.mrb[0].mxu0
      %2040 = vmatprep.mubr.f32.mxu0 %v1111
      %2041 = vmatmul.mubr.f32.gmra.mrb[0].mxu0 %v1110
      %v2042 = vpop.f32.mrb[0].mxu0
      %v2043 = vadd.f32 %v1818, %v2042
      %v2044 = vpop.f32.mrb[0].mxu0
      %2045 = vmatprep.mubr.f32.mxu0 %v1120
      %2046 = vmatmul.mubr.f32.gmra.mrb[0].mxu0 %v1119
      %v2047 = vpop.f32.mrb[0].mxu0
      %v2048 = vadd.f32 %v1823, %v2047
      %v2049 = vpop.f32.mrb[0].mxu0
      %2050 = vmatprep.mubr.f32.mxu0 %v1129
      %2051 = vmatmul.mubr.f32.gmra.mrb[0].mxu0 %v1128
      %v2052 = vpop.f32.mrb[0].mxu0
      %v2053 = vadd.f32 %v1828, %v2052
      %v2054 = vpop.f32.mrb[0].mxu0
      %2055 = vmatprep.mubr.f32.mxu0 %v1138
      %2056 = vmatmul.mubr.f32.gmra.mrb[0].mxu0 %v1137
      %v2057 = vpop.f32.mrb[0].mxu0
      %v2058 = vadd.f32 %v1833, %v2057
      %v2059 = vpop.f32.mrb[0].mxu0
      %2060 = vmatprep.mubr.f32.mxu0 %v1147
      %2061 = vmatmul.mubr.f32.gmra.mrb[0].mxu0 %v1146
      %v2062 = vpop.f32.mrb[0].mxu0
      %v2063 = vadd.f32 %v1838, %v2062
      %v2064 = vpop.f32.mrb[0].mxu0
      %2065 = vmatprep.mubr.f32.mxu0 %v1156
      %2066 = vmatmul.mubr.f32.gmra.mrb[0].mxu0 %v1155
      %v2067 = vpop.f32.mrb[0].mxu0
      %v2068 = vadd.f32 %v1843, %v2067
      %v2069 = vpop.f32.mrb[0].mxu0
      %2070 = vmatprep.mubr.f32.mxu0 %v1165
      %2071 = vmatmul.mubr.f32.gmra.mrb[0].mxu0 %v1164
      %v2072 = vpop.f32.mrb[0].mxu0
      %v2073 = vadd.f32 %v1848, %v2072
      %v2074 = vpop.f32.mrb[0].mxu0
      %2075 = vmatprep.mubr.f32.mxu0 %v1174
      %2076 = vmatmul.mubr.f32.gmra.mrb[0].mxu0 %v1173
      %v2077 = vpop.f32.mrb[0].mxu0
      %v2078 = vadd.f32 %v1853, %v2077
      %v2079 = vpop.f32.mrb[0].mxu0
      %2080 = vmatprep.mubr.f32.mxu0 %v1183
      %2081 = vmatmul.mubr.f32.gmra.mrb[0].mxu0 %v1182
      %v2082 = vpop.f32.mrb[0].mxu0
      %v2083 = vadd.f32 %v1858, %v2082
      %v2084 = vpop.f32.mrb[0].mxu0
      %2085 = vmatprep.mubr.f32.mxu0 %v1192
      %2086 = vmatmul.mubr.f32.gmra.mrb[0].mxu0 %v1191
      %v2087 = vpop.f32.mrb[0].mxu0
      %v2088 = vadd.f32 %v1863, %v2087
      %v2089 = vpop.f32.mrb[0].mxu0
      %2090 = vmatprep.mubr.f32.mxu0 %v1201
      %2091 = vmatmul.mubr.f32.gmra.mrb[0].mxu0 %v1200
      %v2092 = vpop.f32.mrb[0].mxu0
      %v2093 = vadd.f32 %v1868, %v2092
      %v2094 = vpop.f32.mrb[0].mxu0
      %2095 = vmatprep.mubr.f32.mxu0 %v1210
      %2096 = vmatmul.mubr.f32.gmra.mrb[0].mxu0 %v1209
      %v2097 = vpop.f32.mrb[0].mxu0
      %v2098 = vadd.f32 %v1873, %v2097
      %v2099 = vpop.f32.mrb[0].mxu0
      %2100 = vmatprep.mubr.f32.mxu0 %v1219
      %2101 = vmatmul.mubr.f32.gmra.mrb[0].mxu0 %v1218
      %v2102 = vpop.f32.mrb[0].mxu0
      %v2103 = vadd.f32 %v1878, %v2102
      %v2104 = vpop.f32.mrb[0].mxu0
      %2105 = vmatprep.mubr.f32.mxu0 %v1228
      %2106 = vmatmul.mubr.f32.gmra.mrb[0].mxu0 %v1227
      %v2107 = vpop.f32.mrb[0].mxu0
      %v2108 = vadd.f32 %v1883, %v2107
      %v2109 = vpop.f32.mrb[0].mxu0
      %2110 = vmatprep.mubr.f32.mxu0 %v1237
      %2111 = vmatmul.mubr.f32.gmra.mrb[0].mxu0 %v1236
      %v2112 = vpop.f32.mrb[0].mxu0
      %v2113 = vadd.f32 %v1888, %v2112
      %v2114 = vpop.f32.mrb[0].mxu0
      %2115 = vmatprep.mubr.f32.mxu0 %v1246
      %2116 = vmatmul.mubr.f32.gmra.mrb[0].mxu0 %v1245
      %v2117 = vpop.f32.mrb[0].mxu0
      %v2118 = vadd.f32 %v1893, %v2117
      %v2119 = vpop.f32.mrb[0].mxu0
      %2120 = vmatprep.mubr.f32.mxu0 %v1255
      %2121 = vmatmul.mubr.f32.gmra.mrb[0].mxu0 %v1254
      %v2122 = vpop.f32.mrb[0].mxu0
      %v2123 = vadd.f32 %v1898, %v2122
      %v2124 = vpop.f32.mrb[0].mxu0
      %2125 = vmatprep.mubr.f32.mxu0 %v1264
      %2126 = vmatmul.mubr.f32.gmra.mrb[0].mxu0 %v1263
      %v2127 = vpop.f32.mrb[0].mxu0
      %v2128 = vadd.f32 %v1903, %v2127
      %v2129 = vpop.f32.mrb[0].mxu0
      %2130 = vmatprep.mubr.f32.mxu0 %v1273
      %2131 = vmatmul.mubr.f32.gmra.mrb[0].mxu0 %v1272
      %v2132 = vpop.f32.mrb[0].mxu0
      %v2133 = vadd.f32 %v1908, %v2132
      %v2134 = vpop.f32.mrb[0].mxu0
      %2135 = vmatprep.mubr.f32.mxu0 %v1282
      %2136 = vmatmul.mubr.f32.gmra.mrb[0].mxu0 %v1281
      %v2137 = vpop.f32.mrb[0].mxu0
      %v2138 = vadd.f32 %v1913, %v2137
      %v2139 = vpop.f32.mrb[0].mxu0
      %2140 = vmatprep.mubr.f32.mxu0 %v1291
      %2141 = vmatmul.mubr.f32.gmra.mrb[0].mxu0 %v1290
      %v2142 = vpop.f32.mrb[0].mxu0
      %v2143 = vadd.f32 %v1918, %v2142
      %v2144 = vpop.f32.mrb[0].mxu0
      %2145 = vmatprep.mubr.f32.mxu0 %v1300
      %2146 = vmatmul.mubr.f32.gmra.mrb[0].mxu0 %v1299
      %v2147 = vpop.f32.mrb[0].mxu0
      %v2148 = vadd.f32 %v1923, %v2147
      %v2149 = vpop.f32.mrb[0].mxu0
      %2150 = vmatprep.mubr.f32.mxu0 %v1309
      %2151 = vmatmul.mubr.f32.gmra.mrb[0].mxu0 %v1308
      %v2152 = vpop.f32.mrb[0].mxu0
      %v2153 = vadd.f32 %v1928, %v2152
      %v2154 = vpop.f32.mrb[0].mxu0
      %2155 = vmatprep.mubr.f32.mxu0 %v1318
      %2156 = vmatmul.mubr.f32.gmra.mrb[0].mxu0 %v1317
      %v2157 = vpop.f32.mrb[0].mxu0
      %v2158 = vadd.f32 %v1933, %v2157
      %v2159 = vpop.f32.mrb[0].mxu0
      %2160 = vmatprep.mubr.f32.mxu0 %v1327
      %2161 = vmatmul.mubr.f32.gmra.mrb[0].mxu0 %v1326
      %v2162 = vpop.f32.mrb[0].mxu0
      %v2163 = vadd.f32 %v1938, %v2162
      %v2164 = vpop.f32.mrb[0].mxu0
      %2165 = vmatprep.mubr.f32.mxu0 %v1336
      %2166 = vmatmul.mubr.f32.gmra.mrb[0].mxu0 %v1335
      %v2167 = vpop.f32.mrb[0].mxu0
      %v2168 = vadd.f32 %v1943, %v2167
      %v2169 = vpop.f32.mrb[0].mxu0
      %2170 = vmatprep.mubr.f32.mxu0 %v1345
      %2171 = vmatmul.mubr.f32.gmra.mrb[0].mxu0 %v1344
      %v2172 = vpop.f32.mrb[0].mxu0
      %v2173 = vadd.f32 %v1948, %v2172
      %v2174 = vpop.f32.mrb[0].mxu0
      %2175 = vmatprep.mubr.f32.mxu0 %v1354
      %2176 = vmatmul.mubr.f32.gmra.mrb[0].mxu0 %v1353
      %v2177 = vpop.f32.mrb[0].mxu0
      %v2178 = vadd.f32 %v1953, %v2177
      %v2179 = vpop.f32.mrb[0].mxu0
      %2180 = vmatprep.mubr.f32.mxu0 %v1363
      %2181 = vmatmul.mubr.f32.gmra.mrb[0].mxu0 %v1362
      %v2182 = vpop.f32.mrb[0].mxu0
      %v2183 = vadd.f32 %v1958, %v2182
      %v2184 = vpop.f32.mrb[0].mxu0
      %2185 = vdwg.mxu0
      %2186 = vmatprep.subr.mxu0 0.0
      %2187 = vmatpush1.msra.mxu0 %v1463
      %2188 = vmatprep.subr.mxu0 0.0
      %2189 = vmatpush1.msra.mxu0 %v1464
      %2190 = vmatprep.subr.mxu0 0.0
      %2191 = vmatpush1.msra.mxu0 %v1465
      %2192 = vmatprep.subr.mxu0 0.0
      %2193 = vmatpush1.msra.mxu0 %v1466
      %2194 = vmatprep.subr.mxu0 0.0
      %2195 = vmatpush1.msra.mxu0 %v1467
      %2196 = vmatprep.subr.mxu0 0.0
      %2197 = vmatpush1.msra.mxu0 %v1468
      %2198 = vmatprep.subr.mxu0 0.0
      %2199 = vmatpush1.msra.mxu0 %v1469
      %2200 = vmatprep.subr.mxu0 0.0
      %2201 = vmatpush1.msra.mxu0 %v1470
      %2202 = vmatprep.subr.mxu0 0.0
      %2203 = vmatpush1.msra.mxu0 %v1471
      %2204 = vmatprep.subr.mxu0 0.0
      %2205 = vmatpush1.msra.mxu0 %v1472
      %2206 = vmatprep.subr.mxu0 0.0
      %2207 = vmatpush1.msra.mxu0 %v1473
      %2208 = vmatprep.subr.mxu0 0.0
      %2209 = vmatpush1.msra.mxu0 %v1474
      %2210 = vmatprep.subr.mxu0 0.0
      %2211 = vmatpush1.msra.mxu0 %v1475
      %2212 = vmatprep.subr.mxu0 0.0
      %2213 = vmatpush1.msra.mxu0 %v1476
      %2214 = vmatprep.subr.mxu0 0.0
      %2215 = vmatpush1.msra.mxu0 %v1477
      %2216 = vmatprep.subr.mxu0 0.0
      %2217 = vmatpush1.msra.mxu0 %v1478
      %2218 = vmatprep.subr.mxu0 0.0
      %2219 = vmatpush1.msra.mxu0 %v1479
      %2220 = vmatprep.subr.mxu0 0.0
      %2221 = vmatpush1.msra.mxu0 %v1480
      %2222 = vmatprep.subr.mxu0 0.0
      %2223 = vmatpush1.msra.mxu0 %v1481
      %2224 = vmatprep.subr.mxu0 0.0
      %2225 = vmatpush1.msra.mxu0 %v1482
      %2226 = vmatprep.subr.mxu0 0.0
      %2227 = vmatpush1.msra.mxu0 %v1483
      %2228 = vmatprep.subr.mxu0 0.0
      %2229 = vmatpush1.msra.mxu0 %v1484
      %2230 = vmatprep.subr.mxu0 0.0
      %2231 = vmatpush1.msra.mxu0 %v1485
      %2232 = vmatprep.subr.mxu0 0.0
      %2233 = vmatpush1.msra.mxu0 %v1486
      %2234 = vmatprep.subr.mxu0 0.0
      %2235 = vmatpush1.msra.mxu0 %v1487
      %2236 = vmatprep.subr.mxu0 0.0
      %2237 = vmatpush1.msra.mxu0 %v1488
      %2238 = vmatprep.subr.mxu0 0.0
      %2239 = vmatpush1.msra.mxu0 %v1489
      %2240 = vmatprep.subr.mxu0 0.0
      %2241 = vmatpush1.msra.mxu0 %v1490
      %2242 = vmatprep.subr.mxu0 0.0
      %2243 = vmatpush1.msra.mxu0 %v1491
      %2244 = vmatprep.subr.mxu0 0.0
      %2245 = vmatpush1.msra.mxu0 %v1492
      %2246 = vmatprep.subr.mxu0 0.0
      %2247 = vmatpush1.msra.mxu0 %v1493
      %2248 = vmatprep.subr.mxu0 0.0
      %2249 = vmatpush1.msra.mxu0 %v1494
      %2250 = vmatprep.mubr.f32.mxu0 %v1086
      %2251 = vmatmul.mubr.f32.gmra.mrb[0].mxu0 %v1085
      %v2252 = vpop.f32.mrb[0].mxu0
      %v2253 = vadd.f32 %v2028, %v2252
      %v2254 = vpop.f32.mrb[0].mxu0
      %2255 = vmatprep.mubr.f32.mxu0 %v1095
      %2256 = vmatmul.mubr.f32.gmra.mrb[0].mxu0 %v1094
      %v2257 = vpop.f32.mrb[0].mxu0
      %v2258 = vadd.f32 %v2033, %v2257
      %v2259 = vpop.f32.mrb[0].mxu0
      %2260 = vmatprep.mubr.f32.mxu0 %v1104
      %2261 = vmatmul.mubr.f32.gmra.mrb[0].mxu0 %v1103
      %v2262 = vpop.f32.mrb[0].mxu0
      %v2263 = vadd.f32 %v2038, %v2262
      %v2264 = vpop.f32.mrb[0].mxu0
      %2265 = vmatprep.mubr.f32.mxu0 %v1113
      %2266 = vmatmul.mubr.f32.gmra.mrb[0].mxu0 %v1112
      %v2267 = vpop.f32.mrb[0].mxu0
      %v2268 = vadd.f32 %v2043, %v2267
      %v2269 = vpop.f32.mrb[0].mxu0
      %2270 = vmatprep.mubr.f32.mxu0 %v1122
      %2271 = vmatmul.mubr.f32.gmra.mrb[0].mxu0 %v1121
      %v2272 = vpop.f32.mrb[0].mxu0
      %v2273 = vadd.f32 %v2048, %v2272
      %v2274 = vpop.f32.mrb[0].mxu0
      %2275 = vmatprep.mubr.f32.mxu0 %v1131
      %2276 = vmatmul.mubr.f32.gmra.mrb[0].mxu0 %v1130
      %v2277 = vpop.f32.mrb[0].mxu0
      %v2278 = vadd.f32 %v2053, %v2277
      %v2279 = vpop.f32.mrb[0].mxu0
      %2280 = vmatprep.mubr.f32.mxu0 %v1140
      %2281 = vmatmul.mubr.f32.gmra.mrb[0].mxu0 %v1139
      %v2282 = vpop.f32.mrb[0].mxu0
      %v2283 = vadd.f32 %v2058, %v2282
      %v2284 = vpop.f32.mrb[0].mxu0
      %2285 = vmatprep.mubr.f32.mxu0 %v1149
      %2286 = vmatmul.mubr.f32.gmra.mrb[0].mxu0 %v1148
      %v2287 = vpop.f32.mrb[0].mxu0
      %v2288 = vadd.f32 %v2063, %v2287
      %v2289 = vpop.f32.mrb[0].mxu0
      %2290 = vmatprep.mubr.f32.mxu0 %v1158
      %2291 = vmatmul.mubr.f32.gmra.mrb[0].mxu0 %v1157
      %v2292 = vpop.f32.mrb[0].mxu0
      %v2293 = vadd.f32 %v2068, %v2292
      %v2294 = vpop.f32.mrb[0].mxu0
      %2295 = vmatprep.mubr.f32.mxu0 %v1167
      %2296 = vmatmul.mubr.f32.gmra.mrb[0].mxu0 %v1166
      %v2297 = vpop.f32.mrb[0].mxu0
      %v2298 = vadd.f32 %v2073, %v2297
      %v2299 = vpop.f32.mrb[0].mxu0
      %2300 = vmatprep.mubr.f32.mxu0 %v1176
      %2301 = vmatmul.mubr.f32.gmra.mrb[0].mxu0 %v1175
      %v2302 = vpop.f32.mrb[0].mxu0
      %v2303 = vadd.f32 %v2078, %v2302
      %v2304 = vpop.f32.mrb[0].mxu0
      %2305 = vmatprep.mubr.f32.mxu0 %v1185
      %2306 = vmatmul.mubr.f32.gmra.mrb[0].mxu0 %v1184
      %v2307 = vpop.f32.mrb[0].mxu0
      %v2308 = vadd.f32 %v2083, %v2307
      %v2309 = vpop.f32.mrb[0].mxu0
      %2310 = vmatprep.mubr.f32.mxu0 %v1194
      %2311 = vmatmul.mubr.f32.gmra.mrb[0].mxu0 %v1193
      %v2312 = vpop.f32.mrb[0].mxu0
      %v2313 = vadd.f32 %v2088, %v2312
      %v2314 = vpop.f32.mrb[0].mxu0
      %2315 = vmatprep.mubr.f32.mxu0 %v1203
      %2316 = vmatmul.mubr.f32.gmra.mrb[0].mxu0 %v1202
      %v2317 = vpop.f32.mrb[0].mxu0
      %v2318 = vadd.f32 %v2093, %v2317
      %v2319 = vpop.f32.mrb[0].mxu0
      %2320 = vmatprep.mubr.f32.mxu0 %v1212
      %2321 = vmatmul.mubr.f32.gmra.mrb[0].mxu0 %v1211
      %v2322 = vpop.f32.mrb[0].mxu0
      %v2323 = vadd.f32 %v2098, %v2322
      %v2324 = vpop.f32.mrb[0].mxu0
      %2325 = vmatprep.mubr.f32.mxu0 %v1221
      %2326 = vmatmul.mubr.f32.gmra.mrb[0].mxu0 %v1220
      %v2327 = vpop.f32.mrb[0].mxu0
      %v2328 = vadd.f32 %v2103, %v2327
      %v2329 = vpop.f32.mrb[0].mxu0
      %2330 = vmatprep.mubr.f32.mxu0 %v1230
      %2331 = vmatmul.mubr.f32.gmra.mrb[0].mxu0 %v1229
      %v2332 = vpop.f32.mrb[0].mxu0
      %v2333 = vadd.f32 %v2108, %v2332
      %v2334 = vpop.f32.mrb[0].mxu0
      %2335 = vmatprep.mubr.f32.mxu0 %v1239
      %2336 = vmatmul.mubr.f32.gmra.mrb[0].mxu0 %v1238
      %v2337 = vpop.f32.mrb[0].mxu0
      %v2338 = vadd.f32 %v2113, %v2337
      %v2339 = vpop.f32.mrb[0].mxu0
      %2340 = vmatprep.mubr.f32.mxu0 %v1248
      %2341 = vmatmul.mubr.f32.gmra.mrb[0].mxu0 %v1247
      %v2342 = vpop.f32.mrb[0].mxu0
      %v2343 = vadd.f32 %v2118, %v2342
      %v2344 = vpop.f32.mrb[0].mxu0
      %2345 = vmatprep.mubr.f32.mxu0 %v1257
      %2346 = vmatmul.mubr.f32.gmra.mrb[0].mxu0 %v1256
      %v2347 = vpop.f32.mrb[0].mxu0
      %v2348 = vadd.f32 %v2123, %v2347
      %v2349 = vpop.f32.mrb[0].mxu0
      %2350 = vmatprep.mubr.f32.mxu0 %v1266
      %2351 = vmatmul.mubr.f32.gmra.mrb[0].mxu0 %v1265
      %v2352 = vpop.f32.mrb[0].mxu0
      %v2353 = vadd.f32 %v2128, %v2352
      %v2354 = vpop.f32.mrb[0].mxu0
      %2355 = vmatprep.mubr.f32.mxu0 %v1275
      %2356 = vmatmul.mubr.f32.gmra.mrb[0].mxu0 %v1274
      %v2357 = vpop.f32.mrb[0].mxu0
      %v2358 = vadd.f32 %v2133, %v2357
      %v2359 = vpop.f32.mrb[0].mxu0
      %2360 = vmatprep.mubr.f32.mxu0 %v1284
      %2361 = vmatmul.mubr.f32.gmra.mrb[0].mxu0 %v1283
      %v2362 = vpop.f32.mrb[0].mxu0
      %v2363 = vadd.f32 %v2138, %v2362
      %v2364 = vpop.f32.mrb[0].mxu0
      %2365 = vmatprep.mubr.f32.mxu0 %v1293
      %2366 = vmatmul.mubr.f32.gmra.mrb[0].mxu0 %v1292
      %v2367 = vpop.f32.mrb[0].mxu0
      %v2368 = vadd.f32 %v2143, %v2367
      %v2369 = vpop.f32.mrb[0].mxu0
      %2370 = vmatprep.mubr.f32.mxu0 %v1302
      %2371 = vmatmul.mubr.f32.gmra.mrb[0].mxu0 %v1301
      %v2372 = vpop.f32.mrb[0].mxu0
      %v2373 = vadd.f32 %v2148, %v2372
      %v2374 = vpop.f32.mrb[0].mxu0
      %2375 = vmatprep.mubr.f32.mxu0 %v1311
      %2376 = vmatmul.mubr.f32.gmra.mrb[0].mxu0 %v1310
      %v2377 = vpop.f32.mrb[0].mxu0
      %v2378 = vadd.f32 %v2153, %v2377
      %v2379 = vpop.f32.mrb[0].mxu0
      %2380 = vmatprep.mubr.f32.mxu0 %v1320
      %2381 = vmatmul.mubr.f32.gmra.mrb[0].mxu0 %v1319
      %v2382 = vpop.f32.mrb[0].mxu0
      %v2383 = vadd.f32 %v2158, %v2382
      %v2384 = vpop.f32.mrb[0].mxu0
      %2385 = vmatprep.mubr.f32.mxu0 %v1329
      %2386 = vmatmul.mubr.f32.gmra.mrb[0].mxu0 %v1328
      %v2387 = vpop.f32.mrb[0].mxu0
      %v2388 = vadd.f32 %v2163, %v2387
      %v2389 = vpop.f32.mrb[0].mxu0
      %2390 = vmatprep.mubr.f32.mxu0 %v1338
      %2391 = vmatmul.mubr.f32.gmra.mrb[0].mxu0 %v1337
      %v2392 = vpop.f32.mrb[0].mxu0
      %v2393 = vadd.f32 %v2168, %v2392
      %v2394 = vpop.f32.mrb[0].mxu0
      %2395 = vmatprep.mubr.f32.mxu0 %v1347
      %2396 = vmatmul.mubr.f32.gmra.mrb[0].mxu0 %v1346
      %v2397 = vpop.f32.mrb[0].mxu0
      %v2398 = vadd.f32 %v2173, %v2397
      %v2399 = vpop.f32.mrb[0].mxu0
      %2400 = vmatprep.mubr.f32.mxu0 %v1356
      %2401 = vmatmul.mubr.f32.gmra.mrb[0].mxu0 %v1355
      %v2402 = vpop.f32.mrb[0].mxu0
      %v2403 = vadd.f32 %v2178, %v2402
      %v2404 = vpop.f32.mrb[0].mxu0
      %2405 = vmatprep.mubr.f32.mxu0 %v1365
      %2406 = vmatmul.mubr.f32.gmra.mrb[0].mxu0 %v1364
      %v2407 = vpop.f32.mrb[0].mxu0
      %v2408 = vadd.f32 %v2183, %v2407
      %v2409 = vpop.f32.mrb[0].mxu0
      %2410 = vdwg.mxu0
      %2411 = vmatprep.subr.mxu0 0.0
      %2412 = vmatpush1.msra.mxu0 %v1495
      %2413 = vmatprep.subr.mxu0 0.0
      %2414 = vmatpush1.msra.mxu0 %v1496
      %2415 = vmatprep.subr.mxu0 0.0
      %2416 = vmatpush1.msra.mxu0 %v1497
      %2417 = vmatprep.subr.mxu0 0.0
      %2418 = vmatpush1.msra.mxu0 %v1498
      %2419 = vmatprep.subr.mxu0 0.0
      %2420 = vmatpush1.msra.mxu0 %v1499
      %2421 = vmatprep.subr.mxu0 0.0
      %2422 = vmatpush1.msra.mxu0 %v1500
      %2423 = vmatprep.subr.mxu0 0.0
      %2424 = vmatpush1.msra.mxu0 %v1501
      %2425 = vmatprep.subr.mxu0 0.0
      %2426 = vmatpush1.msra.mxu0 %v1502
      %2427 = vmatprep.subr.mxu0 0.0
      %2428 = vmatpush1.msra.mxu0 %v1503
      %2429 = vmatprep.subr.mxu0 0.0
      %2430 = vmatpush1.msra.mxu0 %v1504
      %2431 = vmatprep.subr.mxu0 0.0
      %2432 = vmatpush1.msra.mxu0 %v1505
      %2433 = vmatprep.subr.mxu0 0.0
      %2434 = vmatpush1.msra.mxu0 %v1506
      %2435 = vmatprep.subr.mxu0 0.0
      %2436 = vmatpush1.msra.mxu0 %v1507
      %2437 = vmatprep.subr.mxu0 0.0
      %2438 = vmatpush1.msra.mxu0 %v1508
      %2439 = vmatprep.subr.mxu0 0.0
      %2440 = vmatpush1.msra.mxu0 %v1509
      %2441 = vmatprep.subr.mxu0 0.0
      %2442 = vmatpush1.msra.mxu0 %v1510
      %2443 = vmatprep.subr.mxu0 0.0
      %2444 = vmatpush1.msra.mxu0 0.0
      %2445 = vmatprep.subr.mxu0 0.0
      %2446 = vmatpush1.msra.mxu0 0.0
      %2447 = vmatprep.subr.mxu0 0.0
      %2448 = vmatpush1.msra.mxu0 0.0
      %2449 = vmatprep.subr.mxu0 0.0
      %2450 = vmatpush1.msra.mxu0 0.0
      %2451 = vmatprep.subr.mxu0 0.0
      %2452 = vmatpush1.msra.mxu0 0.0
      %2453 = vmatprep.subr.mxu0 0.0
      %2454 = vmatpush1.msra.mxu0 0.0
      %2455 = vmatprep.subr.mxu0 0.0
      %2456 = vmatpush1.msra.mxu0 0.0
      %2457 = vmatprep.subr.mxu0 0.0
      %2458 = vmatpush1.msra.mxu0 0.0
      %2459 = vmatprep.subr.mxu0 0.0
      %2460 = vmatpush1.msra.mxu0 0.0
      %2461 = vmatprep.subr.mxu0 0.0
      %2462 = vmatpush1.msra.mxu0 0.0
      %2463 = vmatprep.subr.mxu0 0.0
      %2464 = vmatpush1.msra.mxu0 0.0
      %2465 = vmatprep.subr.mxu0 0.0
      %2466 = vmatpush1.msra.mxu0 0.0
      %2467 = vmatprep.subr.mxu0 0.0
      %2468 = vmatpush1.msra.mxu0 0.0
      %2469 = vmatprep.subr.mxu0 0.0
      %2470 = vmatpush1.msra.mxu0 0.0
      %2471 = vmatprep.subr.mxu0 0.0
      %2472 = vmatpush1.msra.mxu0 0.0
      %2473 = vmatprep.subr.mxu0 0.0
      %2474 = vmatpush1.msra.mxu0 0.0
      %2475 = vmatprep.mubr.f32.mxu0 0.0
      %2476 = vmatmul.mubr.f32.gmra.mrb[0].mxu0 %v1087
      %v2477 = vpop.f32.mrb[0].mxu0
      %v2478 = vadd.f32 %v2253, %v2477
      %v2479 = vpop.f32.mrb[0].mxu0
      %2480 = vmatprep.mubr.f32.mxu0 0.0
      %2481 = vmatmul.mubr.f32.gmra.mrb[0].mxu0 %v1096
      %v2482 = vpop.f32.mrb[0].mxu0
      %v2483 = vadd.f32 %v2258, %v2482
      %v2484 = vpop.f32.mrb[0].mxu0
      %2485 = vmatprep.mubr.f32.mxu0 0.0
      %2486 = vmatmul.mubr.f32.gmra.mrb[0].mxu0 %v1105
      %v2487 = vpop.f32.mrb[0].mxu0
      %v2488 = vadd.f32 %v2263, %v2487
      %v2489 = vpop.f32.mrb[0].mxu0
      %2490 = vmatprep.mubr.f32.mxu0 0.0
      %2491 = vmatmul.mubr.f32.gmra.mrb[0].mxu0 %v1114
      %v2492 = vpop.f32.mrb[0].mxu0
      %v2493 = vadd.f32 %v2268, %v2492
      %v2494 = vpop.f32.mrb[0].mxu0
      %2495 = vmatprep.mubr.f32.mxu0 0.0
      %2496 = vmatmul.mubr.f32.gmra.mrb[0].mxu0 %v1123
      %v2497 = vpop.f32.mrb[0].mxu0
      %v2498 = vadd.f32 %v2273, %v2497
      %v2499 = vpop.f32.mrb[0].mxu0
      %2500 = vmatprep.mubr.f32.mxu0 0.0
      %2501 = vmatmul.mubr.f32.gmra.mrb[0].mxu0 %v1132
      %v2502 = vpop.f32.mrb[0].mxu0
      %v2503 = vadd.f32 %v2278, %v2502
      %v2504 = vpop.f32.mrb[0].mxu0
      %2505 = vmatprep.mubr.f32.mxu0 0.0
      %2506 = vmatmul.mubr.f32.gmra.mrb[0].mxu0 %v1141
      %v2507 = vpop.f32.mrb[0].mxu0
      %v2508 = vadd.f32 %v2283, %v2507
      %v2509 = vpop.f32.mrb[0].mxu0
      %2510 = vmatprep.mubr.f32.mxu0 0.0
      %2511 = vmatmul.mubr.f32.gmra.mrb[0].mxu0 %v1150
      %v2512 = vpop.f32.mrb[0].mxu0
      %v2513 = vadd.f32 %v2288, %v2512
      %v2514 = vpop.f32.mrb[0].mxu0
      %2515 = vmatprep.mubr.f32.mxu0 0.0
      %2516 = vmatmul.mubr.f32.gmra.mrb[0].mxu0 %v1159
      %v2517 = vpop.f32.mrb[0].mxu0
      %v2518 = vadd.f32 %v2293, %v2517
      %v2519 = vpop.f32.mrb[0].mxu0
      %2520 = vmatprep.mubr.f32.mxu0 0.0
      %2521 = vmatmul.mubr.f32.gmra.mrb[0].mxu0 %v1168
      %v2522 = vpop.f32.mrb[0].mxu0
      %v2523 = vadd.f32 %v2298, %v2522
      %v2524 = vpop.f32.mrb[0].mxu0
      %2525 = vmatprep.mubr.f32.mxu0 0.0
      %2526 = vmatmul.mubr.f32.gmra.mrb[0].mxu0 %v1177
      %v2527 = vpop.f32.mrb[0].mxu0
      %v2528 = vadd.f32 %v2303, %v2527
      %v2529 = vpop.f32.mrb[0].mxu0
      %2530 = vmatprep.mubr.f32.mxu0 0.0
      %2531 = vmatmul.mubr.f32.gmra.mrb[0].mxu0 %v1186
      %v2532 = vpop.f32.mrb[0].mxu0
      %v2533 = vadd.f32 %v2308, %v2532
      %v2534 = vpop.f32.mrb[0].mxu0
      %2535 = vmatprep.mubr.f32.mxu0 0.0
      %2536 = vmatmul.mubr.f32.gmra.mrb[0].mxu0 %v1195
      %v2537 = vpop.f32.mrb[0].mxu0
      %v2538 = vadd.f32 %v2313, %v2537
      %v2539 = vpop.f32.mrb[0].mxu0
      %2540 = vmatprep.mubr.f32.mxu0 0.0
      %2541 = vmatmul.mubr.f32.gmra.mrb[0].mxu0 %v1204
      %v2542 = vpop.f32.mrb[0].mxu0
      %v2543 = vadd.f32 %v2318, %v2542
      %v2544 = vpop.f32.mrb[0].mxu0
      %2545 = vmatprep.mubr.f32.mxu0 0.0
      %2546 = vmatmul.mubr.f32.gmra.mrb[0].mxu0 %v1213
      %v2547 = vpop.f32.mrb[0].mxu0
      %v2548 = vadd.f32 %v2323, %v2547
      %v2549 = vpop.f32.mrb[0].mxu0
      %2550 = vmatprep.mubr.f32.mxu0 0.0
      %2551 = vmatmul.mubr.f32.gmra.mrb[0].mxu0 %v1222
      %v2552 = vpop.f32.mrb[0].mxu0
      %v2553 = vadd.f32 %v2328, %v2552
      %v2554 = vpop.f32.mrb[0].mxu0
      %2555 = vmatprep.mubr.f32.mxu0 0.0
      %2556 = vmatmul.mubr.f32.gmra.mrb[0].mxu0 %v1231
      %v2557 = vpop.f32.mrb[0].mxu0
      %v2558 = vadd.f32 %v2333, %v2557
      %v2559 = vpop.f32.mrb[0].mxu0
      %2560 = vmatprep.mubr.f32.mxu0 0.0
      %2561 = vmatmul.mubr.f32.gmra.mrb[0].mxu0 %v1240
      %v2562 = vpop.f32.mrb[0].mxu0
      %v2563 = vadd.f32 %v2338, %v2562
      %v2564 = vpop.f32.mrb[0].mxu0
      %2565 = vmatprep.mubr.f32.mxu0 0.0
      %2566 = vmatmul.mubr.f32.gmra.mrb[0].mxu0 %v1249
      %v2567 = vpop.f32.mrb[0].mxu0
      %v2568 = vadd.f32 %v2343, %v2567
      %v2569 = vpop.f32.mrb[0].mxu0
      %2570 = vmatprep.mubr.f32.mxu0 0.0
      %2571 = vmatmul.mubr.f32.gmra.mrb[0].mxu0 %v1258
      %v2572 = vpop.f32.mrb[0].mxu0
      %v2573 = vadd.f32 %v2348, %v2572
      %v2574 = vpop.f32.mrb[0].mxu0
      %2575 = vmatprep.mubr.f32.mxu0 0.0
      %2576 = vmatmul.mubr.f32.gmra.mrb[0].mxu0 %v1267
      %v2577 = vpop.f32.mrb[0].mxu0
      %v2578 = vadd.f32 %v2353, %v2577
      %v2579 = vpop.f32.mrb[0].mxu0
      %2580 = vmatprep.mubr.f32.mxu0 0.0
      %2581 = vmatmul.mubr.f32.gmra.mrb[0].mxu0 %v1276
      %v2582 = vpop.f32.mrb[0].mxu0
      %v2583 = vadd.f32 %v2358, %v2582
      %v2584 = vpop.f32.mrb[0].mxu0
      %2585 = vmatprep.mubr.f32.mxu0 0.0
      %2586 = vmatmul.mubr.f32.gmra.mrb[0].mxu0 %v1285
      %v2587 = vpop.f32.mrb[0].mxu0
      %v2588 = vadd.f32 %v2363, %v2587
      %v2589 = vpop.f32.mrb[0].mxu0
      %2590 = vmatprep.mubr.f32.mxu0 0.0
      %2591 = vmatmul.mubr.f32.gmra.mrb[0].mxu0 %v1294
      %v2592 = vpop.f32.mrb[0].mxu0
      %v2593 = vadd.f32 %v2368, %v2592
      %v2594 = vpop.f32.mrb[0].mxu0
      %2595 = vmatprep.mubr.f32.mxu0 0.0
      %2596 = vmatmul.mubr.f32.gmra.mrb[0].mxu0 %v1303
      %v2597 = vpop.f32.mrb[0].mxu0
      %v2598 = vadd.f32 %v2373, %v2597
      %v2599 = vpop.f32.mrb[0].mxu0
      %2600 = vmatprep.mubr.f32.mxu0 0.0
      %2601 = vmatmul.mubr.f32.gmra.mrb[0].mxu0 %v1312
      %v2602 = vpop.f32.mrb[0].mxu0
      %v2603 = vadd.f32 %v2378, %v2602
      %v2604 = vpop.f32.mrb[0].mxu0
      %2605 = vmatprep.mubr.f32.mxu0 0.0
      %2606 = vmatmul.mubr.f32.gmra.mrb[0].mxu0 %v1321
      %v2607 = vpop.f32.mrb[0].mxu0
      %v2608 = vadd.f32 %v2383, %v2607
      %v2609 = vpop.f32.mrb[0].mxu0
      %2610 = vmatprep.mubr.f32.mxu0 0.0
      %2611 = vmatmul.mubr.f32.gmra.mrb[0].mxu0 %v1330
      %v2612 = vpop.f32.mrb[0].mxu0
      %v2613 = vadd.f32 %v2388, %v2612
      %v2614 = vpop.f32.mrb[0].mxu0
      %2615 = vmatprep.mubr.f32.mxu0 0.0
      %2616 = vmatmul.mubr.f32.gmra.mrb[0].mxu0 %v1339
      %v2617 = vpop.f32.mrb[0].mxu0
      %v2618 = vadd.f32 %v2393, %v2617
      %v2619 = vpop.f32.mrb[0].mxu0
      %2620 = vmatprep.mubr.f32.mxu0 0.0
      %2621 = vmatmul.mubr.f32.gmra.mrb[0].mxu0 %v1348
      %v2622 = vpop.f32.mrb[0].mxu0
      %v2623 = vadd.f32 %v2398, %v2622
      %v2624 = vpop.f32.mrb[0].mxu0
      %2625 = vmatprep.mubr.f32.mxu0 0.0
      %2626 = vmatmul.mubr.f32.gmra.mrb[0].mxu0 %v1357
      %v2627 = vpop.f32.mrb[0].mxu0
      %v2628 = vadd.f32 %v2403, %v2627
      %v2629 = vpop.f32.mrb[0].mxu0
      %2630 = vmatprep.mubr.f32.mxu0 0.0
      %2631 = vmatmul.mubr.f32.gmra.mrb[0].mxu0 %v1366
      %v2632 = vpop.f32.mrb[0].mxu0
      %v2633 = vadd.f32 %v2408, %v2632
      %v2634 = vpop.f32.mrb[0].mxu0
      %2635 = vdwg.mxu0
      %2636 = vst [vmem:[%s258] sm:$0xff] %v2478
      %2637 = vst [vmem:[%s258 + $0x8] sm:$0xff] %v2483
      %2638 = vst [vmem:[%s258 + $0x10] sm:$0xff] %v2488
      %2639 = vst [vmem:[%s258 + $0x18] sm:$0xff] %v2493
      %2640 = vst [vmem:[%s258 + $0x20] sm:$0xff] %v2498
      %2641 = vst [vmem:[%s258 + $0x28] sm:$0xff] %v2503
      %2642 = vst [vmem:[%s258 + $0x30] sm:$0xff] %v2508
      %2643 = vst [vmem:[%s258 + $0x38] sm:$0xff] %v2513
      %2644 = vst [vmem:[%s258 + $0x40] sm:$0xff] %v2518
      %2645 = vst [vmem:[%s258 + $0x48] sm:$0xff] %v2523
      %2646 = vst [vmem:[%s258 + $0x50] sm:$0xff] %v2528
      %2647 = vst [vmem:[%s258 + $0x58] sm:$0xff] %v2533
      %2648 = vst [vmem:[%s258 + $0x60] sm:$0xff] %v2538
      %2649 = vst [vmem:[%s258 + $0x68] sm:$0xff] %v2543
      %2650 = vst [vmem:[%s258 + $0x70] sm:$0xff] %v2548
      %2651 = vst [vmem:[%s258 + $0x78] sm:$0xff] %v2553
      %2652 = vst [vmem:[%s258 + $0x80] sm:$0xff] %v2558
      %2653 = vst [vmem:[%s258 + $0x88] sm:$0xff] %v2563
      %2654 = vst [vmem:[%s258 + $0x90] sm:$0xff] %v2568
      %2655 = vst [vmem:[%s258 + $0x98] sm:$0xff] %v2573
      %2656 = vst [vmem:[%s258 + $0xa0] sm:$0xff] %v2578
      %2657 = vst [vmem:[%s258 + $0xa8] sm:$0xff] %v2583
      %2658 = vst [vmem:[%s258 + $0xb0] sm:$0xff] %v2588
      %2659 = vst [vmem:[%s258 + $0xb8] sm:$0xff] %v2593
      %2660 = vst [vmem:[%s258 + $0xc0] sm:$0xff] %v2598
      %2661 = vst [vmem:[%s258 + $0xc8] sm:$0xff] %v2603
      %2662 = vst [vmem:[%s258 + $0xd0] sm:$0xff] %v2608
      %2663 = vst [vmem:[%s258 + $0xd8] sm:$0xff] %v2613
      %2664 = vst [vmem:[%s258 + $0xe0] sm:$0xff] %v2618
      %2665 = vst [vmem:[%s258 + $0xe8] sm:$0xff] %v2623
      %2666 = vst [vmem:[%s258 + $0xf0] sm:$0xff] %v2628
      %2667 = vst [vmem:[%s258 + $0xf8] sm:$0xff] %v2633
      %v2668 = vadd.f32 %v2478, %v2483
      %v2669 = vadd.f32 %v2668, %v2488
      %v2670 = vadd.f32 %v2669, %v2493
      %v2671 = vadd.f32 %v2670, %v2498
      %v2672 = vadd.f32 %v2671, %v2503
      %v2673 = vadd.f32 %v2672, %v2508
      %v2674 = vadd.f32 %v2673, %v2513
      %v2675 = vadd.f32 %v2674, %v2518
      %v2676 = vadd.f32 %v2675, %v2523
      %v2677 = vadd.f32 %v2676, %v2528
      %v2678 = vadd.f32 %v2677, %v2533
      %v2679 = vadd.f32 %v2678, %v2538
      %v2680 = vadd.f32 %v2679, %v2543
      %v2681 = vadd.f32 %v2680, %v2548
      %v2682 = vadd.f32 %v2681, %v2553
      %v2683 = vadd.f32 %v2682, %v2558
      %v2684 = vadd.f32 %v2683, %v2563
      %v2685 = vadd.f32 %v2684, %v2568
      %v2686 = vadd.f32 %v2685, %v2573
      %v2687 = vadd.f32 %v2686, %v2578
      %v2688 = vadd.f32 %v2687, %v2583
      %v2689 = vadd.f32 %v2688, %v2588
      %v2690 = vadd.f32 %v2689, %v2593
      %v2691 = vadd.f32 %v2690, %v2598
      %v2692 = vadd.f32 %v2691, %v2603
      %v2693 = vadd.f32 %v2692, %v2608
      %v2694 = vadd.f32 %v2693, %v2613
      %v2695 = vadd.f32 %v2694, %v2618
      %v2696 = vadd.f32 %v2695, %v2623
      %v2697 = vadd.f32 %v2696, %v2628
      %v2698 = vadd.f32 %v2697, %v2633
      %v2699 = vrot.slane %v2698, 4
      %v2700 = vadd.f32 %v2698, %v2699
      %v2701 = vrot.slane %v2700, 2
      %v2702 = vadd.f32 %v2700, %v2701
      %v2703 = vrot.slane %v2702, 1
      %v2704 = vadd.f32 %v2702, %v2703
      %2705 = vst [vmem:[%s263] sm:$0x1] %v2704
      %v2706 = vmul.f32 %v2478, %v2478
      %v2707 = vmul.f32 %v2483, %v2483
      %v2708 = vmul.f32 %v2488, %v2488
      %v2709 = vmul.f32 %v2493, %v2493
      %v2710 = vmul.f32 %v2498, %v2498
      %v2711 = vmul.f32 %v2503, %v2503
      %v2712 = vmul.f32 %v2508, %v2508
      %v2713 = vmul.f32 %v2513, %v2513
      %v2714 = vmul.f32 %v2518, %v2518
      %v2715 = vmul.f32 %v2523, %v2523
      %v2716 = vmul.f32 %v2528, %v2528
      %v2717 = vmul.f32 %v2533, %v2533
      %v2718 = vmul.f32 %v2538, %v2538
      %v2719 = vmul.f32 %v2543, %v2543
      %v2720 = vmul.f32 %v2548, %v2548
      %v2721 = vmul.f32 %v2553, %v2553
      %v2722 = vmul.f32 %v2558, %v2558
      %v2723 = vmul.f32 %v2563, %v2563
      %v2724 = vmul.f32 %v2568, %v2568
      %v2725 = vmul.f32 %v2573, %v2573
      %v2726 = vmul.f32 %v2578, %v2578
      %v2727 = vmul.f32 %v2583, %v2583
      %v2728 = vmul.f32 %v2588, %v2588
      %v2729 = vmul.f32 %v2593, %v2593
      %v2730 = vmul.f32 %v2598, %v2598
      %v2731 = vmul.f32 %v2603, %v2603
      %v2732 = vmul.f32 %v2608, %v2608
      %v2733 = vmul.f32 %v2613, %v2613
      %v2734 = vmul.f32 %v2618, %v2618
      %v2735 = vmul.f32 %v2623, %v2623
      %v2736 = vmul.f32 %v2628, %v2628
      %v2737 = vmul.f32 %v2633, %v2633
      %v2738 = vadd.f32 %v2706, %v2707
      %v2739 = vadd.f32 %v2738, %v2708
      %v2740 = vadd.f32 %v2739, %v2709
      %v2741 = vadd.f32 %v2740, %v2710
      %v2742 = vadd.f32 %v2741, %v2711
      %v2743 = vadd.f32 %v2742, %v2712
      %v2744 = vadd.f32 %v2743, %v2713
      %v2745 = vadd.f32 %v2744, %v2714
      %v2746 = vadd.f32 %v2745, %v2715
      %v2747 = vadd.f32 %v2746, %v2716
      %v2748 = vadd.f32 %v2747, %v2717
      %v2749 = vadd.f32 %v2748, %v2718
      %v2750 = vadd.f32 %v2749, %v2719
      %v2751 = vadd.f32 %v2750, %v2720
      %v2752 = vadd.f32 %v2751, %v2721
      %v2753 = vadd.f32 %v2752, %v2722
      %v2754 = vadd.f32 %v2753, %v2723
      %v2755 = vadd.f32 %v2754, %v2724
      %v2756 = vadd.f32 %v2755, %v2725
      %v2757 = vadd.f32 %v2756, %v2726
      %v2758 = vadd.f32 %v2757, %v2727
      %v2759 = vadd.f32 %v2758, %v2728
      %v2760 = vadd.f32 %v2759, %v2729
      %v2761 = vadd.f32 %v2760, %v2730
      %v2762 = vadd.f32 %v2761, %v2731
      %v2763 = vadd.f32 %v2762, %v2732
      %v2764 = vadd.f32 %v2763, %v2733
      %v2765 = vadd.f32 %v2764, %v2734
      %v2766 = vadd.f32 %v2765, %v2735
      %v2767 = vadd.f32 %v2766, %v2736
      %v2768 = vadd.f32 %v2767, %v2737
      %v2769 = vrot.slane %v2768, 4
      %v2770 = vadd.f32 %v2768, %v2769
      %v2771 = vrot.slane %v2770, 2
      %v2772 = vadd.f32 %v2770, %v2771
      %v2773 = vrot.slane %v2772, 1
      %v2774 = vadd.f32 %v2772, %v2773
      %2775 = vst [vmem:[%s263 + $0x1] sm:$0x1] %v2774
      %s2776 = smul.u32 32, %s18
      %p2777 = scmp.lt.s32.totalorder %s2776, 63
      %s2778 = scalar_select %p2777, %s2776, 63
      %s2779 = smul.addr %s2778, 8
      %s2780 = scalar_lea.vmem %s5, %s2779
      %p2781 = scmp.lt.s32.totalorder %s18, 1
      %s2782 = scalar_select %p2781, %s18, 1
      %s2783 = smul.addr %s2782, 8
      %s2784 = scalar_lea.vmem %s6, %s2783
      // Predicated region
      $region41: #{bottleneck_forward.5} parent=39 // pred_check
        %p2785 = pneg %p146
      $region42: #{bottleneck_forward.5} parent=39 // pred_check_branch
        %2787 = sbr.rel (%p2785) target = $region44
      $region43: #{bottleneck_forward.5} parent=39 // pred_region
        %s2788 = smul.u32 32, %s18
      $region44: #{bottleneck_forward.5} parent=39 // pred_fallthru
        _
      // Predicated region
      $region45: #{bottleneck_forward.5} parent=39 // pred_check
        %p2789 = pneg %p172
      $region46: #{bottleneck_forward.5} parent=39 // pred_check_branch
        %2791 = sbr.rel (%p2789) target = $region48
      $region47: #{bottleneck_forward.5} parent=39 // pred_region
        _
      $region48: #{bottleneck_forward.5} parent=39 // pred_fallthru
        _
    $region40: #{bottleneck_forward.5} parent=5 // pred_fallthru
      _
    %p2792 = scmp.le.s32.totalorder 2, %s13
    // Predicated region
    $region49: #{bottleneck_forward.5} parent=5 // pred_check
      %p2793 = pneg %p2792
    $region50: #{bottleneck_forward.5} parent=5 // pred_check_branch
      %2795 = sbr.rel (%p2793) target = $region52
    $region51: #{bottleneck_forward.5} parent=5 // pred_region
      %s2796 = ssub.s32 %s13, 2
      // Predicated region
      $region53: #{bottleneck_forward.5} parent=51 // pred_check
        %p2797 = pneg %p152
      $region54: #{bottleneck_forward.5} parent=51 // pred_check_branch
        %2799 = sbr.rel (%p2797) target = $region56
      $region55: #{bottleneck_forward.5} parent=51 // pred_region
        %s2800 = smul.u32 32, %s19
        %p2801 = scmp.lt.s32.totalorder %s2800, 63
        %s2802 = scalar_select %p2801, %s2800, 63
        %s2803 = smul.addr %s2802, 8
        %s2804 = scalar_lea.vmem %s5, %s2803
      $region56: #{bottleneck_forward.5} parent=51 // pred_fallthru
        _
      // Predicated region
      $region57: #{bottleneck_forward.5} parent=51 // pred_check
        %p2805 = pneg %p178
      $region58: #{bottleneck_forward.5} parent=51 // pred_check_branch
        %2807 = sbr.rel (%p2805) target = $region60
      $region59: #{bottleneck_forward.5} parent=51 // pred_region
        %p2808 = scmp.lt.s32.totalorder %s19, 1
        %s2809 = scalar_select %p2808, %s19, 1
        %s2810 = smul.addr %s2809, 8
        %s2811 = scalar_lea.vmem %s6, %s2810
      $region60: #{bottleneck_forward.5} parent=51 // pred_fallthru
        _
    $region52: #{bottleneck_forward.5} parent=5 // pred_fallthru
      _
  $region6: #{bottleneck_forward.5} parent=0 // loop_footer
    %s17 = sadd.s32 1, %s13
  $region7: #{bottleneck_forward.5} parent=0 // loop_footer_branch
    %12 = sbr.rel target = $region3
  $region8: #{bottleneck_forward.5} parent=0 // loop_exit
    _

</llo_original>
